<compile_context>
chip_gen: v6e
topology: v6e:2x2x1
jax: 0.10.0
libtpu: 0.0.40
codegen_flags: <defaults>
</compile_context>

<pallas_src>
import functools

import jax
import jax.numpy as jnp
from jax import lax
from jax.experimental import pallas as pl
from jax.experimental.pallas import tpu as pltpu


def _mm(a, b, fast):
    """MXU matmul: bf16 operands + f32 accumulation on the shipped path,
    full-precision f32 on the exact (reference-check) path."""
    if fast:
        return jnp.dot(a.astype(jnp.bfloat16), b.astype(jnp.bfloat16),
                       preferred_element_type=jnp.float32)
    return jnp.dot(a, b, precision=lax.Precision.HIGHEST,
                   preferred_element_type=jnp.float32)


# --------------------------------------------------------------------------
# Kernel 1: fused q | k | v projections (1x1 Conv1d == channel matmul) +
# xyz pass-through into a single lane-concatenated point-major table.
# Table lanes: [0,qk) q, [qk,2qk) k, [2qk,2qk+C) v, [2qk+C,2qk+C+3) xyz, last 0.
# --------------------------------------------------------------------------
def _proj_kernel(qk, c, fast, x_ref, y_ref, xyz_ref,
                 wq_ref, bq_ref, wkv_ref, bkv_ref, tbl_ref):
    dt = tbl_ref.dtype
    q = _mm(x_ref[...], wq_ref[...], fast) + bq_ref[...]
    kv = _mm(y_ref[...], wkv_ref[...], fast) + bkv_ref[...]
    tbl_ref[:, :qk] = q.astype(dt)
    tbl_ref[:, qk:2 * qk + c] = kv.astype(dt)
    tbl_ref[:, 2 * qk + c:2 * qk + c + 3] = xyz_ref[...].astype(dt)
    tbl_ref[:, 2 * qk + c + 3:] = jnp.zeros((q.shape[0], 1), dt)


# --------------------------------------------------------------------------
# Kernel 2: in-kernel neighbor gather + geometry encoding + neighbor
# embedding + softmax(K) + aggregation (eval-mode BatchNorms folded by the
# wrapper into the adjacent 1x1 convs / an affine).
# --------------------------------------------------------------------------
def _la_fused_kernel(tn, k, n, qk, c, fast,
                     idx_ref, tbl_ref,
                     wg1_ref, bg1_ref, wg2_ref, bg2_ref,
                     sa_ref, ta_ref, wn1_ref, bn1_ref, wn2_ref, bn2_ref,
                     o_ref):
    f32 = jnp.float32
    nk = tn * k
    xyz_off = 2 * qk + c                        # first xyz lane in the table

    tbl = tbl_ref[...]                          # (n, D) per-batch resident table
    ids = idx_ref[...]                          # (nk, 1) int32 neighbor indices

    # ---- in-kernel neighbor gather: one-hot(ids) @ table on the MXU ---------
    # exact row selection; no K-fold gathered tensor ever touches HBM.
    pos = lax.broadcasted_iota(jnp.int32, (nk, n), 1)
    onehot = (pos == ids).astype(tbl.dtype)
    g = _mm(onehot, tbl, fast)                  # (nk, D) f32 gathered rows

    # ---- query / center rows for this tile: slice the resident table --------
    row0 = pl.multiple_of(pl.program_id(1) * tn, 8)
    ctr = tbl_ref[pl.ds(row0, tn), :].astype(f32)          # (tn, D)
    xq = ctr[:, :qk]                                       # (tn, qk)
    cxyz = ctr[:, xyz_off:]                                # (tn, 4) xyz + 0 pad

    gk = g[:, qk:2 * qk]                                   # (nk, qk) keys
    gv = g[:, 2 * qk:xyz_off]                              # (nk, c)  values
    gxyz = g[:, xyz_off:]                                  # (nk, 4)  xyz + 0 pad

    # ---- GeometryEncoding (rel=True, abs=False, euc=True); BN1 folded -------
    diff = (gxyz.reshape(tn, k, 4) - cxyz.reshape(tn, 1, 4)).reshape(nk, 4)
    euc = jnp.sqrt(jnp.sum(diff * diff, axis=-1, keepdims=True))
    lane = lax.broadcasted_iota(jnp.int32, (nk, 4), 1)
    feat = jnp.where(lane == 3, euc, diff)      # euc folded into the pad lane
    h = jnp.maximum(_mm(feat, wg1_ref[...], fast) + bg1_ref[...], 0.0)
    h = _mm(h, wg2_ref[...], fast) + bg2_ref[...]

    # ---- NeighborEmbedding (form='squ', geo=True); BN_a / BN_b folded -------
    d = (gk.reshape(tn, k, qk) - xq.reshape(tn, 1, qk)).reshape(nk, qk)
    emb = h - d * d
    t = jnp.maximum(emb * sa_ref[...] + ta_ref[...], 0.0)
    t = jnp.maximum(_mm(t, wn1_ref[...], fast) + bn1_ref[...], 0.0)
    w = _mm(t, wn2_ref[...], fast) + bn2_ref[...]          # (nk, c)

    # ---- softmax over the K neighbors + weighted aggregation ----------------
    w3 = w.reshape(tn, k, c)
    m = jnp.max(w3, axis=1, keepdims=True)
    e = jnp.exp(w3 - m)
    s = jnp.sum(e, axis=1, keepdims=True)
    if fast:
        p = e * pl.reciprocal(s, approx=True)              # EUP, not VALU
    else:
        p = e / s
    agg = jnp.sum(gv.reshape(tn, k, c) * p, axis=1)        # (tn, c)
    o_ref[...] = agg.astype(o_ref.dtype)


# --------------------------------------------------------------------------
# Tiling helpers
# --------------------------------------------------------------------------
def _pad128(d):
    return ((d + 127) // 128) * 128


def _pick_tile(total, cap, mult=8):
    """Largest divisor of `total` <= cap that is a multiple of `mult`
    (or the full extent, which is always a legal block)."""
    cap = max(1, min(cap, total))
    for t in range(cap, 0, -1):
        if total % t == 0 and (t % mult == 0 or t == total):
            return t
    return total


def _vmem_limit_bytes():
    try:
        cap = int(pltpu.get_tpu_info().vmem_capacity_bytes)
    except Exception:
        cap = 64 * 1024 * 1024            # conservative: v7x per-core VMEM
    return max(16 * 1024 * 1024, min(cap, 128 * 1024 * 1024) - (8 << 20))


# --------------------------------------------------------------------------
# Wrapper (plain-JAX glue: layout, BN folding, tile selection)
# --------------------------------------------------------------------------
def la_attention_forward(params, x, y, y_xyz, idx, eps=1e-5, fast=True):
    """x, y: (B, C, N); y_xyz: (B, 3, N); idx: (B, N, K) int32. Returns (B, C, N)."""
    B, C, N = x.shape
    K = idx.shape[-1]
    qk = params['wq'].shape[1]
    D = 2 * qk + C + 4                      # [q | k | v | xyz | pad]
    store_dtype = jnp.bfloat16 if fast else jnp.float32
    in_dtype = jnp.bfloat16 if fast else jnp.float32
    wcast = (lambda w: w.astype(jnp.bfloat16)) if fast else (lambda w: w)
    row = lambda v: v.reshape(1, -1)
    sz = 2 if fast else 4

    vmem_limit = _vmem_limit_bytes()
    budget = int(0.6 * vmem_limit)          # tile-sizing budget, leave slack

    # --- channels-last point-major layout (XLA glue) ---
    x_c = jnp.transpose(x, (0, 2, 1)).reshape(B * N, C).astype(in_dtype)
    y_c = jnp.transpose(y, (0, 2, 1)).reshape(B * N, C).astype(in_dtype)
    xyz_pm = jnp.transpose(y_xyz, (0, 2, 1)).reshape(B * N, 3)

    # --- fold eval-mode BatchNorms into the adjacent 1x1 convs ---
    bn_scale = lambda g, v: g / jnp.sqrt(v + eps)
    s1 = bn_scale(params['ge_bn1_g'], params['ge_bn1_v'])
    wg1 = params['wg1'] * s1[None, :]
    bg1 = (params['bg1'] - params['ge_bn1_m']) * s1 + params['ge_bn1_b']
    sa = bn_scale(params['ne_bna_g'], params['ne_bna_v'])
    ta = params['ne_bna_b'] - params['ne_bna_m'] * sa
    sb = bn_scale(params['ne_bnb_g'], params['ne_bnb_v'])
    wn1 = params['wn1'] * sb[None, :]
    bn1 = (params['bn1'] - params['ne_bnb_m']) * sb + params['ne_bnb_b']

    # --- Kernel 1: fused q|k|v projection + xyz into one point-major table ---
    wkv = jnp.concatenate([params['wk'], params['wv']], axis=1)   # (C, qk + C)
    bkv = jnp.concatenate([params['bk'], params['bv']])
    BN_rows = B * N
    per_row1 = 2 * (2 * _pad128(C) * sz + 128 * 4 + _pad128(D) * sz)
    TM = _pick_tile(BN_rows, min(2048, max(8, budget // per_row1)), 8)
    if per_row1 * TM > vmem_limit:
        raise ValueError("LAAttention: projection tile does not fit in VMEM")

    tbl = pl.pallas_call(
        functools.partial(_proj_kernel, qk, C, fast),
        out_shape=jax.ShapeDtypeStruct((BN_rows, D), store_dtype),
        grid=(BN_rows // TM,),
        in_specs=[pl.BlockSpec((TM, C), lambda i: (i, 0)),
                  pl.BlockSpec((TM, C), lambda i: (i, 0)),
                  pl.BlockSpec((TM, 3), lambda i: (i, 0)),
                  pl.BlockSpec((C, qk), lambda i: (0, 0)),
                  pl.BlockSpec((1, qk), lambda i: (0, 0)),
                  pl.BlockSpec((C, qk + C), lambda i: (0, 0)),
                  pl.BlockSpec((1, qk + C), lambda i: (0, 0))],
        out_specs=pl.BlockSpec((TM, D), lambda i: (i, 0)),
        compiler_params=pltpu.CompilerParams(
            dimension_semantics=("parallel",),
            vmem_limit_bytes=vmem_limit),
    )(x_c, y_c, xyz_pm, wcast(params['wq']), row(params['bq']),
      wcast(wkv), row(bkv))
    tbl = tbl.reshape(B, N, D)

    # --- Kernel 2: in-kernel gather + fused MLPs + softmax + aggregation -----
    idx2 = idx.reshape(B, N * K, 1).astype(jnp.int32)   # metadata-only reshape

    def k2_bytes(tn):
        nk = tn * K
        return (2 * N * _pad128(D) * sz            # resident table (dbl-buffered)
                + 2 * nk * 128 * 4                 # idx block (lane-padded)
                + 2 * tn * _pad128(C) * sz         # output block
                + nk * _pad128(N) * sz             # one-hot gather operand
                + nk * _pad128(D) * 4              # gathered rows (f32)
                + 6 * nk * _pad128(max(C, qk)) * 4)  # f32 temporaries

    TN = None
    for t in range(N, 0, -1):
        if N % t == 0 and (t % 8 == 0 or t == N) and k2_bytes(t) <= budget:
            TN = t
            break
    if TN is None:
        raise ValueError("LAAttention: fused attention tile does not fit in "
                         "VMEM; reduce N / C or the neighbor count")

    kernel2 = functools.partial(_la_fused_kernel, TN, K, N, qk, C, fast)
    w_spec = lambda s: pl.BlockSpec(s, lambda b, j: (0, 0))
    out = pl.pallas_call(
        kernel2,
        out_shape=jax.ShapeDtypeStruct((B, N, C), store_dtype),
        grid=(B, N // TN),
        in_specs=[pl.BlockSpec((None, TN * K, 1), lambda b, j: (b, j, 0)),
                  pl.BlockSpec((None, N, D), lambda b, j: (b, 0, 0)),
                  w_spec((4, qk)), w_spec((1, qk)),
                  w_spec((qk, qk)), w_spec((1, qk)),
                  w_spec((1, qk)), w_spec((1, qk)),
                  w_spec((qk, qk)), w_spec((1, qk)),
                  w_spec((qk, C)), w_spec((1, C))],
        out_specs=pl.BlockSpec((None, TN, C), lambda b, j: (b, j, 0)),
        compiler_params=pltpu.CompilerParams(
            dimension_semantics=("parallel", "parallel"),
            vmem_limit_bytes=vmem_limit),
    )(idx2, tbl,
      wcast(wg1), row(bg1), wcast(params['wg2']), row(params['bg2']),
      row(sa), row(ta), wcast(wn1), row(bn1),
      wcast(params['wn2']), row(params['bn2']))

    return jnp.transpose(out, (0, 2, 1))                  # (B, C, N)


# --------------------------------------------------------------------------
# Pure-JAX reference (mirrors the PyTorch module, eval-mode BatchNorm)
# --------------------------------------------------------------------------
def reference_forward(params, x, y, y_xyz, idx, eps=1e-5):
    hp = functools.partial(jnp.matmul, precision=lax.Precision.HIGHEST)
    x_c = jnp.transpose(x, (0, 2, 1))
    y_c = jnp.transpose(y, (0, 2, 1))
    xyz_c = jnp.transpose(y_xyz, (0, 2, 1))
    xq = hp(x_c, params['wq']) + params['bq']
    yk = hp(y_c, params['wk']) + params['bk']
    yv = hp(y_c, params['wv']) + params['bv']
    gather = jax.vmap(lambda f, i: f[i])
    yk_g, yv_g, gxyz = gather(yk, idx), gather(yv, idx), gather(xyz_c, idx)
    diff = gxyz - xyz_c[:, :, None, :]
    euc = jnp.linalg.norm(diff, axis=-1, keepdims=True)
    feat = jnp.concatenate([diff, euc], axis=-1)

    def bn(v, g, b, m, var):
        return (v - m) / jnp.sqrt(var + eps) * g + b

    h = hp(feat, params['wg1']) + params['bg1']
    h = jax.nn.relu(bn(h, params['ge_bn1_g'], params['ge_bn1_b'],
                       params['ge_bn1_m'], params['ge_bn1_v']))
    h = hp(h, params['wg2']) + params['bg2']
    emb = -(yk_g - xq[:, :, None, :]) ** 2 + h
    t = jax.nn.relu(bn(emb, params['ne_bna_g'], params['ne_bna_b'],
                       params['ne_bna_m'], params['ne_bna_v']))
    t = hp(t, params['wn1']) + params['bn1']
    t = jax.nn.relu(bn(t, params['ne_bnb_g'], params['ne_bnb_b'],
                       params['ne_bnb_m'], params['ne_bnb_v']))
    w = hp(t, params['wn2']) + params['bn2']
    p = jax.nn.softmax(w, axis=2)
    out = jnp.sum(yv_g * p, axis=2)
    return jnp.transpose(out, (0, 2, 1))


# --------------------------------------------------------------------------
# Deterministic parameter init (weights stored as (in, out) == Conv weight^T)
# --------------------------------------------------------------------------
def init_params(key, channels, shrink_ratio=4):
    qk = channels // shrink_ratio
    ks = list(jax.random.split(key, 16))

    def w(k, shape, scale=0.2):
        return (scale * jax.random.normal(k, shape)).astype(jnp.float32)

    def bnp(k, ch, prefix):
        k1, k2, k3, k4 = jax.random.split(k, 4)
        return {
            f'{prefix}_g': (1.0 + 0.1 * jax.random.normal(k1, (ch,))).astype(jnp.float32),
            f'{prefix}_b': (0.05 * jax.random.normal(k2, (ch,))).astype(jnp.float32),
            f'{prefix}_m': (0.1 * jax.random.normal(k3, (ch,))).astype(jnp.float32),
            f'{prefix}_v': (0.5 + 0.5 * jax.random.uniform(k4, (ch,))).astype(jnp.float32),
        }

    p = {
        'wq': w(ks[0], (channels, qk)), 'bq': w(ks[1], (qk,)),
        'wk': w(ks[2], (channels, qk)), 'bk': w(ks[3], (qk,)),
        'wv': w(ks[4], (channels, channels)), 'bv': w(ks[5], (channels,)),
        'wg1': w(ks[6], (4, qk)), 'bg1': w(ks[7], (qk,)),
        'wg2': w(ks[8], (qk, qk)), 'bg2': w(ks[9], (qk,)),
        'wn1': w(ks[10], (qk, qk)), 'bn1': w(ks[11], (qk,)),
        'wn2': w(ks[12], (qk, channels)), 'bn2': w(ks[13], (channels,)),
    }
    p.update(bnp(ks[14], qk, 'ge_bn1'))
    k15a, k15b = jax.random.split(ks[15])
    p.update(bnp(k15a, qk, 'ne_bna'))
    p.update(bnp(k15b, qk, 'ne_bnb'))
    return p


if __name__ == "__main__":
    B, C, N, K = 2, 32, 128, 16       # channels=32, shrink_ratio=4 -> qk=8, nsample=16
    key = jax.random.PRNGKey(0)
    kp, kx, ky, kxyz, kidx = jax.random.split(key, 5)
    params = init_params(kp, C, shrink_ratio=4)

    x = jax.random.normal(kx, (B, C, N), dtype=jnp.float32)        # query features
    y = jax.random.normal(ky, (B, C, N), dtype=jnp.float32)        # key/value features
    y_xyz = jax.random.uniform(kxyz, (B, 3, N), dtype=jnp.float32)
    idx = jax.random.randint(kidx, (B, N, K), 0, N, dtype=jnp.int32)  # grouping indices

    ref = reference_forward(params, x, y, y_xyz, idx)

    # Exact path (f32 MXU, highest precision): tight correctness check.
    out_exact = jax.block_until_ready(
        la_attention_forward(params, x, y, y_xyz, idx, fast=False))
    assert out_exact.shape == (B, C, N)
    err = float(jnp.max(jnp.abs(out_exact - ref)))
    if err > 2e-3:
        raise AssertionError(f"exact path mismatch vs reference: max abs err = {err}")

    # Shipped fast path (bf16 table / weights / output, approx reciprocal): loose check.
    out_fast = jax.block_until_ready(
        la_attention_forward(params, x, y, y_xyz, idx, fast=True))
    assert out_fast.shape == (B, C, N)
    diff = jnp.abs(out_fast.astype(jnp.float32) - ref)
    max_err = float(jnp.max(diff))
    mean_err = float(jnp.mean(diff))
    if max_err > 0.3 or mean_err > 0.03:
        raise AssertionError(
            f"fast path mismatch vs reference: max={max_err} mean={mean_err}")

    print("KERNEL_OK")
</pallas_src>

<mosaic_0001>
module attributes {stable_mosaic.version = 11 : i64} {
  func.func @_proj_kernel(%arg0: i32, %arg1: memref<256x32xf32, #tpu.memory_space<vmem>>, %arg2: memref<256x32xf32, #tpu.memory_space<vmem>>, %arg3: memref<256x3xf32, #tpu.memory_space<vmem>>, %arg4: memref<32x8xf32, #tpu.memory_space<vmem>>, %arg5: memref<1x8xf32, #tpu.memory_space<vmem>>, %arg6: memref<32x40xf32, #tpu.memory_space<vmem>>, %arg7: memref<1x40xf32, #tpu.memory_space<vmem>>, %arg8: memref<256x52xf32, #tpu.memory_space<vmem>>) attributes {dimension_semantics = [#tpu.dimension_semantics<parallel>], iteration_bounds = array<i64: 1>, scalar_prefetch = 0 : i64, scratch_operands = 0 : i64, tpu.core_type = #tpu.core_type<tc>, window_params = [{transform_indices = @transform_0, window_bounds = array<i64: 256, 32>}, {transform_indices = @transform_1, window_bounds = array<i64: 256, 32>}, {transform_indices = @transform_2, window_bounds = array<i64: 256, 3>}, {pipeline_mode = #tpu.pipeline_mode<synchronous>, transform_indices = @transform_3, window_bounds = array<i64: 32, 8>}, {pipeline_mode = #tpu.pipeline_mode<synchronous>, transform_indices = @transform_4, window_bounds = array<i64: 1, 8>}, {pipeline_mode = #tpu.pipeline_mode<synchronous>, transform_indices = @transform_5, window_bounds = array<i64: 32, 40>}, {pipeline_mode = #tpu.pipeline_mode<synchronous>, transform_indices = @transform_6, window_bounds = array<i64: 1, 40>}, {transform_indices = @transform_7, window_bounds = array<i64: 256, 52>}]} {
    %c0 = arith.constant 0 : index
    %c0_0 = arith.constant 0 : index
    %0 = vector.load %arg1[%c0, %c0_0] : memref<256x32xf32, #tpu.memory_space<vmem>>, vector<256x32xf32>
    %c0_1 = arith.constant 0 : index
    %c0_2 = arith.constant 0 : index
    %1 = vector.load %arg4[%c0_1, %c0_2] : memref<32x8xf32, #tpu.memory_space<vmem>>, vector<32x8xf32>
    %cst = arith.constant dense<0.000000e+00> : vector<256x8xf32>
    %2 = tpu.matmul %0, %1, %cst {dimension_numbers = #tpu.dot_dimension_numbers<[1], [0], [0], [1], [0, 0, 1, 1], [], []>, precision = #tpu.contract_precision<fp32>} : vector<256x32xf32>, vector<32x8xf32>, vector<256x8xf32> -> vector<256x8xf32>
    %c0_3 = arith.constant 0 : index
    %c0_4 = arith.constant 0 : index
    %3 = vector.load %arg5[%c0_3, %c0_4] : memref<1x8xf32, #tpu.memory_space<vmem>>, vector<1x8xf32>
    %4 = vector.broadcast %3 : vector<1x8xf32> to vector<256x8xf32>
    %5 = arith.addf %2, %4 : vector<256x8xf32>
    %c0_5 = arith.constant 0 : index
    %c0_6 = arith.constant 0 : index
    %6 = vector.load %arg2[%c0_5, %c0_6] : memref<256x32xf32, #tpu.memory_space<vmem>>, vector<256x32xf32>
    %c0_7 = arith.constant 0 : index
    %c0_8 = arith.constant 0 : index
    %7 = vector.load %arg6[%c0_7, %c0_8] : memref<32x40xf32, #tpu.memory_space<vmem>>, vector<32x40xf32>
    %cst_9 = arith.constant dense<0.000000e+00> : vector<256x40xf32>
    %8 = tpu.matmul %6, %7, %cst_9 {dimension_numbers = #tpu.dot_dimension_numbers<[1], [0], [0], [1], [0, 0, 1, 1], [], []>, precision = #tpu.contract_precision<fp32>} : vector<256x32xf32>, vector<32x40xf32>, vector<256x40xf32> -> vector<256x40xf32>
    %c0_10 = arith.constant 0 : index
    %c0_11 = arith.constant 0 : index
    %9 = vector.load %arg7[%c0_10, %c0_11] : memref<1x40xf32, #tpu.memory_space<vmem>>, vector<1x40xf32>
    %10 = vector.broadcast %9 : vector<1x40xf32> to vector<256x40xf32>
    %11 = arith.addf %8, %10 : vector<256x40xf32>
    %c0_12 = arith.constant 0 : index
    %c0_13 = arith.constant 0 : index
    %12 = vector.load %arg8[%c0_12, %c0_13] : memref<256x52xf32, #tpu.memory_space<vmem>>, vector<256x8xf32>
    tpu.vector_store %arg8[%c0_12, %c0_13], %5 {strides = array<i32>} : memref<256x52xf32, #tpu.memory_space<vmem>>, vector<256x8xf32>,
    %c0_14 = arith.constant 0 : index
    %c8 = arith.constant 8 : index
    %13 = vector.load %arg8[%c0_14, %c8] : memref<256x52xf32, #tpu.memory_space<vmem>>, vector<256x40xf32>
    tpu.vector_store %arg8[%c0_14, %c8], %11 {strides = array<i32>} : memref<256x52xf32, #tpu.memory_space<vmem>>, vector<256x40xf32>,
    %c0_15 = arith.constant 0 : index
    %c0_16 = arith.constant 0 : index
    %14 = vector.load %arg3[%c0_15, %c0_16] : memref<256x3xf32, #tpu.memory_space<vmem>>, vector<256x3xf32>
    %c0_17 = arith.constant 0 : index
    %c48 = arith.constant 48 : index
    %15 = vector.load %arg8[%c0_17, %c48] : memref<256x52xf32, #tpu.memory_space<vmem>>, vector<256x3xf32>
    tpu.vector_store %arg8[%c0_17, %c48], %14 {strides = array<i32>} : memref<256x52xf32, #tpu.memory_space<vmem>>, vector<256x3xf32>,
    %cst_18 = arith.constant 0.000000e+00 : f32
    %16 = vector.broadcast %cst_18 : f32 to vector<256x1xf32>
    %c0_19 = arith.constant 0 : index
    %c51 = arith.constant 51 : index
    %17 = vector.load %arg8[%c0_19, %c51] : memref<256x52xf32, #tpu.memory_space<vmem>>, vector<256x1xf32>
    tpu.vector_store %arg8[%c0_19, %c51], %16 {strides = array<i32>} : memref<256x52xf32, #tpu.memory_space<vmem>>, vector<256x1xf32>,
    return
  }
  func.func @transform_0(%arg0: i32) -> (i32, i32) {
    %c0_i32 = arith.constant 0 : i32
    %c0_i32_0 = arith.constant 0 : i32
    return %arg0, %c0_i32 : i32, i32
  }
  func.func @transform_1(%arg0: i32) -> (i32, i32) {
    %c0_i32 = arith.constant 0 : i32
    %c0_i32_0 = arith.constant 0 : i32
    return %arg0, %c0_i32 : i32, i32
  }
  func.func @transform_2(%arg0: i32) -> (i32, i32) {
    %c0_i32 = arith.constant 0 : i32
    %c0_i32_0 = arith.constant 0 : i32
    return %arg0, %c0_i32 : i32, i32
  }
  func.func @transform_3(%arg0: i32) -> (i32, i32) {
    %c0_i32 = arith.constant 0 : i32
    %c0_i32_0 = arith.constant 0 : i32
    %c0_i32_1 = arith.constant 0 : i32
    return %c0_i32, %c0_i32_0 : i32, i32
  }
  func.func @transform_4(%arg0: i32) -> (i32, i32) {
    %c0_i32 = arith.constant 0 : i32
    %c0_i32_0 = arith.constant 0 : i32
    %c0_i32_1 = arith.constant 0 : i32
    return %c0_i32, %c0_i32_0 : i32, i32
  }
  func.func @transform_5(%arg0: i32) -> (i32, i32) {
    %c0_i32 = arith.constant 0 : i32
    %c0_i32_0 = arith.constant 0 : i32
    %c0_i32_1 = arith.constant 0 : i32
    return %c0_i32, %c0_i32_0 : i32, i32
  }
  func.func @transform_6(%arg0: i32) -> (i32, i32) {
    %c0_i32 = arith.constant 0 : i32
    %c0_i32_0 = arith.constant 0 : i32
    %c0_i32_1 = arith.constant 0 : i32
    return %c0_i32, %c0_i32_0 : i32, i32
  }
  func.func @transform_7(%arg0: i32) -> (i32, i32) {
    %c0_i32 = arith.constant 0 : i32
    %c0_i32_0 = arith.constant 0 : i32
    return %arg0, %c0_i32 : i32, i32
  }
}

</mosaic_0001>

<llo_original>
// kernel: tpu_custom_call.1
$region0: #{tpu_custom_call.1}
  #allocation0 [shape = 'u32[]', space=smem, size = 0x4, offset = 0x4, fixed_abs, tag = 'smem constant byte address 0x4 - core index']
  #allocation1 [shape = 'u32[144,128]{1,0:T(1,128)}', space=vmem, size = 0x12000, scoped, tag = 'internal scratch']
  %s0 = inlined_call_operand.vmem [shape: f32[256,32], index: 0, kind: input, shape index: {}]
  %s1 = inlined_call_operand.vmem [shape: f32[256,32], index: 1, kind: input, shape index: {}]
  %s2 = inlined_call_operand.vmem [shape: f32[256,3], index: 2, kind: input, shape index: {}]
  %s3 = inlined_call_operand.vmem [shape: f32[32,8], index: 3, kind: input, shape index: {}]
  %s4 = inlined_call_operand.vmem [shape: f32[1,8], index: 4, kind: input, shape index: {}]
  %s5 = inlined_call_operand.vmem [shape: f32[32,40], index: 5, kind: input, shape index: {}]
  %s6 = inlined_call_operand.vmem [shape: f32[1,40], index: 6, kind: input, shape index: {}]
  %s7 = inlined_call_operand.vmem [shape: f32[256,52], index: 7, kind: output, shape index: {}]
  %s8 = sld [smem:[#allocation0]]
  $region38: #{tpu_custom_call.1} parent=0
    _
  %s10 = ssub.s32 1, %s8
  %s11 = scalar_select 0, %s10, %s8
  // Predicated region
  $region2: #{tpu_custom_call.1} parent=0 // pred_check
    _
  $region3: #{tpu_custom_call.1} parent=0 // pred_check_branch
    %13 = sbr.rel (0) target = $region5
  $region4: #{tpu_custom_call.1} parent=0 // pred_region
    _
  $region5: #{tpu_custom_call.1} parent=0 // pred_fallthru
    _
  // Predicated region
  $region6: #{tpu_custom_call.1} parent=0 // pred_check
    _
  $region7: #{tpu_custom_call.1} parent=0 // pred_check_branch
    %15 = sbr.rel (0) target = $region9
  $region8: #{tpu_custom_call.1} parent=0 // pred_region
    _
  $region9: #{tpu_custom_call.1} parent=0 // pred_fallthru
    _
  // Predicated region
  $region10: #{tpu_custom_call.1} parent=0 // pred_check
    _
  $region11: #{tpu_custom_call.1} parent=0 // pred_check_branch
    %17 = sbr.rel (0) target = $region13
  $region12: #{tpu_custom_call.1} parent=0 // pred_region
    _
  $region13: #{tpu_custom_call.1} parent=0 // pred_fallthru
    _
  // Predicated region
  $region14: #{tpu_custom_call.1} parent=0 // pred_check
    _
  $region15: #{tpu_custom_call.1} parent=0 // pred_check_branch
    %19 = sbr.rel (0) target = $region17
  $region16: #{tpu_custom_call.1} parent=0 // pred_region
    _
  $region17: #{tpu_custom_call.1} parent=0 // pred_fallthru
    _
  // Predicated region
  $region18: #{tpu_custom_call.1} parent=0 // pred_check
    _
  $region19: #{tpu_custom_call.1} parent=0 // pred_check_branch
    %21 = sbr.rel (0) target = $region21
  $region20: #{tpu_custom_call.1} parent=0 // pred_region
    _
  $region21: #{tpu_custom_call.1} parent=0 // pred_fallthru
    _
  // Predicated region
  $region22: #{tpu_custom_call.1} parent=0 // pred_check
    _
  $region23: #{tpu_custom_call.1} parent=0 // pred_check_branch
    %23 = sbr.rel (0) target = $region25
  $region24: #{tpu_custom_call.1} parent=0 // pred_region
    _
  $region25: #{tpu_custom_call.1} parent=0 // pred_fallthru
    _
  // Predicated region
  $region26: #{tpu_custom_call.1} parent=0 // pred_check
    _
  $region27: #{tpu_custom_call.1} parent=0 // pred_check_branch
    %25 = sbr.rel (0) target = $region29
  $region28: #{tpu_custom_call.1} parent=0 // pred_region
    _
  $region29: #{tpu_custom_call.1} parent=0 // pred_fallthru
    _
  %v26 = vld [vmem:[%s0] sm:$0xff]
  %v27 = vld [vmem:[%s0 + $0x8] sm:$0xff]
  %v28 = vld [vmem:[%s0 + $0x10] sm:$0xff]
  %v29 = vld [vmem:[%s0 + $0x18] sm:$0xff]
  %v30 = vld [vmem:[%s0 + $0x20] sm:$0xff]
  %v31 = vld [vmem:[%s0 + $0x28] sm:$0xff]
  %v32 = vld [vmem:[%s0 + $0x30] sm:$0xff]
  %v33 = vld [vmem:[%s0 + $0x38] sm:$0xff]
  %v34 = vld [vmem:[%s0 + $0x40] sm:$0xff]
  %v35 = vld [vmem:[%s0 + $0x48] sm:$0xff]
  %v36 = vld [vmem:[%s0 + $0x50] sm:$0xff]
  %v37 = vld [vmem:[%s0 + $0x58] sm:$0xff]
  %v38 = vld [vmem:[%s0 + $0x60] sm:$0xff]
  %v39 = vld [vmem:[%s0 + $0x68] sm:$0xff]
  %v40 = vld [vmem:[%s0 + $0x70] sm:$0xff]
  %v41 = vld [vmem:[%s0 + $0x78] sm:$0xff]
  %v42 = vld [vmem:[%s0 + $0x80] sm:$0xff]
  %v43 = vld [vmem:[%s0 + $0x88] sm:$0xff]
  %v44 = vld [vmem:[%s0 + $0x90] sm:$0xff]
  %v45 = vld [vmem:[%s0 + $0x98] sm:$0xff]
  %v46 = vld [vmem:[%s0 + $0xa0] sm:$0xff]
  %v47 = vld [vmem:[%s0 + $0xa8] sm:$0xff]
  %v48 = vld [vmem:[%s0 + $0xb0] sm:$0xff]
  %v49 = vld [vmem:[%s0 + $0xb8] sm:$0xff]
  %v50 = vld [vmem:[%s0 + $0xc0] sm:$0xff]
  %v51 = vld [vmem:[%s0 + $0xc8] sm:$0xff]
  %v52 = vld [vmem:[%s0 + $0xd0] sm:$0xff]
  %v53 = vld [vmem:[%s0 + $0xd8] sm:$0xff]
  %v54 = vld [vmem:[%s0 + $0xe0] sm:$0xff]
  %v55 = vld [vmem:[%s0 + $0xe8] sm:$0xff]
  %v56 = vld [vmem:[%s0 + $0xf0] sm:$0xff]
  %v57 = vld [vmem:[%s0 + $0xf8] sm:$0xff]
  %v58 = vld [vmem:[%s3] sm:$0xff]
  %v59 = vld [vmem:[%s3 + $0x8] sm:$0xff]
  %v60 = vld [vmem:[%s3 + $0x10] sm:$0xff]
  %v61 = vld [vmem:[%s3 + $0x18] sm:$0xff]
  %v62 = vld [vmem:[%s4] sm:$0x1]
  %v64 = vlaneseq
  %v65 = vshrl.u32 %v64, 7
  %v66 = vsub.s32 0, %v65
  %v67 = vrot.slane %v62, %v66
  %vm69 = vcmask 261120
  %v71 = vsel %vm69, %v26, 0
  %v74 = vsel %vm69, %v27, 0
  %v77 = vsel %vm69, %v28, 0
  %v80 = vsel %vm69, %v29, 0
  %v83 = vsel %vm69, %v30, 0
  %v86 = vsel %vm69, %v31, 0
  %v89 = vsel %vm69, %v32, 0
  %v92 = vsel %vm69, %v33, 0
  %v95 = vsel %vm69, %v34, 0
  %v98 = vsel %vm69, %v35, 0
  %v101 = vsel %vm69, %v36, 0
  %v104 = vsel %vm69, %v37, 0
  %v107 = vsel %vm69, %v38, 0
  %v110 = vsel %vm69, %v39, 0
  %v113 = vsel %vm69, %v40, 0
  %v116 = vsel %vm69, %v41, 0
  %v119 = vsel %vm69, %v42, 0
  %v122 = vsel %vm69, %v43, 0
  %v125 = vsel %vm69, %v44, 0
  %v128 = vsel %vm69, %v45, 0
  %v131 = vsel %vm69, %v46, 0
  %v134 = vsel %vm69, %v47, 0
  %v137 = vsel %vm69, %v48, 0
  %v140 = vsel %vm69, %v49, 0
  %v143 = vsel %vm69, %v50, 0
  %v146 = vsel %vm69, %v51, 0
  %v149 = vsel %vm69, %v52, 0
  %v152 = vsel %vm69, %v53, 0
  %v155 = vsel %vm69, %v54, 0
  %v158 = vsel %vm69, %v55, 0
  %v161 = vsel %vm69, %v56, 0
  %v164 = vsel %vm69, %v57, 0
  %166 = vmatprep.subr.mxu0 0.0
  %167 = vmatpush1.msra.mxu0 0.0
  %168 = vmatprep.subr.mxu0 0.0
  %169 = vmatpush1.msra.mxu0 0.0
  %170 = vmatprep.subr.mxu0 0.0
  %171 = vmatpush1.msra.mxu0 0.0
  %172 = vmatprep.subr.mxu0 0.0
  %173 = vmatpush1.msra.mxu0 0.0
  %174 = vmatprep.subr.mxu0 0.0
  %175 = vmatpush1.msra.mxu0 0.0
  %176 = vmatprep.subr.mxu0 0.0
  %177 = vmatpush1.msra.mxu0 0.0
  %178 = vmatprep.subr.mxu0 0.0
  %179 = vmatpush1.msra.mxu0 0.0
  %180 = vmatprep.subr.mxu0 0.0
  %181 = vmatpush1.msra.mxu0 0.0
  %182 = vmatprep.subr.mxu0 0.0
  %183 = vmatpush1.msra.mxu0 0.0
  %184 = vmatprep.subr.mxu0 0.0
  %185 = vmatpush1.msra.mxu0 0.0
  %186 = vmatprep.subr.mxu0 0.0
  %187 = vmatpush1.msra.mxu0 0.0
  %188 = vmatprep.subr.mxu0 0.0
  %189 = vmatpush1.msra.mxu0 0.0
  %190 = vmatprep.subr.mxu0 0.0
  %v191 = vand.u32 %v61, 4294901760
  %192 = vmatpush1.msra.mxu0 %v191
  %193 = vmatprep.subr.mxu0 0.0
  %v194 = vand.u32 %v60, 4294901760
  %195 = vmatpush1.msra.mxu0 %v194
  %196 = vmatprep.subr.mxu0 0.0
  %v197 = vand.u32 %v59, 4294901760
  %198 = vmatpush1.msra.mxu0 %v197
  %199 = vmatprep.subr.mxu0 0.0
  %v200 = vand.u32 %v58, 4294901760
  %201 = vmatpush1.msra.mxu0 %v200
  %202 = vmatprep.subr.mxu0 0.0
  %203 = vmatpush2.msra.mxu0 0.0
  %204 = vmatprep.subr.mxu0 0.0
  %205 = vmatpush2.msra.mxu0 0.0
  %206 = vmatprep.subr.mxu0 0.0
  %207 = vmatpush2.msra.mxu0 0.0
  %208 = vmatprep.subr.mxu0 0.0
  %209 = vmatpush2.msra.mxu0 0.0
  %210 = vmatprep.subr.mxu0 0.0
  %211 = vmatpush2.msra.mxu0 0.0
  %212 = vmatprep.subr.mxu0 0.0
  %213 = vmatpush2.msra.mxu0 0.0
  %214 = vmatprep.subr.mxu0 0.0
  %215 = vmatpush2.msra.mxu0 0.0
  %216 = vmatprep.subr.mxu0 0.0
  %217 = vmatpush2.msra.mxu0 0.0
  %218 = vmatprep.subr.mxu0 0.0
  %219 = vmatpush2.msra.mxu0 0.0
  %220 = vmatprep.subr.mxu0 0.0
  %221 = vmatpush2.msra.mxu0 0.0
  %222 = vmatprep.subr.mxu0 0.0
  %223 = vmatpush2.msra.mxu0 0.0
  %224 = vmatprep.subr.mxu0 0.0
  %225 = vmatpush2.msra.mxu0 0.0
  %226 = vmatprep.subr.mxu0 0.0
  %227 = vmatpush2.msra.mxu0 0.0
  %228 = vmatprep.subr.mxu0 0.0
  %229 = vmatpush2.msra.mxu0 0.0
  %230 = vmatprep.subr.mxu0 0.0
  %231 = vmatpush2.msra.mxu0 0.0
  %232 = vmatprep.subr.mxu0 0.0
  %233 = vmatpush2.msra.mxu0 0.0
  %234 = vmatprep.mubr.f32.mxu0 0.0
  %v235 = vand.u32 %v71, 4294901760
  %v236 = vsub.f32 %v71, %v235
  %v237 = vand.u32 %v236, 4294901760
  %v238 = vsub.f32 %v236, %v237
  %v239 = vand.u32 %v238, 4294901760
  %240 = vmatmul.mubr.f32.gmra.mxu0 %v239
  %v241 = vpop.f32.mrf.mxu0
  %v242 = vadd.f32 %v67, %v241
  %v243 = vpop.f32.mrf.mxu0
  %244 = vmatprep.mubr.f32.mxu0 0.0
  %v245 = vand.u32 %v74, 4294901760
  %v246 = vsub.f32 %v74, %v245
  %v247 = vand.u32 %v246, 4294901760
  %v248 = vsub.f32 %v246, %v247
  %v249 = vand.u32 %v248, 4294901760
  %250 = vmatmul.mubr.f32.gmra.mxu0 %v249
  %v251 = vpop.f32.mrf.mxu0
  %v252 = vadd.f32 %v67, %v251
  %v253 = vpop.f32.mrf.mxu0
  %254 = vmatprep.mubr.f32.mxu0 0.0
  %v255 = vand.u32 %v77, 4294901760
  %v256 = vsub.f32 %v77, %v255
  %v257 = vand.u32 %v256, 4294901760
  %v258 = vsub.f32 %v256, %v257
  %v259 = vand.u32 %v258, 4294901760
  %260 = vmatmul.mubr.f32.gmra.mxu0 %v259
  %v261 = vpop.f32.mrf.mxu0
  %v262 = vadd.f32 %v67, %v261
  %v263 = vpop.f32.mrf.mxu0
  %264 = vmatprep.mubr.f32.mxu0 0.0
  %v265 = vand.u32 %v80, 4294901760
  %v266 = vsub.f32 %v80, %v265
  %v267 = vand.u32 %v266, 4294901760
  %v268 = vsub.f32 %v266, %v267
  %v269 = vand.u32 %v268, 4294901760
  %270 = vmatmul.mubr.f32.gmra.mxu0 %v269
  %v271 = vpop.f32.mrf.mxu0
  %v272 = vadd.f32 %v67, %v271
  %v273 = vpop.f32.mrf.mxu0
  %274 = vmatprep.mubr.f32.mxu0 0.0
  %v275 = vand.u32 %v83, 4294901760
  %v276 = vsub.f32 %v83, %v275
  %v277 = vand.u32 %v276, 4294901760
  %v278 = vsub.f32 %v276, %v277
  %v279 = vand.u32 %v278, 4294901760
  %280 = vmatmul.mubr.f32.gmra.mxu0 %v279
  %v281 = vpop.f32.mrf.mxu0
  %v282 = vadd.f32 %v67, %v281
  %v283 = vpop.f32.mrf.mxu0
  %284 = vmatprep.mubr.f32.mxu0 0.0
  %v285 = vand.u32 %v86, 4294901760
  %v286 = vsub.f32 %v86, %v285
  %v287 = vand.u32 %v286, 4294901760
  %v288 = vsub.f32 %v286, %v287
  %v289 = vand.u32 %v288, 4294901760
  %290 = vmatmul.mubr.f32.gmra.mxu0 %v289
  %v291 = vpop.f32.mrf.mxu0
  %v292 = vadd.f32 %v67, %v291
  %v293 = vpop.f32.mrf.mxu0
  %294 = vmatprep.mubr.f32.mxu0 0.0
  %v295 = vand.u32 %v89, 4294901760
  %v296 = vsub.f32 %v89, %v295
  %v297 = vand.u32 %v296, 4294901760
  %v298 = vsub.f32 %v296, %v297
  %v299 = vand.u32 %v298, 4294901760
  %300 = vmatmul.mubr.f32.gmra.mxu0 %v299
  %v301 = vpop.f32.mrf.mxu0
  %v302 = vadd.f32 %v67, %v301
  %v303 = vpop.f32.mrf.mxu0
  %304 = vmatprep.mubr.f32.mxu0 0.0
  %v305 = vand.u32 %v92, 4294901760
  %v306 = vsub.f32 %v92, %v305
  %v307 = vand.u32 %v306, 4294901760
  %v308 = vsub.f32 %v306, %v307
  %v309 = vand.u32 %v308, 4294901760
  %310 = vmatmul.mubr.f32.gmra.mxu0 %v309
  %v311 = vpop.f32.mrf.mxu0
  %v312 = vadd.f32 %v67, %v311
  %v313 = vpop.f32.mrf.mxu0
  %314 = vmatprep.mubr.f32.mxu0 0.0
  %v315 = vand.u32 %v95, 4294901760
  %v316 = vsub.f32 %v95, %v315
  %v317 = vand.u32 %v316, 4294901760
  %v318 = vsub.f32 %v316, %v317
  %v319 = vand.u32 %v318, 4294901760
  %320 = vmatmul.mubr.f32.gmra.mxu0 %v319
  %v321 = vpop.f32.mrf.mxu0
  %v322 = vadd.f32 %v67, %v321
  %v323 = vpop.f32.mrf.mxu0
  %324 = vmatprep.mubr.f32.mxu0 0.0
  %v325 = vand.u32 %v98, 4294901760
  %v326 = vsub.f32 %v98, %v325
  %v327 = vand.u32 %v326, 4294901760
  %v328 = vsub.f32 %v326, %v327
  %v329 = vand.u32 %v328, 4294901760
  %330 = vmatmul.mubr.f32.gmra.mxu0 %v329
  %v331 = vpop.f32.mrf.mxu0
  %v332 = vadd.f32 %v67, %v331
  %v333 = vpop.f32.mrf.mxu0
  %334 = vmatprep.mubr.f32.mxu0 0.0
  %v335 = vand.u32 %v101, 4294901760
  %v336 = vsub.f32 %v101, %v335
  %v337 = vand.u32 %v336, 4294901760
  %v338 = vsub.f32 %v336, %v337
  %v339 = vand.u32 %v338, 4294901760
  %340 = vmatmul.mubr.f32.gmra.mxu0 %v339
  %v341 = vpop.f32.mrf.mxu0
  %v342 = vadd.f32 %v67, %v341
  %v343 = vpop.f32.mrf.mxu0
  %344 = vmatprep.mubr.f32.mxu0 0.0
  %v345 = vand.u32 %v104, 4294901760
  %v346 = vsub.f32 %v104, %v345
  %v347 = vand.u32 %v346, 4294901760
  %v348 = vsub.f32 %v346, %v347
  %v349 = vand.u32 %v348, 4294901760
  %350 = vmatmul.mubr.f32.gmra.mxu0 %v349
  %v351 = vpop.f32.mrf.mxu0
  %v352 = vadd.f32 %v67, %v351
  %v353 = vpop.f32.mrf.mxu0
  %354 = vmatprep.mubr.f32.mxu0 0.0
  %v355 = vand.u32 %v107, 4294901760
  %v356 = vsub.f32 %v107, %v355
  %v357 = vand.u32 %v356, 4294901760
  %v358 = vsub.f32 %v356, %v357
  %v359 = vand.u32 %v358, 4294901760
  %360 = vmatmul.mubr.f32.gmra.mxu0 %v359
  %v361 = vpop.f32.mrf.mxu0
  %v362 = vadd.f32 %v67, %v361
  %v363 = vpop.f32.mrf.mxu0
  %364 = vmatprep.mubr.f32.mxu0 0.0
  %v365 = vand.u32 %v110, 4294901760
  %v366 = vsub.f32 %v110, %v365
  %v367 = vand.u32 %v366, 4294901760
  %v368 = vsub.f32 %v366, %v367
  %v369 = vand.u32 %v368, 4294901760
  %370 = vmatmul.mubr.f32.gmra.mxu0 %v369
  %v371 = vpop.f32.mrf.mxu0
  %v372 = vadd.f32 %v67, %v371
  %v373 = vpop.f32.mrf.mxu0
  %374 = vmatprep.mubr.f32.mxu0 0.0
  %v375 = vand.u32 %v113, 4294901760
  %v376 = vsub.f32 %v113, %v375
  %v377 = vand.u32 %v376, 4294901760
  %v378 = vsub.f32 %v376, %v377
  %v379 = vand.u32 %v378, 4294901760
  %380 = vmatmul.mubr.f32.gmra.mxu0 %v379
  %v381 = vpop.f32.mrf.mxu0
  %v382 = vadd.f32 %v67, %v381
  %v383 = vpop.f32.mrf.mxu0
  %384 = vmatprep.mubr.f32.mxu0 0.0
  %v385 = vand.u32 %v116, 4294901760
  %v386 = vsub.f32 %v116, %v385
  %v387 = vand.u32 %v386, 4294901760
  %v388 = vsub.f32 %v386, %v387
  %v389 = vand.u32 %v388, 4294901760
  %390 = vmatmul.mubr.f32.gmra.mxu0 %v389
  %v391 = vpop.f32.mrf.mxu0
  %v392 = vadd.f32 %v67, %v391
  %v393 = vpop.f32.mrf.mxu0
  %394 = vmatprep.mubr.f32.mxu0 0.0
  %v395 = vand.u32 %v119, 4294901760
  %v396 = vsub.f32 %v119, %v395
  %v397 = vand.u32 %v396, 4294901760
  %v398 = vsub.f32 %v396, %v397
  %v399 = vand.u32 %v398, 4294901760
  %400 = vmatmul.mubr.f32.gmra.mxu0 %v399
  %v401 = vpop.f32.mrf.mxu0
  %v402 = vadd.f32 %v67, %v401
  %v403 = vpop.f32.mrf.mxu0
  %404 = vmatprep.mubr.f32.mxu0 0.0
  %v405 = vand.u32 %v122, 4294901760
  %v406 = vsub.f32 %v122, %v405
  %v407 = vand.u32 %v406, 4294901760
  %v408 = vsub.f32 %v406, %v407
  %v409 = vand.u32 %v408, 4294901760
  %410 = vmatmul.mubr.f32.gmra.mxu0 %v409
  %v411 = vpop.f32.mrf.mxu0
  %v412 = vadd.f32 %v67, %v411
  %v413 = vpop.f32.mrf.mxu0
  %414 = vmatprep.mubr.f32.mxu0 0.0
  %v415 = vand.u32 %v125, 4294901760
  %v416 = vsub.f32 %v125, %v415
  %v417 = vand.u32 %v416, 4294901760
  %v418 = vsub.f32 %v416, %v417
  %v419 = vand.u32 %v418, 4294901760
  %420 = vmatmul.mubr.f32.gmra.mxu0 %v419
  %v421 = vpop.f32.mrf.mxu0
  %v422 = vadd.f32 %v67, %v421
  %v423 = vpop.f32.mrf.mxu0
  %424 = vmatprep.mubr.f32.mxu0 0.0
  %v425 = vand.u32 %v128, 4294901760
  %v426 = vsub.f32 %v128, %v425
  %v427 = vand.u32 %v426, 4294901760
  %v428 = vsub.f32 %v426, %v427
  %v429 = vand.u32 %v428, 4294901760
  %430 = vmatmul.mubr.f32.gmra.mxu0 %v429
  %v431 = vpop.f32.mrf.mxu0
  %v432 = vadd.f32 %v67, %v431
  %v433 = vpop.f32.mrf.mxu0
  %434 = vmatprep.mubr.f32.mxu0 0.0
  %v435 = vand.u32 %v131, 4294901760
  %v436 = vsub.f32 %v131, %v435
  %v437 = vand.u32 %v436, 4294901760
  %v438 = vsub.f32 %v436, %v437
  %v439 = vand.u32 %v438, 4294901760
  %440 = vmatmul.mubr.f32.gmra.mxu0 %v439
  %v441 = vpop.f32.mrf.mxu0
  %v442 = vadd.f32 %v67, %v441
  %v443 = vpop.f32.mrf.mxu0
  %444 = vmatprep.mubr.f32.mxu0 0.0
  %v445 = vand.u32 %v134, 4294901760
  %v446 = vsub.f32 %v134, %v445
  %v447 = vand.u32 %v446, 4294901760
  %v448 = vsub.f32 %v446, %v447
  %v449 = vand.u32 %v448, 4294901760
  %450 = vmatmul.mubr.f32.gmra.mxu0 %v449
  %v451 = vpop.f32.mrf.mxu0
  %v452 = vadd.f32 %v67, %v451
  %v453 = vpop.f32.mrf.mxu0
  %454 = vmatprep.mubr.f32.mxu0 0.0
  %v455 = vand.u32 %v137, 4294901760
  %v456 = vsub.f32 %v137, %v455
  %v457 = vand.u32 %v456, 4294901760
  %v458 = vsub.f32 %v456, %v457
  %v459 = vand.u32 %v458, 4294901760
  %460 = vmatmul.mubr.f32.gmra.mxu0 %v459
  %v461 = vpop.f32.mrf.mxu0
  %v462 = vadd.f32 %v67, %v461
  %v463 = vpop.f32.mrf.mxu0
  %464 = vmatprep.mubr.f32.mxu0 0.0
  %v465 = vand.u32 %v140, 4294901760
  %v466 = vsub.f32 %v140, %v465
  %v467 = vand.u32 %v466, 4294901760
  %v468 = vsub.f32 %v466, %v467
  %v469 = vand.u32 %v468, 4294901760
  %470 = vmatmul.mubr.f32.gmra.mxu0 %v469
  %v471 = vpop.f32.mrf.mxu0
  %v472 = vadd.f32 %v67, %v471
  %v473 = vpop.f32.mrf.mxu0
  %474 = vmatprep.mubr.f32.mxu0 0.0
  %v475 = vand.u32 %v143, 4294901760
  %v476 = vsub.f32 %v143, %v475
  %v477 = vand.u32 %v476, 4294901760
  %v478 = vsub.f32 %v476, %v477
  %v479 = vand.u32 %v478, 4294901760
  %480 = vmatmul.mubr.f32.gmra.mxu0 %v479
  %v481 = vpop.f32.mrf.mxu0
  %v482 = vadd.f32 %v67, %v481
  %v483 = vpop.f32.mrf.mxu0
  %484 = vmatprep.mubr.f32.mxu0 0.0
  %v485 = vand.u32 %v146, 4294901760
  %v486 = vsub.f32 %v146, %v485
  %v487 = vand.u32 %v486, 4294901760
  %v488 = vsub.f32 %v486, %v487
  %v489 = vand.u32 %v488, 4294901760
  %490 = vmatmul.mubr.f32.gmra.mxu0 %v489
  %v491 = vpop.f32.mrf.mxu0
  %v492 = vadd.f32 %v67, %v491
  %v493 = vpop.f32.mrf.mxu0
  %494 = vmatprep.mubr.f32.mxu0 0.0
  %v495 = vand.u32 %v149, 4294901760
  %v496 = vsub.f32 %v149, %v495
  %v497 = vand.u32 %v496, 4294901760
  %v498 = vsub.f32 %v496, %v497
  %v499 = vand.u32 %v498, 4294901760
  %500 = vmatmul.mubr.f32.gmra.mxu0 %v499
  %v501 = vpop.f32.mrf.mxu0
  %v502 = vadd.f32 %v67, %v501
  %v503 = vpop.f32.mrf.mxu0
  %504 = vmatprep.mubr.f32.mxu0 0.0
  %v505 = vand.u32 %v152, 4294901760
  %v506 = vsub.f32 %v152, %v505
  %v507 = vand.u32 %v506, 4294901760
  %v508 = vsub.f32 %v506, %v507
  %v509 = vand.u32 %v508, 4294901760
  %510 = vmatmul.mubr.f32.gmra.mxu0 %v509
  %v511 = vpop.f32.mrf.mxu0
  %v512 = vadd.f32 %v67, %v511
  %v513 = vpop.f32.mrf.mxu0
  %514 = vmatprep.mubr.f32.mxu0 0.0
  %v515 = vand.u32 %v155, 4294901760
  %v516 = vsub.f32 %v155, %v515
  %v517 = vand.u32 %v516, 4294901760
  %v518 = vsub.f32 %v516, %v517
  %v519 = vand.u32 %v518, 4294901760
  %520 = vmatmul.mubr.f32.gmra.mxu0 %v519
  %v521 = vpop.f32.mrf.mxu0
  %v522 = vadd.f32 %v67, %v521
  %v523 = vpop.f32.mrf.mxu0
  %524 = vmatprep.mubr.f32.mxu0 0.0
  %v525 = vand.u32 %v158, 4294901760
  %v526 = vsub.f32 %v158, %v525
  %v527 = vand.u32 %v526, 4294901760
  %v528 = vsub.f32 %v526, %v527
  %v529 = vand.u32 %v528, 4294901760
  %530 = vmatmul.mubr.f32.gmra.mxu0 %v529
  %v531 = vpop.f32.mrf.mxu0
  %v532 = vadd.f32 %v67, %v531
  %v533 = vpop.f32.mrf.mxu0
  %534 = vmatprep.mubr.f32.mxu0 0.0
  %v535 = vand.u32 %v161, 4294901760
  %v536 = vsub.f32 %v161, %v535
  %v537 = vand.u32 %v536, 4294901760
  %v538 = vsub.f32 %v536, %v537
  %v539 = vand.u32 %v538, 4294901760
  %540 = vmatmul.mubr.f32.gmra.mxu0 %v539
  %v541 = vpop.f32.mrf.mxu0
  %v542 = vadd.f32 %v67, %v541
  %v543 = vpop.f32.mrf.mxu0
  %544 = vmatprep.mubr.f32.mxu0 0.0
  %v545 = vand.u32 %v164, 4294901760
  %v546 = vsub.f32 %v164, %v545
  %v547 = vand.u32 %v546, 4294901760
  %v548 = vsub.f32 %v546, %v547
  %v549 = vand.u32 %v548, 4294901760
  %550 = vmatmul.mubr.f32.gmra.mxu0 %v549
  %v551 = vpop.f32.mrf.mxu0
  %v552 = vadd.f32 %v67, %v551
  %v553 = vpop.f32.mrf.mxu0
  %554 = vdwg.mxu0
  %555 = vmatprep.subr.mxu0 0.0
  %556 = vmatpush1.msra.mxu0 0.0
  %557 = vmatprep.subr.mxu0 0.0
  %558 = vmatpush1.msra.mxu0 0.0
  %559 = vmatprep.subr.mxu0 0.0
  %560 = vmatpush1.msra.mxu0 0.0
  %561 = vmatprep.subr.mxu0 0.0
  %562 = vmatpush1.msra.mxu0 0.0
  %563 = vmatprep.subr.mxu0 0.0
  %564 = vmatpush1.msra.mxu0 0.0
  %565 = vmatprep.subr.mxu0 0.0
  %566 = vmatpush1.msra.mxu0 0.0
  %567 = vmatprep.subr.mxu0 0.0
  %568 = vmatpush1.msra.mxu0 0.0
  %569 = vmatprep.subr.mxu0 0.0
  %570 = vmatpush1.msra.mxu0 0.0
  %571 = vmatprep.subr.mxu0 0.0
  %572 = vmatpush1.msra.mxu0 0.0
  %573 = vmatprep.subr.mxu0 0.0
  %574 = vmatpush1.msra.mxu0 0.0
  %575 = vmatprep.subr.mxu0 0.0
  %576 = vmatpush1.msra.mxu0 0.0
  %577 = vmatprep.subr.mxu0 0.0
  %578 = vmatpush1.msra.mxu0 0.0
  %579 = vmatprep.subr.mxu0 0.0
  %v580 = vand.u32 %v61, 4294901760
  %v581 = vsub.f32 %v61, %v580
  %v582 = vand.u32 %v581, 4294901760
  %v583 = vsub.f32 %v581, %v582
  %v584 = vand.u32 %v583, 4294901760
  %585 = vmatpush1.msra.mxu0 %v584
  %586 = vmatprep.subr.mxu0 0.0
  %v587 = vand.u32 %v60, 4294901760
  %v588 = vsub.f32 %v60, %v587
  %v589 = vand.u32 %v588, 4294901760
  %v590 = vsub.f32 %v588, %v589
  %v591 = vand.u32 %v590, 4294901760
  %592 = vmatpush1.msra.mxu0 %v591
  %593 = vmatprep.subr.mxu0 0.0
  %v594 = vand.u32 %v59, 4294901760
  %v595 = vsub.f32 %v59, %v594
  %v596 = vand.u32 %v595, 4294901760
  %v597 = vsub.f32 %v595, %v596
  %v598 = vand.u32 %v597, 4294901760
  %599 = vmatpush1.msra.mxu0 %v598
  %600 = vmatprep.subr.mxu0 0.0
  %v601 = vand.u32 %v58, 4294901760
  %v602 = vsub.f32 %v58, %v601
  %v603 = vand.u32 %v602, 4294901760
  %v604 = vsub.f32 %v602, %v603
  %v605 = vand.u32 %v604, 4294901760
  %606 = vmatpush1.msra.mxu0 %v605
  %607 = vmatprep.subr.mxu0 0.0
  %608 = vmatpush2.msra.mxu0 0.0
  %609 = vmatprep.subr.mxu0 0.0
  %610 = vmatpush2.msra.mxu0 0.0
  %611 = vmatprep.subr.mxu0 0.0
  %612 = vmatpush2.msra.mxu0 0.0
  %613 = vmatprep.subr.mxu0 0.0
  %614 = vmatpush2.msra.mxu0 0.0
  %615 = vmatprep.subr.mxu0 0.0
  %616 = vmatpush2.msra.mxu0 0.0
  %617 = vmatprep.subr.mxu0 0.0
  %618 = vmatpush2.msra.mxu0 0.0
  %619 = vmatprep.subr.mxu0 0.0
  %620 = vmatpush2.msra.mxu0 0.0
  %621 = vmatprep.subr.mxu0 0.0
  %622 = vmatpush2.msra.mxu0 0.0
  %623 = vmatprep.subr.mxu0 0.0
  %624 = vmatpush2.msra.mxu0 0.0
  %625 = vmatprep.subr.mxu0 0.0
  %626 = vmatpush2.msra.mxu0 0.0
  %627 = vmatprep.subr.mxu0 0.0
  %628 = vmatpush2.msra.mxu0 0.0
  %629 = vmatprep.subr.mxu0 0.0
  %630 = vmatpush2.msra.mxu0 0.0
  %631 = vmatprep.subr.mxu0 0.0
  %632 = vmatpush2.msra.mxu0 0.0
  %633 = vmatprep.subr.mxu0 0.0
  %634 = vmatpush2.msra.mxu0 0.0
  %635 = vmatprep.subr.mxu0 0.0
  %636 = vmatpush2.msra.mxu0 0.0
  %637 = vmatprep.subr.mxu0 0.0
  %638 = vmatpush2.msra.mxu0 0.0
  %639 = vmatprep.mubr.f32.mxu0 0.0
  %v640 = vand.u32 %v71, 4294901760
  %641 = vmatmul.mubr.f32.gmra.mxu0 %v640
  %v642 = vpop.f32.mrf.mxu0
  %v643 = vadd.f32 %v242, %v642
  %v644 = vpop.f32.mrf.mxu0
  %645 = vmatprep.mubr.f32.mxu0 0.0
  %v646 = vand.u32 %v74, 4294901760
  %647 = vmatmul.mubr.f32.gmra.mxu0 %v646
  %v648 = vpop.f32.mrf.mxu0
  %v649 = vadd.f32 %v252, %v648
  %v650 = vpop.f32.mrf.mxu0
  %651 = vmatprep.mubr.f32.mxu0 0.0
  %v652 = vand.u32 %v77, 4294901760
  %653 = vmatmul.mubr.f32.gmra.mxu0 %v652
  %v654 = vpop.f32.mrf.mxu0
  %v655 = vadd.f32 %v262, %v654
  %v656 = vpop.f32.mrf.mxu0
  %657 = vmatprep.mubr.f32.mxu0 0.0
  %v658 = vand.u32 %v80, 4294901760
  %659 = vmatmul.mubr.f32.gmra.mxu0 %v658
  %v660 = vpop.f32.mrf.mxu0
  %v661 = vadd.f32 %v272, %v660
  %v662 = vpop.f32.mrf.mxu0
  %663 = vmatprep.mubr.f32.mxu0 0.0
  %v664 = vand.u32 %v83, 4294901760
  %665 = vmatmul.mubr.f32.gmra.mxu0 %v664
  %v666 = vpop.f32.mrf.mxu0
  %v667 = vadd.f32 %v282, %v666
  %v668 = vpop.f32.mrf.mxu0
  %669 = vmatprep.mubr.f32.mxu0 0.0
  %v670 = vand.u32 %v86, 4294901760
  %671 = vmatmul.mubr.f32.gmra.mxu0 %v670
  %v672 = vpop.f32.mrf.mxu0
  %v673 = vadd.f32 %v292, %v672
  %v674 = vpop.f32.mrf.mxu0
  %675 = vmatprep.mubr.f32.mxu0 0.0
  %v676 = vand.u32 %v89, 4294901760
  %677 = vmatmul.mubr.f32.gmra.mxu0 %v676
  %v678 = vpop.f32.mrf.mxu0
  %v679 = vadd.f32 %v302, %v678
  %v680 = vpop.f32.mrf.mxu0
  %681 = vmatprep.mubr.f32.mxu0 0.0
  %v682 = vand.u32 %v92, 4294901760
  %683 = vmatmul.mubr.f32.gmra.mxu0 %v682
  %v684 = vpop.f32.mrf.mxu0
  %v685 = vadd.f32 %v312, %v684
  %v686 = vpop.f32.mrf.mxu0
  %687 = vmatprep.mubr.f32.mxu0 0.0
  %v688 = vand.u32 %v95, 4294901760
  %689 = vmatmul.mubr.f32.gmra.mxu0 %v688
  %v690 = vpop.f32.mrf.mxu0
  %v691 = vadd.f32 %v322, %v690
  %v692 = vpop.f32.mrf.mxu0
  %693 = vmatprep.mubr.f32.mxu0 0.0
  %v694 = vand.u32 %v98, 4294901760
  %695 = vmatmul.mubr.f32.gmra.mxu0 %v694
  %v696 = vpop.f32.mrf.mxu0
  %v697 = vadd.f32 %v332, %v696
  %v698 = vpop.f32.mrf.mxu0
  %699 = vmatprep.mubr.f32.mxu0 0.0
  %v700 = vand.u32 %v101, 4294901760
  %701 = vmatmul.mubr.f32.gmra.mxu0 %v700
  %v702 = vpop.f32.mrf.mxu0
  %v703 = vadd.f32 %v342, %v702
  %v704 = vpop.f32.mrf.mxu0
  %705 = vmatprep.mubr.f32.mxu0 0.0
  %v706 = vand.u32 %v104, 4294901760
  %707 = vmatmul.mubr.f32.gmra.mxu0 %v706
  %v708 = vpop.f32.mrf.mxu0
  %v709 = vadd.f32 %v352, %v708
  %v710 = vpop.f32.mrf.mxu0
  %711 = vmatprep.mubr.f32.mxu0 0.0
  %v712 = vand.u32 %v107, 4294901760
  %713 = vmatmul.mubr.f32.gmra.mxu0 %v712
  %v714 = vpop.f32.mrf.mxu0
  %v715 = vadd.f32 %v362, %v714
  %v716 = vpop.f32.mrf.mxu0
  %717 = vmatprep.mubr.f32.mxu0 0.0
  %v718 = vand.u32 %v110, 4294901760
  %719 = vmatmul.mubr.f32.gmra.mxu0 %v718
  %v720 = vpop.f32.mrf.mxu0
  %v721 = vadd.f32 %v372, %v720
  %v722 = vpop.f32.mrf.mxu0
  %723 = vmatprep.mubr.f32.mxu0 0.0
  %v724 = vand.u32 %v113, 4294901760
  %725 = vmatmul.mubr.f32.gmra.mxu0 %v724
  %v726 = vpop.f32.mrf.mxu0
  %v727 = vadd.f32 %v382, %v726
  %v728 = vpop.f32.mrf.mxu0
  %729 = vmatprep.mubr.f32.mxu0 0.0
  %v730 = vand.u32 %v116, 4294901760
  %731 = vmatmul.mubr.f32.gmra.mxu0 %v730
  %v732 = vpop.f32.mrf.mxu0
  %v733 = vadd.f32 %v392, %v732
  %v734 = vpop.f32.mrf.mxu0
  %735 = vmatprep.mubr.f32.mxu0 0.0
  %v736 = vand.u32 %v119, 4294901760
  %737 = vmatmul.mubr.f32.gmra.mxu0 %v736
  %v738 = vpop.f32.mrf.mxu0
  %v739 = vadd.f32 %v402, %v738
  %v740 = vpop.f32.mrf.mxu0
  %741 = vmatprep.mubr.f32.mxu0 0.0
  %v742 = vand.u32 %v122, 4294901760
  %743 = vmatmul.mubr.f32.gmra.mxu0 %v742
  %v744 = vpop.f32.mrf.mxu0
  %v745 = vadd.f32 %v412, %v744
  %v746 = vpop.f32.mrf.mxu0
  %747 = vmatprep.mubr.f32.mxu0 0.0
  %v748 = vand.u32 %v125, 4294901760
  %749 = vmatmul.mubr.f32.gmra.mxu0 %v748
  %v750 = vpop.f32.mrf.mxu0
  %v751 = vadd.f32 %v422, %v750
  %v752 = vpop.f32.mrf.mxu0
  %753 = vmatprep.mubr.f32.mxu0 0.0
  %v754 = vand.u32 %v128, 4294901760
  %755 = vmatmul.mubr.f32.gmra.mxu0 %v754
  %v756 = vpop.f32.mrf.mxu0
  %v757 = vadd.f32 %v432, %v756
  %v758 = vpop.f32.mrf.mxu0
  %759 = vmatprep.mubr.f32.mxu0 0.0
  %v760 = vand.u32 %v131, 4294901760
  %761 = vmatmul.mubr.f32.gmra.mxu0 %v760
  %v762 = vpop.f32.mrf.mxu0
  %v763 = vadd.f32 %v442, %v762
  %v764 = vpop.f32.mrf.mxu0
  %765 = vmatprep.mubr.f32.mxu0 0.0
  %v766 = vand.u32 %v134, 4294901760
  %767 = vmatmul.mubr.f32.gmra.mxu0 %v766
  %v768 = vpop.f32.mrf.mxu0
  %v769 = vadd.f32 %v452, %v768
  %v770 = vpop.f32.mrf.mxu0
  %771 = vmatprep.mubr.f32.mxu0 0.0
  %v772 = vand.u32 %v137, 4294901760
  %773 = vmatmul.mubr.f32.gmra.mxu0 %v772
  %v774 = vpop.f32.mrf.mxu0
  %v775 = vadd.f32 %v462, %v774
  %v776 = vpop.f32.mrf.mxu0
  %777 = vmatprep.mubr.f32.mxu0 0.0
  %v778 = vand.u32 %v140, 4294901760
  %779 = vmatmul.mubr.f32.gmra.mxu0 %v778
  %v780 = vpop.f32.mrf.mxu0
  %v781 = vadd.f32 %v472, %v780
  %v782 = vpop.f32.mrf.mxu0
  %783 = vmatprep.mubr.f32.mxu0 0.0
  %v784 = vand.u32 %v143, 4294901760
  %785 = vmatmul.mubr.f32.gmra.mxu0 %v784
  %v786 = vpop.f32.mrf.mxu0
  %v787 = vadd.f32 %v482, %v786
  %v788 = vpop.f32.mrf.mxu0
  %789 = vmatprep.mubr.f32.mxu0 0.0
  %v790 = vand.u32 %v146, 4294901760
  %791 = vmatmul.mubr.f32.gmra.mxu0 %v790
  %v792 = vpop.f32.mrf.mxu0
  %v793 = vadd.f32 %v492, %v792
  %v794 = vpop.f32.mrf.mxu0
  %795 = vmatprep.mubr.f32.mxu0 0.0
  %v796 = vand.u32 %v149, 4294901760
  %797 = vmatmul.mubr.f32.gmra.mxu0 %v796
  %v798 = vpop.f32.mrf.mxu0
  %v799 = vadd.f32 %v502, %v798
  %v800 = vpop.f32.mrf.mxu0
  %801 = vmatprep.mubr.f32.mxu0 0.0
  %v802 = vand.u32 %v152, 4294901760
  %803 = vmatmul.mubr.f32.gmra.mxu0 %v802
  %v804 = vpop.f32.mrf.mxu0
  %v805 = vadd.f32 %v512, %v804
  %v806 = vpop.f32.mrf.mxu0
  %807 = vmatprep.mubr.f32.mxu0 0.0
  %v808 = vand.u32 %v155, 4294901760
  %809 = vmatmul.mubr.f32.gmra.mxu0 %v808
  %v810 = vpop.f32.mrf.mxu0
  %v811 = vadd.f32 %v522, %v810
  %v812 = vpop.f32.mrf.mxu0
  %813 = vmatprep.mubr.f32.mxu0 0.0
  %v814 = vand.u32 %v158, 4294901760
  %815 = vmatmul.mubr.f32.gmra.mxu0 %v814
  %v816 = vpop.f32.mrf.mxu0
  %v817 = vadd.f32 %v532, %v816
  %v818 = vpop.f32.mrf.mxu0
  %819 = vmatprep.mubr.f32.mxu0 0.0
  %v820 = vand.u32 %v161, 4294901760
  %821 = vmatmul.mubr.f32.gmra.mxu0 %v820
  %v822 = vpop.f32.mrf.mxu0
  %v823 = vadd.f32 %v542, %v822
  %v824 = vpop.f32.mrf.mxu0
  %825 = vmatprep.mubr.f32.mxu0 0.0
  %v826 = vand.u32 %v164, 4294901760
  %827 = vmatmul.mubr.f32.gmra.mxu0 %v826
  %v828 = vpop.f32.mrf.mxu0
  %v829 = vadd.f32 %v552, %v828
  %v830 = vpop.f32.mrf.mxu0
  %831 = vdwg.mxu0
  %832 = vmatprep.subr.mxu0 0.0
  %833 = vmatpush1.msra.mxu0 0.0
  %834 = vmatprep.subr.mxu0 0.0
  %835 = vmatpush1.msra.mxu0 0.0
  %836 = vmatprep.subr.mxu0 0.0
  %837 = vmatpush1.msra.mxu0 0.0
  %838 = vmatprep.subr.mxu0 0.0
  %839 = vmatpush1.msra.mxu0 0.0
  %840 = vmatprep.subr.mxu0 0.0
  %841 = vmatpush1.msra.mxu0 0.0
  %842 = vmatprep.subr.mxu0 0.0
  %843 = vmatpush1.msra.mxu0 0.0
  %844 = vmatprep.subr.mxu0 0.0
  %845 = vmatpush1.msra.mxu0 0.0
  %846 = vmatprep.subr.mxu0 0.0
  %847 = vmatpush1.msra.mxu0 0.0
  %848 = vmatprep.subr.mxu0 0.0
  %849 = vmatpush1.msra.mxu0 0.0
  %850 = vmatprep.subr.mxu0 0.0
  %851 = vmatpush1.msra.mxu0 0.0
  %852 = vmatprep.subr.mxu0 0.0
  %853 = vmatpush1.msra.mxu0 0.0
  %854 = vmatprep.subr.mxu0 0.0
  %855 = vmatpush1.msra.mxu0 0.0
  %856 = vmatprep.subr.mxu0 0.0
  %v857 = vand.u32 %v61, 4294901760
  %v858 = vsub.f32 %v61, %v857
  %859 = vmatpush1.msra.mxu0 %v858
  %860 = vmatprep.subr.mxu0 0.0
  %v861 = vand.u32 %v60, 4294901760
  %v862 = vsub.f32 %v60, %v861
  %863 = vmatpush1.msra.mxu0 %v862
  %864 = vmatprep.subr.mxu0 0.0
  %v865 = vand.u32 %v59, 4294901760
  %v866 = vsub.f32 %v59, %v865
  %867 = vmatpush1.msra.mxu0 %v866
  %868 = vmatprep.subr.mxu0 0.0
  %v869 = vand.u32 %v58, 4294901760
  %v870 = vsub.f32 %v58, %v869
  %871 = vmatpush1.msra.mxu0 %v870
  %872 = vmatprep.subr.mxu0 0.0
  %873 = vmatpush2.msra.mxu0 0.0
  %874 = vmatprep.subr.mxu0 0.0
  %875 = vmatpush2.msra.mxu0 0.0
  %876 = vmatprep.subr.mxu0 0.0
  %877 = vmatpush2.msra.mxu0 0.0
  %878 = vmatprep.subr.mxu0 0.0
  %879 = vmatpush2.msra.mxu0 0.0
  %880 = vmatprep.subr.mxu0 0.0
  %881 = vmatpush2.msra.mxu0 0.0
  %882 = vmatprep.subr.mxu0 0.0
  %883 = vmatpush2.msra.mxu0 0.0
  %884 = vmatprep.subr.mxu0 0.0
  %885 = vmatpush2.msra.mxu0 0.0
  %886 = vmatprep.subr.mxu0 0.0
  %887 = vmatpush2.msra.mxu0 0.0
  %888 = vmatprep.subr.mxu0 0.0
  %889 = vmatpush2.msra.mxu0 0.0
  %890 = vmatprep.subr.mxu0 0.0
  %891 = vmatpush2.msra.mxu0 0.0
  %892 = vmatprep.subr.mxu0 0.0
  %893 = vmatpush2.msra.mxu0 0.0
  %894 = vmatprep.subr.mxu0 0.0
  %895 = vmatpush2.msra.mxu0 0.0
  %896 = vmatprep.subr.mxu0 0.0
  %897 = vmatpush2.msra.mxu0 0.0
  %898 = vmatprep.subr.mxu0 0.0
  %899 = vmatpush2.msra.mxu0 0.0
  %900 = vmatprep.subr.mxu0 0.0
  %901 = vmatpush2.msra.mxu0 0.0
  %902 = vmatprep.subr.mxu0 0.0
  %903 = vmatpush2.msra.mxu0 0.0
  %904 = vmatprep.mubr.f32.mxu0 0.0
  %v905 = vand.u32 %v71, 4294901760
  %v906 = vsub.f32 %v71, %v905
  %907 = vmatmul.mubr.f32.gmra.mxu0 %v906
  %v908 = vpop.f32.mrf.mxu0
  %v909 = vadd.f32 %v643, %v908
  %v910 = vpop.f32.mrf.mxu0
  %911 = vmatprep.mubr.f32.mxu0 0.0
  %v912 = vand.u32 %v74, 4294901760
  %v913 = vsub.f32 %v74, %v912
  %914 = vmatmul.mubr.f32.gmra.mxu0 %v913
  %v915 = vpop.f32.mrf.mxu0
  %v916 = vadd.f32 %v649, %v915
  %v917 = vpop.f32.mrf.mxu0
  %918 = vmatprep.mubr.f32.mxu0 0.0
  %v919 = vand.u32 %v77, 4294901760
  %v920 = vsub.f32 %v77, %v919
  %921 = vmatmul.mubr.f32.gmra.mxu0 %v920
  %v922 = vpop.f32.mrf.mxu0
  %v923 = vadd.f32 %v655, %v922
  %v924 = vpop.f32.mrf.mxu0
  %925 = vmatprep.mubr.f32.mxu0 0.0
  %v926 = vand.u32 %v80, 4294901760
  %v927 = vsub.f32 %v80, %v926
  %928 = vmatmul.mubr.f32.gmra.mxu0 %v927
  %v929 = vpop.f32.mrf.mxu0
  %v930 = vadd.f32 %v661, %v929
  %v931 = vpop.f32.mrf.mxu0
  %932 = vmatprep.mubr.f32.mxu0 0.0
  %v933 = vand.u32 %v83, 4294901760
  %v934 = vsub.f32 %v83, %v933
  %935 = vmatmul.mubr.f32.gmra.mxu0 %v934
  %v936 = vpop.f32.mrf.mxu0
  %v937 = vadd.f32 %v667, %v936
  %v938 = vpop.f32.mrf.mxu0
  %939 = vmatprep.mubr.f32.mxu0 0.0
  %v940 = vand.u32 %v86, 4294901760
  %v941 = vsub.f32 %v86, %v940
  %942 = vmatmul.mubr.f32.gmra.mxu0 %v941
  %v943 = vpop.f32.mrf.mxu0
  %v944 = vadd.f32 %v673, %v943
  %v945 = vpop.f32.mrf.mxu0
  %946 = vmatprep.mubr.f32.mxu0 0.0
  %v947 = vand.u32 %v89, 4294901760
  %v948 = vsub.f32 %v89, %v947
  %949 = vmatmul.mubr.f32.gmra.mxu0 %v948
  %v950 = vpop.f32.mrf.mxu0
  %v951 = vadd.f32 %v679, %v950
  %v952 = vpop.f32.mrf.mxu0
  %953 = vmatprep.mubr.f32.mxu0 0.0
  %v954 = vand.u32 %v92, 4294901760
  %v955 = vsub.f32 %v92, %v954
  %956 = vmatmul.mubr.f32.gmra.mxu0 %v955
  %v957 = vpop.f32.mrf.mxu0
  %v958 = vadd.f32 %v685, %v957
  %v959 = vpop.f32.mrf.mxu0
  %960 = vmatprep.mubr.f32.mxu0 0.0
  %v961 = vand.u32 %v95, 4294901760
  %v962 = vsub.f32 %v95, %v961
  %963 = vmatmul.mubr.f32.gmra.mxu0 %v962
  %v964 = vpop.f32.mrf.mxu0
  %v965 = vadd.f32 %v691, %v964
  %v966 = vpop.f32.mrf.mxu0
  %967 = vmatprep.mubr.f32.mxu0 0.0
  %v968 = vand.u32 %v98, 4294901760
  %v969 = vsub.f32 %v98, %v968
  %970 = vmatmul.mubr.f32.gmra.mxu0 %v969
  %v971 = vpop.f32.mrf.mxu0
  %v972 = vadd.f32 %v697, %v971
  %v973 = vpop.f32.mrf.mxu0
  %974 = vmatprep.mubr.f32.mxu0 0.0
  %v975 = vand.u32 %v101, 4294901760
  %v976 = vsub.f32 %v101, %v975
  %977 = vmatmul.mubr.f32.gmra.mxu0 %v976
  %v978 = vpop.f32.mrf.mxu0
  %v979 = vadd.f32 %v703, %v978
  %v980 = vpop.f32.mrf.mxu0
  %981 = vmatprep.mubr.f32.mxu0 0.0
  %v982 = vand.u32 %v104, 4294901760
  %v983 = vsub.f32 %v104, %v982
  %984 = vmatmul.mubr.f32.gmra.mxu0 %v983
  %v985 = vpop.f32.mrf.mxu0
  %v986 = vadd.f32 %v709, %v985
  %v987 = vpop.f32.mrf.mxu0
  %988 = vmatprep.mubr.f32.mxu0 0.0
  %v989 = vand.u32 %v107, 4294901760
  %v990 = vsub.f32 %v107, %v989
  %991 = vmatmul.mubr.f32.gmra.mxu0 %v990
  %v992 = vpop.f32.mrf.mxu0
  %v993 = vadd.f32 %v715, %v992
  %v994 = vpop.f32.mrf.mxu0
  %995 = vmatprep.mubr.f32.mxu0 0.0
  %v996 = vand.u32 %v110, 4294901760
  %v997 = vsub.f32 %v110, %v996
  %998 = vmatmul.mubr.f32.gmra.mxu0 %v997
  %v999 = vpop.f32.mrf.mxu0
  %v1000 = vadd.f32 %v721, %v999
  %v1001 = vpop.f32.mrf.mxu0
  %1002 = vmatprep.mubr.f32.mxu0 0.0
  %v1003 = vand.u32 %v113, 4294901760
  %v1004 = vsub.f32 %v113, %v1003
  %1005 = vmatmul.mubr.f32.gmra.mxu0 %v1004
  %v1006 = vpop.f32.mrf.mxu0
  %v1007 = vadd.f32 %v727, %v1006
  %v1008 = vpop.f32.mrf.mxu0
  %1009 = vmatprep.mubr.f32.mxu0 0.0
  %v1010 = vand.u32 %v116, 4294901760
  %v1011 = vsub.f32 %v116, %v1010
  %1012 = vmatmul.mubr.f32.gmra.mxu0 %v1011
  %v1013 = vpop.f32.mrf.mxu0
  %v1014 = vadd.f32 %v733, %v1013
  %v1015 = vpop.f32.mrf.mxu0
  %1016 = vmatprep.mubr.f32.mxu0 0.0
  %v1017 = vand.u32 %v119, 4294901760
  %v1018 = vsub.f32 %v119, %v1017
  %1019 = vmatmul.mubr.f32.gmra.mxu0 %v1018
  %v1020 = vpop.f32.mrf.mxu0
  %v1021 = vadd.f32 %v739, %v1020
  %v1022 = vpop.f32.mrf.mxu0
  %1023 = vmatprep.mubr.f32.mxu0 0.0
  %v1024 = vand.u32 %v122, 4294901760
  %v1025 = vsub.f32 %v122, %v1024
  %1026 = vmatmul.mubr.f32.gmra.mxu0 %v1025
  %v1027 = vpop.f32.mrf.mxu0
  %v1028 = vadd.f32 %v745, %v1027
  %v1029 = vpop.f32.mrf.mxu0
  %1030 = vmatprep.mubr.f32.mxu0 0.0
  %v1031 = vand.u32 %v125, 4294901760
  %v1032 = vsub.f32 %v125, %v1031
  %1033 = vmatmul.mubr.f32.gmra.mxu0 %v1032
  %v1034 = vpop.f32.mrf.mxu0
  %v1035 = vadd.f32 %v751, %v1034
  %v1036 = vpop.f32.mrf.mxu0
  %1037 = vmatprep.mubr.f32.mxu0 0.0
  %v1038 = vand.u32 %v128, 4294901760
  %v1039 = vsub.f32 %v128, %v1038
  %1040 = vmatmul.mubr.f32.gmra.mxu0 %v1039
  %v1041 = vpop.f32.mrf.mxu0
  %v1042 = vadd.f32 %v757, %v1041
  %v1043 = vpop.f32.mrf.mxu0
  %1044 = vmatprep.mubr.f32.mxu0 0.0
  %v1045 = vand.u32 %v131, 4294901760
  %v1046 = vsub.f32 %v131, %v1045
  %1047 = vmatmul.mubr.f32.gmra.mxu0 %v1046
  %v1048 = vpop.f32.mrf.mxu0
  %v1049 = vadd.f32 %v763, %v1048
  %v1050 = vpop.f32.mrf.mxu0
  %1051 = vmatprep.mubr.f32.mxu0 0.0
  %v1052 = vand.u32 %v134, 4294901760
  %v1053 = vsub.f32 %v134, %v1052
  %1054 = vmatmul.mubr.f32.gmra.mxu0 %v1053
  %v1055 = vpop.f32.mrf.mxu0
  %v1056 = vadd.f32 %v769, %v1055
  %v1057 = vpop.f32.mrf.mxu0
  %1058 = vmatprep.mubr.f32.mxu0 0.0
  %v1059 = vand.u32 %v137, 4294901760
  %v1060 = vsub.f32 %v137, %v1059
  %1061 = vmatmul.mubr.f32.gmra.mxu0 %v1060
  %v1062 = vpop.f32.mrf.mxu0
  %v1063 = vadd.f32 %v775, %v1062
  %v1064 = vpop.f32.mrf.mxu0
  %1065 = vmatprep.mubr.f32.mxu0 0.0
  %v1066 = vand.u32 %v140, 4294901760
  %v1067 = vsub.f32 %v140, %v1066
  %1068 = vmatmul.mubr.f32.gmra.mxu0 %v1067
  %v1069 = vpop.f32.mrf.mxu0
  %v1070 = vadd.f32 %v781, %v1069
  %v1071 = vpop.f32.mrf.mxu0
  %1072 = vmatprep.mubr.f32.mxu0 0.0
  %v1073 = vand.u32 %v143, 4294901760
  %v1074 = vsub.f32 %v143, %v1073
  %1075 = vmatmul.mubr.f32.gmra.mxu0 %v1074
  %v1076 = vpop.f32.mrf.mxu0
  %v1077 = vadd.f32 %v787, %v1076
  %v1078 = vpop.f32.mrf.mxu0
  %1079 = vmatprep.mubr.f32.mxu0 0.0
  %v1080 = vand.u32 %v146, 4294901760
  %v1081 = vsub.f32 %v146, %v1080
  %1082 = vmatmul.mubr.f32.gmra.mxu0 %v1081
  %v1083 = vpop.f32.mrf.mxu0
  %v1084 = vadd.f32 %v793, %v1083
  %v1085 = vpop.f32.mrf.mxu0
  %1086 = vmatprep.mubr.f32.mxu0 0.0
  %v1087 = vand.u32 %v149, 4294901760
  %v1088 = vsub.f32 %v149, %v1087
  %1089 = vmatmul.mubr.f32.gmra.mxu0 %v1088
  %v1090 = vpop.f32.mrf.mxu0
  %v1091 = vadd.f32 %v799, %v1090
  %v1092 = vpop.f32.mrf.mxu0
  %1093 = vmatprep.mubr.f32.mxu0 0.0
  %v1094 = vand.u32 %v152, 4294901760
  %v1095 = vsub.f32 %v152, %v1094
  %1096 = vmatmul.mubr.f32.gmra.mxu0 %v1095
  %v1097 = vpop.f32.mrf.mxu0
  %v1098 = vadd.f32 %v805, %v1097
  %v1099 = vpop.f32.mrf.mxu0
  %1100 = vmatprep.mubr.f32.mxu0 0.0
  %v1101 = vand.u32 %v155, 4294901760
  %v1102 = vsub.f32 %v155, %v1101
  %1103 = vmatmul.mubr.f32.gmra.mxu0 %v1102
  %v1104 = vpop.f32.mrf.mxu0
  %v1105 = vadd.f32 %v811, %v1104
  %v1106 = vpop.f32.mrf.mxu0
  %1107 = vmatprep.mubr.f32.mxu0 0.0
  %v1108 = vand.u32 %v158, 4294901760
  %v1109 = vsub.f32 %v158, %v1108
  %1110 = vmatmul.mubr.f32.gmra.mxu0 %v1109
  %v1111 = vpop.f32.mrf.mxu0
  %v1112 = vadd.f32 %v817, %v1111
  %v1113 = vpop.f32.mrf.mxu0
  %1114 = vmatprep.mubr.f32.mxu0 0.0
  %v1115 = vand.u32 %v161, 4294901760
  %v1116 = vsub.f32 %v161, %v1115
  %1117 = vmatmul.mubr.f32.gmra.mxu0 %v1116
  %v1118 = vpop.f32.mrf.mxu0
  %v1119 = vadd.f32 %v823, %v1118
  %v1120 = vpop.f32.mrf.mxu0
  %1121 = vmatprep.mubr.f32.mxu0 0.0
  %v1122 = vand.u32 %v164, 4294901760
  %v1123 = vsub.f32 %v164, %v1122
  %1124 = vmatmul.mubr.f32.gmra.mxu0 %v1123
  %v1125 = vpop.f32.mrf.mxu0
  %v1126 = vadd.f32 %v829, %v1125
  %v1127 = vpop.f32.mrf.mxu0
  %1128 = vdwg.mxu0
  %1129 = vmatprep.subr.mxu0 0.0
  %1130 = vmatpush1.msra.mxu0 0.0
  %1131 = vmatprep.subr.mxu0 0.0
  %1132 = vmatpush1.msra.mxu0 0.0
  %1133 = vmatprep.subr.mxu0 0.0
  %1134 = vmatpush1.msra.mxu0 0.0
  %1135 = vmatprep.subr.mxu0 0.0
  %1136 = vmatpush1.msra.mxu0 0.0
  %1137 = vmatprep.subr.mxu0 0.0
  %1138 = vmatpush1.msra.mxu0 0.0
  %1139 = vmatprep.subr.mxu0 0.0
  %1140 = vmatpush1.msra.mxu0 0.0
  %1141 = vmatprep.subr.mxu0 0.0
  %1142 = vmatpush1.msra.mxu0 0.0
  %1143 = vmatprep.subr.mxu0 0.0
  %1144 = vmatpush1.msra.mxu0 0.0
  %1145 = vmatprep.subr.mxu0 0.0
  %1146 = vmatpush1.msra.mxu0 0.0
  %1147 = vmatprep.subr.mxu0 0.0
  %1148 = vmatpush1.msra.mxu0 0.0
  %1149 = vmatprep.subr.mxu0 0.0
  %1150 = vmatpush1.msra.mxu0 0.0
  %1151 = vmatprep.subr.mxu0 0.0
  %1152 = vmatpush1.msra.mxu0 0.0
  %1153 = vmatprep.subr.mxu0 0.0
  %v1154 = vand.u32 %v61, 4294901760
  %1155 = vmatpush1.msra.mxu0 %v1154
  %1156 = vmatprep.subr.mxu0 0.0
  %v1157 = vand.u32 %v60, 4294901760
  %1158 = vmatpush1.msra.mxu0 %v1157
  %1159 = vmatprep.subr.mxu0 0.0
  %v1160 = vand.u32 %v59, 4294901760
  %1161 = vmatpush1.msra.mxu0 %v1160
  %1162 = vmatprep.subr.mxu0 0.0
  %v1163 = vand.u32 %v58, 4294901760
  %1164 = vmatpush1.msra.mxu0 %v1163
  %1165 = vmatprep.subr.mxu0 0.0
  %1166 = vmatpush2.msra.mxu0 0.0
  %1167 = vmatprep.subr.mxu0 0.0
  %1168 = vmatpush2.msra.mxu0 0.0
  %1169 = vmatprep.subr.mxu0 0.0
  %1170 = vmatpush2.msra.mxu0 0.0
  %1171 = vmatprep.subr.mxu0 0.0
  %1172 = vmatpush2.msra.mxu0 0.0
  %1173 = vmatprep.subr.mxu0 0.0
  %1174 = vmatpush2.msra.mxu0 0.0
  %1175 = vmatprep.subr.mxu0 0.0
  %1176 = vmatpush2.msra.mxu0 0.0
  %1177 = vmatprep.subr.mxu0 0.0
  %1178 = vmatpush2.msra.mxu0 0.0
  %1179 = vmatprep.subr.mxu0 0.0
  %1180 = vmatpush2.msra.mxu0 0.0
  %1181 = vmatprep.subr.mxu0 0.0
  %1182 = vmatpush2.msra.mxu0 0.0
  %1183 = vmatprep.subr.mxu0 0.0
  %1184 = vmatpush2.msra.mxu0 0.0
  %1185 = vmatprep.subr.mxu0 0.0
  %1186 = vmatpush2.msra.mxu0 0.0
  %1187 = vmatprep.subr.mxu0 0.0
  %1188 = vmatpush2.msra.mxu0 0.0
  %1189 = vmatprep.subr.mxu0 0.0
  %1190 = vmatpush2.msra.mxu0 0.0
  %1191 = vmatprep.subr.mxu0 0.0
  %1192 = vmatpush2.msra.mxu0 0.0
  %1193 = vmatprep.subr.mxu0 0.0
  %1194 = vmatpush2.msra.mxu0 0.0
  %1195 = vmatprep.subr.mxu0 0.0
  %1196 = vmatpush2.msra.mxu0 0.0
  %1197 = vmatprep.mubr.f32.mxu0 0.0
  %v1198 = vand.u32 %v71, 4294901760
  %v1199 = vsub.f32 %v71, %v1198
  %v1200 = vand.u32 %v1199, 4294901760
  %1201 = vmatmul.mubr.f32.gmra.mxu0 %v1200
  %v1202 = vpop.f32.mrf.mxu0
  %v1203 = vadd.f32 %v909, %v1202
  %v1204 = vpop.f32.mrf.mxu0
  %1205 = vmatprep.mubr.f32.mxu0 0.0
  %v1206 = vand.u32 %v74, 4294901760
  %v1207 = vsub.f32 %v74, %v1206
  %v1208 = vand.u32 %v1207, 4294901760
  %1209 = vmatmul.mubr.f32.gmra.mxu0 %v1208
  %v1210 = vpop.f32.mrf.mxu0
  %v1211 = vadd.f32 %v916, %v1210
  %v1212 = vpop.f32.mrf.mxu0
  %1213 = vmatprep.mubr.f32.mxu0 0.0
  %v1214 = vand.u32 %v77, 4294901760
  %v1215 = vsub.f32 %v77, %v1214
  %v1216 = vand.u32 %v1215, 4294901760
  %1217 = vmatmul.mubr.f32.gmra.mxu0 %v1216
  %v1218 = vpop.f32.mrf.mxu0
  %v1219 = vadd.f32 %v923, %v1218
  %v1220 = vpop.f32.mrf.mxu0
  %1221 = vmatprep.mubr.f32.mxu0 0.0
  %v1222 = vand.u32 %v80, 4294901760
  %v1223 = vsub.f32 %v80, %v1222
  %v1224 = vand.u32 %v1223, 4294901760
  %1225 = vmatmul.mubr.f32.gmra.mxu0 %v1224
  %v1226 = vpop.f32.mrf.mxu0
  %v1227 = vadd.f32 %v930, %v1226
  %v1228 = vpop.f32.mrf.mxu0
  %1229 = vmatprep.mubr.f32.mxu0 0.0
  %v1230 = vand.u32 %v83, 4294901760
  %v1231 = vsub.f32 %v83, %v1230
  %v1232 = vand.u32 %v1231, 4294901760
  %1233 = vmatmul.mubr.f32.gmra.mxu0 %v1232
  %v1234 = vpop.f32.mrf.mxu0
  %v1235 = vadd.f32 %v937, %v1234
  %v1236 = vpop.f32.mrf.mxu0
  %1237 = vmatprep.mubr.f32.mxu0 0.0
  %v1238 = vand.u32 %v86, 4294901760
  %v1239 = vsub.f32 %v86, %v1238
  %v1240 = vand.u32 %v1239, 4294901760
  %1241 = vmatmul.mubr.f32.gmra.mxu0 %v1240
  %v1242 = vpop.f32.mrf.mxu0
  %v1243 = vadd.f32 %v944, %v1242
  %v1244 = vpop.f32.mrf.mxu0
  %1245 = vmatprep.mubr.f32.mxu0 0.0
  %v1246 = vand.u32 %v89, 4294901760
  %v1247 = vsub.f32 %v89, %v1246
  %v1248 = vand.u32 %v1247, 4294901760
  %1249 = vmatmul.mubr.f32.gmra.mxu0 %v1248
  %v1250 = vpop.f32.mrf.mxu0
  %v1251 = vadd.f32 %v951, %v1250
  %v1252 = vpop.f32.mrf.mxu0
  %1253 = vmatprep.mubr.f32.mxu0 0.0
  %v1254 = vand.u32 %v92, 4294901760
  %v1255 = vsub.f32 %v92, %v1254
  %v1256 = vand.u32 %v1255, 4294901760
  %1257 = vmatmul.mubr.f32.gmra.mxu0 %v1256
  %v1258 = vpop.f32.mrf.mxu0
  %v1259 = vadd.f32 %v958, %v1258
  %v1260 = vpop.f32.mrf.mxu0
  %1261 = vmatprep.mubr.f32.mxu0 0.0
  %v1262 = vand.u32 %v95, 4294901760
  %v1263 = vsub.f32 %v95, %v1262
  %v1264 = vand.u32 %v1263, 4294901760
  %1265 = vmatmul.mubr.f32.gmra.mxu0 %v1264
  %v1266 = vpop.f32.mrf.mxu0
  %v1267 = vadd.f32 %v965, %v1266
  %v1268 = vpop.f32.mrf.mxu0
  %1269 = vmatprep.mubr.f32.mxu0 0.0
  %v1270 = vand.u32 %v98, 4294901760
  %v1271 = vsub.f32 %v98, %v1270
  %v1272 = vand.u32 %v1271, 4294901760
  %1273 = vmatmul.mubr.f32.gmra.mxu0 %v1272
  %v1274 = vpop.f32.mrf.mxu0
  %v1275 = vadd.f32 %v972, %v1274
  %v1276 = vpop.f32.mrf.mxu0
  %1277 = vmatprep.mubr.f32.mxu0 0.0
  %v1278 = vand.u32 %v101, 4294901760
  %v1279 = vsub.f32 %v101, %v1278
  %v1280 = vand.u32 %v1279, 4294901760
  %1281 = vmatmul.mubr.f32.gmra.mxu0 %v1280
  %v1282 = vpop.f32.mrf.mxu0
  %v1283 = vadd.f32 %v979, %v1282
  %v1284 = vpop.f32.mrf.mxu0
  %1285 = vmatprep.mubr.f32.mxu0 0.0
  %v1286 = vand.u32 %v104, 4294901760
  %v1287 = vsub.f32 %v104, %v1286
  %v1288 = vand.u32 %v1287, 4294901760
  %1289 = vmatmul.mubr.f32.gmra.mxu0 %v1288
  %v1290 = vpop.f32.mrf.mxu0
  %v1291 = vadd.f32 %v986, %v1290
  %v1292 = vpop.f32.mrf.mxu0
  %1293 = vmatprep.mubr.f32.mxu0 0.0
  %v1294 = vand.u32 %v107, 4294901760
  %v1295 = vsub.f32 %v107, %v1294
  %v1296 = vand.u32 %v1295, 4294901760
  %1297 = vmatmul.mubr.f32.gmra.mxu0 %v1296
  %v1298 = vpop.f32.mrf.mxu0
  %v1299 = vadd.f32 %v993, %v1298
  %v1300 = vpop.f32.mrf.mxu0
  %1301 = vmatprep.mubr.f32.mxu0 0.0
  %v1302 = vand.u32 %v110, 4294901760
  %v1303 = vsub.f32 %v110, %v1302
  %v1304 = vand.u32 %v1303, 4294901760
  %1305 = vmatmul.mubr.f32.gmra.mxu0 %v1304
  %v1306 = vpop.f32.mrf.mxu0
  %v1307 = vadd.f32 %v1000, %v1306
  %v1308 = vpop.f32.mrf.mxu0
  %1309 = vmatprep.mubr.f32.mxu0 0.0
  %v1310 = vand.u32 %v113, 4294901760
  %v1311 = vsub.f32 %v113, %v1310
  %v1312 = vand.u32 %v1311, 4294901760
  %1313 = vmatmul.mubr.f32.gmra.mxu0 %v1312
  %v1314 = vpop.f32.mrf.mxu0
  %v1315 = vadd.f32 %v1007, %v1314
  %v1316 = vpop.f32.mrf.mxu0
  %1317 = vmatprep.mubr.f32.mxu0 0.0
  %v1318 = vand.u32 %v116, 4294901760
  %v1319 = vsub.f32 %v116, %v1318
  %v1320 = vand.u32 %v1319, 4294901760
  %1321 = vmatmul.mubr.f32.gmra.mxu0 %v1320
  %v1322 = vpop.f32.mrf.mxu0
  %v1323 = vadd.f32 %v1014, %v1322
  %v1324 = vpop.f32.mrf.mxu0
  %1325 = vmatprep.mubr.f32.mxu0 0.0
  %v1326 = vand.u32 %v119, 4294901760
  %v1327 = vsub.f32 %v119, %v1326
  %v1328 = vand.u32 %v1327, 4294901760
  %1329 = vmatmul.mubr.f32.gmra.mxu0 %v1328
  %v1330 = vpop.f32.mrf.mxu0
  %v1331 = vadd.f32 %v1021, %v1330
  %v1332 = vpop.f32.mrf.mxu0
  %1333 = vmatprep.mubr.f32.mxu0 0.0
  %v1334 = vand.u32 %v122, 4294901760
  %v1335 = vsub.f32 %v122, %v1334
  %v1336 = vand.u32 %v1335, 4294901760
  %1337 = vmatmul.mubr.f32.gmra.mxu0 %v1336
  %v1338 = vpop.f32.mrf.mxu0
  %v1339 = vadd.f32 %v1028, %v1338
  %v1340 = vpop.f32.mrf.mxu0
  %1341 = vmatprep.mubr.f32.mxu0 0.0
  %v1342 = vand.u32 %v125, 4294901760
  %v1343 = vsub.f32 %v125, %v1342
  %v1344 = vand.u32 %v1343, 4294901760
  %1345 = vmatmul.mubr.f32.gmra.mxu0 %v1344
  %v1346 = vpop.f32.mrf.mxu0
  %v1347 = vadd.f32 %v1035, %v1346
  %v1348 = vpop.f32.mrf.mxu0
  %1349 = vmatprep.mubr.f32.mxu0 0.0
  %v1350 = vand.u32 %v128, 4294901760
  %v1351 = vsub.f32 %v128, %v1350
  %v1352 = vand.u32 %v1351, 4294901760
  %1353 = vmatmul.mubr.f32.gmra.mxu0 %v1352
  %v1354 = vpop.f32.mrf.mxu0
  %v1355 = vadd.f32 %v1042, %v1354
  %v1356 = vpop.f32.mrf.mxu0
  %1357 = vmatprep.mubr.f32.mxu0 0.0
  %v1358 = vand.u32 %v131, 4294901760
  %v1359 = vsub.f32 %v131, %v1358
  %v1360 = vand.u32 %v1359, 4294901760
  %1361 = vmatmul.mubr.f32.gmra.mxu0 %v1360
  %v1362 = vpop.f32.mrf.mxu0
  %v1363 = vadd.f32 %v1049, %v1362
  %v1364 = vpop.f32.mrf.mxu0
  %1365 = vmatprep.mubr.f32.mxu0 0.0
  %v1366 = vand.u32 %v134, 4294901760
  %v1367 = vsub.f32 %v134, %v1366
  %v1368 = vand.u32 %v1367, 4294901760
  %1369 = vmatmul.mubr.f32.gmra.mxu0 %v1368
  %v1370 = vpop.f32.mrf.mxu0
  %v1371 = vadd.f32 %v1056, %v1370
  %v1372 = vpop.f32.mrf.mxu0
  %1373 = vmatprep.mubr.f32.mxu0 0.0
  %v1374 = vand.u32 %v137, 4294901760
  %v1375 = vsub.f32 %v137, %v1374
  %v1376 = vand.u32 %v1375, 4294901760
  %1377 = vmatmul.mubr.f32.gmra.mxu0 %v1376
  %v1378 = vpop.f32.mrf.mxu0
  %v1379 = vadd.f32 %v1063, %v1378
  %v1380 = vpop.f32.mrf.mxu0
  %1381 = vmatprep.mubr.f32.mxu0 0.0
  %v1382 = vand.u32 %v140, 4294901760
  %v1383 = vsub.f32 %v140, %v1382
  %v1384 = vand.u32 %v1383, 4294901760
  %1385 = vmatmul.mubr.f32.gmra.mxu0 %v1384
  %v1386 = vpop.f32.mrf.mxu0
  %v1387 = vadd.f32 %v1070, %v1386
  %v1388 = vpop.f32.mrf.mxu0
  %1389 = vmatprep.mubr.f32.mxu0 0.0
  %v1390 = vand.u32 %v143, 4294901760
  %v1391 = vsub.f32 %v143, %v1390
  %v1392 = vand.u32 %v1391, 4294901760
  %1393 = vmatmul.mubr.f32.gmra.mxu0 %v1392
  %v1394 = vpop.f32.mrf.mxu0
  %v1395 = vadd.f32 %v1077, %v1394
  %v1396 = vpop.f32.mrf.mxu0
  %1397 = vmatprep.mubr.f32.mxu0 0.0
  %v1398 = vand.u32 %v146, 4294901760
  %v1399 = vsub.f32 %v146, %v1398
  %v1400 = vand.u32 %v1399, 4294901760
  %1401 = vmatmul.mubr.f32.gmra.mxu0 %v1400
  %v1402 = vpop.f32.mrf.mxu0
  %v1403 = vadd.f32 %v1084, %v1402
  %v1404 = vpop.f32.mrf.mxu0
  %1405 = vmatprep.mubr.f32.mxu0 0.0
  %v1406 = vand.u32 %v149, 4294901760
  %v1407 = vsub.f32 %v149, %v1406
  %v1408 = vand.u32 %v1407, 4294901760
  %1409 = vmatmul.mubr.f32.gmra.mxu0 %v1408
  %v1410 = vpop.f32.mrf.mxu0
  %v1411 = vadd.f32 %v1091, %v1410
  %v1412 = vpop.f32.mrf.mxu0
  %1413 = vmatprep.mubr.f32.mxu0 0.0
  %v1414 = vand.u32 %v152, 4294901760
  %v1415 = vsub.f32 %v152, %v1414
  %v1416 = vand.u32 %v1415, 4294901760
  %1417 = vmatmul.mubr.f32.gmra.mxu0 %v1416
  %v1418 = vpop.f32.mrf.mxu0
  %v1419 = vadd.f32 %v1098, %v1418
  %v1420 = vpop.f32.mrf.mxu0
  %1421 = vmatprep.mubr.f32.mxu0 0.0
  %v1422 = vand.u32 %v155, 4294901760
  %v1423 = vsub.f32 %v155, %v1422
  %v1424 = vand.u32 %v1423, 4294901760
  %1425 = vmatmul.mubr.f32.gmra.mxu0 %v1424
  %v1426 = vpop.f32.mrf.mxu0
  %v1427 = vadd.f32 %v1105, %v1426
  %v1428 = vpop.f32.mrf.mxu0
  %1429 = vmatprep.mubr.f32.mxu0 0.0
  %v1430 = vand.u32 %v158, 4294901760
  %v1431 = vsub.f32 %v158, %v1430
  %v1432 = vand.u32 %v1431, 4294901760
  %1433 = vmatmul.mubr.f32.gmra.mxu0 %v1432
  %v1434 = vpop.f32.mrf.mxu0
  %v1435 = vadd.f32 %v1112, %v1434
  %v1436 = vpop.f32.mrf.mxu0
  %1437 = vmatprep.mubr.f32.mxu0 0.0
  %v1438 = vand.u32 %v161, 4294901760
  %v1439 = vsub.f32 %v161, %v1438
  %v1440 = vand.u32 %v1439, 4294901760
  %1441 = vmatmul.mubr.f32.gmra.mxu0 %v1440
  %v1442 = vpop.f32.mrf.mxu0
  %v1443 = vadd.f32 %v1119, %v1442
  %v1444 = vpop.f32.mrf.mxu0
  %1445 = vmatprep.mubr.f32.mxu0 0.0
  %v1446 = vand.u32 %v164, 4294901760
  %v1447 = vsub.f32 %v164, %v1446
  %v1448 = vand.u32 %v1447, 4294901760
  %1449 = vmatmul.mubr.f32.gmra.mxu0 %v1448
  %v1450 = vpop.f32.mrf.mxu0
  %v1451 = vadd.f32 %v1126, %v1450
  %v1452 = vpop.f32.mrf.mxu0
  %1453 = vdwg.mxu0
  %1454 = vmatprep.subr.mxu0 0.0
  %1455 = vmatpush1.msra.mxu0 0.0
  %1456 = vmatprep.subr.mxu0 0.0
  %1457 = vmatpush1.msra.mxu0 0.0
  %1458 = vmatprep.subr.mxu0 0.0
  %1459 = vmatpush1.msra.mxu0 0.0
  %1460 = vmatprep.subr.mxu0 0.0
  %1461 = vmatpush1.msra.mxu0 0.0
  %1462 = vmatprep.subr.mxu0 0.0
  %1463 = vmatpush1.msra.mxu0 0.0
  %1464 = vmatprep.subr.mxu0 0.0
  %1465 = vmatpush1.msra.mxu0 0.0
  %1466 = vmatprep.subr.mxu0 0.0
  %1467 = vmatpush1.msra.mxu0 0.0
  %1468 = vmatprep.subr.mxu0 0.0
  %1469 = vmatpush1.msra.mxu0 0.0
  %1470 = vmatprep.subr.mxu0 0.0
  %1471 = vmatpush1.msra.mxu0 0.0
  %1472 = vmatprep.subr.mxu0 0.0
  %1473 = vmatpush1.msra.mxu0 0.0
  %1474 = vmatprep.subr.mxu0 0.0
  %1475 = vmatpush1.msra.mxu0 0.0
  %1476 = vmatprep.subr.mxu0 0.0
  %1477 = vmatpush1.msra.mxu0 0.0
  %1478 = vmatprep.subr.mxu0 0.0
  %v1479 = vand.u32 %v61, 4294901760
  %v1480 = vsub.f32 %v61, %v1479
  %v1481 = vand.u32 %v1480, 4294901760
  %1482 = vmatpush1.msra.mxu0 %v1481
  %1483 = vmatprep.subr.mxu0 0.0
  %v1484 = vand.u32 %v60, 4294901760
  %v1485 = vsub.f32 %v60, %v1484
  %v1486 = vand.u32 %v1485, 4294901760
  %1487 = vmatpush1.msra.mxu0 %v1486
  %1488 = vmatprep.subr.mxu0 0.0
  %v1489 = vand.u32 %v59, 4294901760
  %v1490 = vsub.f32 %v59, %v1489
  %v1491 = vand.u32 %v1490, 4294901760
  %1492 = vmatpush1.msra.mxu0 %v1491
  %1493 = vmatprep.subr.mxu0 0.0
  %v1494 = vand.u32 %v58, 4294901760
  %v1495 = vsub.f32 %v58, %v1494
  %v1496 = vand.u32 %v1495, 4294901760
  %1497 = vmatpush1.msra.mxu0 %v1496
  %1498 = vmatprep.subr.mxu0 0.0
  %1499 = vmatpush2.msra.mxu0 0.0
  %1500 = vmatprep.subr.mxu0 0.0
  %1501 = vmatpush2.msra.mxu0 0.0
  %1502 = vmatprep.subr.mxu0 0.0
  %1503 = vmatpush2.msra.mxu0 0.0
  %1504 = vmatprep.subr.mxu0 0.0
  %1505 = vmatpush2.msra.mxu0 0.0
  %1506 = vmatprep.subr.mxu0 0.0
  %1507 = vmatpush2.msra.mxu0 0.0
  %1508 = vmatprep.subr.mxu0 0.0
  %1509 = vmatpush2.msra.mxu0 0.0
  %1510 = vmatprep.subr.mxu0 0.0
  %1511 = vmatpush2.msra.mxu0 0.0
  %1512 = vmatprep.subr.mxu0 0.0
  %1513 = vmatpush2.msra.mxu0 0.0
  %1514 = vmatprep.subr.mxu0 0.0
  %1515 = vmatpush2.msra.mxu0 0.0
  %1516 = vmatprep.subr.mxu0 0.0
  %1517 = vmatpush2.msra.mxu0 0.0
  %1518 = vmatprep.subr.mxu0 0.0
  %1519 = vmatpush2.msra.mxu0 0.0
  %1520 = vmatprep.subr.mxu0 0.0
  %1521 = vmatpush2.msra.mxu0 0.0
  %1522 = vmatprep.subr.mxu0 0.0
  %1523 = vmatpush2.msra.mxu0 0.0
  %1524 = vmatprep.subr.mxu0 0.0
  %1525 = vmatpush2.msra.mxu0 0.0
  %1526 = vmatprep.subr.mxu0 0.0
  %1527 = vmatpush2.msra.mxu0 0.0
  %1528 = vmatprep.subr.mxu0 0.0
  %1529 = vmatpush2.msra.mxu0 0.0
  %1530 = vmatprep.mubr.f32.mxu0 0.0
  %v1531 = vand.u32 %v71, 4294901760
  %1532 = vmatmul.mubr.f32.gmra.mxu0 %v1531
  %v1533 = vpop.f32.mrf.mxu0
  %v1534 = vadd.f32 %v1203, %v1533
  %v1535 = vpop.f32.mrf.mxu0
  %1536 = vmatprep.mubr.f32.mxu0 0.0
  %v1537 = vand.u32 %v74, 4294901760
  %1538 = vmatmul.mubr.f32.gmra.mxu0 %v1537
  %v1539 = vpop.f32.mrf.mxu0
  %v1540 = vadd.f32 %v1211, %v1539
  %v1541 = vpop.f32.mrf.mxu0
  %1542 = vmatprep.mubr.f32.mxu0 0.0
  %v1543 = vand.u32 %v77, 4294901760
  %1544 = vmatmul.mubr.f32.gmra.mxu0 %v1543
  %v1545 = vpop.f32.mrf.mxu0
  %v1546 = vadd.f32 %v1219, %v1545
  %v1547 = vpop.f32.mrf.mxu0
  %1548 = vmatprep.mubr.f32.mxu0 0.0
  %v1549 = vand.u32 %v80, 4294901760
  %1550 = vmatmul.mubr.f32.gmra.mxu0 %v1549
  %v1551 = vpop.f32.mrf.mxu0
  %v1552 = vadd.f32 %v1227, %v1551
  %v1553 = vpop.f32.mrf.mxu0
  %1554 = vmatprep.mubr.f32.mxu0 0.0
  %v1555 = vand.u32 %v83, 4294901760
  %1556 = vmatmul.mubr.f32.gmra.mxu0 %v1555
  %v1557 = vpop.f32.mrf.mxu0
  %v1558 = vadd.f32 %v1235, %v1557
  %v1559 = vpop.f32.mrf.mxu0
  %1560 = vmatprep.mubr.f32.mxu0 0.0
  %v1561 = vand.u32 %v86, 4294901760
  %1562 = vmatmul.mubr.f32.gmra.mxu0 %v1561
  %v1563 = vpop.f32.mrf.mxu0
  %v1564 = vadd.f32 %v1243, %v1563
  %v1565 = vpop.f32.mrf.mxu0
  %1566 = vmatprep.mubr.f32.mxu0 0.0
  %v1567 = vand.u32 %v89, 4294901760
  %1568 = vmatmul.mubr.f32.gmra.mxu0 %v1567
  %v1569 = vpop.f32.mrf.mxu0
  %v1570 = vadd.f32 %v1251, %v1569
  %v1571 = vpop.f32.mrf.mxu0
  %1572 = vmatprep.mubr.f32.mxu0 0.0
  %v1573 = vand.u32 %v92, 4294901760
  %1574 = vmatmul.mubr.f32.gmra.mxu0 %v1573
  %v1575 = vpop.f32.mrf.mxu0
  %v1576 = vadd.f32 %v1259, %v1575
  %v1577 = vpop.f32.mrf.mxu0
  %1578 = vmatprep.mubr.f32.mxu0 0.0
  %v1579 = vand.u32 %v95, 4294901760
  %1580 = vmatmul.mubr.f32.gmra.mxu0 %v1579
  %v1581 = vpop.f32.mrf.mxu0
  %v1582 = vadd.f32 %v1267, %v1581
  %v1583 = vpop.f32.mrf.mxu0
  %1584 = vmatprep.mubr.f32.mxu0 0.0
  %v1585 = vand.u32 %v98, 4294901760
  %1586 = vmatmul.mubr.f32.gmra.mxu0 %v1585
  %v1587 = vpop.f32.mrf.mxu0
  %v1588 = vadd.f32 %v1275, %v1587
  %v1589 = vpop.f32.mrf.mxu0
  %1590 = vmatprep.mubr.f32.mxu0 0.0
  %v1591 = vand.u32 %v101, 4294901760
  %1592 = vmatmul.mubr.f32.gmra.mxu0 %v1591
  %v1593 = vpop.f32.mrf.mxu0
  %v1594 = vadd.f32 %v1283, %v1593
  %v1595 = vpop.f32.mrf.mxu0
  %1596 = vmatprep.mubr.f32.mxu0 0.0
  %v1597 = vand.u32 %v104, 4294901760
  %1598 = vmatmul.mubr.f32.gmra.mxu0 %v1597
  %v1599 = vpop.f32.mrf.mxu0
  %v1600 = vadd.f32 %v1291, %v1599
  %v1601 = vpop.f32.mrf.mxu0
  %1602 = vmatprep.mubr.f32.mxu0 0.0
  %v1603 = vand.u32 %v107, 4294901760
  %1604 = vmatmul.mubr.f32.gmra.mxu0 %v1603
  %v1605 = vpop.f32.mrf.mxu0
  %v1606 = vadd.f32 %v1299, %v1605
  %v1607 = vpop.f32.mrf.mxu0
  %1608 = vmatprep.mubr.f32.mxu0 0.0
  %v1609 = vand.u32 %v110, 4294901760
  %1610 = vmatmul.mubr.f32.gmra.mxu0 %v1609
  %v1611 = vpop.f32.mrf.mxu0
  %v1612 = vadd.f32 %v1307, %v1611
  %v1613 = vpop.f32.mrf.mxu0
  %1614 = vmatprep.mubr.f32.mxu0 0.0
  %v1615 = vand.u32 %v113, 4294901760
  %1616 = vmatmul.mubr.f32.gmra.mxu0 %v1615
  %v1617 = vpop.f32.mrf.mxu0
  %v1618 = vadd.f32 %v1315, %v1617
  %v1619 = vpop.f32.mrf.mxu0
  %1620 = vmatprep.mubr.f32.mxu0 0.0
  %v1621 = vand.u32 %v116, 4294901760
  %1622 = vmatmul.mubr.f32.gmra.mxu0 %v1621
  %v1623 = vpop.f32.mrf.mxu0
  %v1624 = vadd.f32 %v1323, %v1623
  %v1625 = vpop.f32.mrf.mxu0
  %1626 = vmatprep.mubr.f32.mxu0 0.0
  %v1627 = vand.u32 %v119, 4294901760
  %1628 = vmatmul.mubr.f32.gmra.mxu0 %v1627
  %v1629 = vpop.f32.mrf.mxu0
  %v1630 = vadd.f32 %v1331, %v1629
  %v1631 = vpop.f32.mrf.mxu0
  %1632 = vmatprep.mubr.f32.mxu0 0.0
  %v1633 = vand.u32 %v122, 4294901760
  %1634 = vmatmul.mubr.f32.gmra.mxu0 %v1633
  %v1635 = vpop.f32.mrf.mxu0
  %v1636 = vadd.f32 %v1339, %v1635
  %v1637 = vpop.f32.mrf.mxu0
  %1638 = vmatprep.mubr.f32.mxu0 0.0
  %v1639 = vand.u32 %v125, 4294901760
  %1640 = vmatmul.mubr.f32.gmra.mxu0 %v1639
  %v1641 = vpop.f32.mrf.mxu0
  %v1642 = vadd.f32 %v1347, %v1641
  %v1643 = vpop.f32.mrf.mxu0
  %1644 = vmatprep.mubr.f32.mxu0 0.0
  %v1645 = vand.u32 %v128, 4294901760
  %1646 = vmatmul.mubr.f32.gmra.mxu0 %v1645
  %v1647 = vpop.f32.mrf.mxu0
  %v1648 = vadd.f32 %v1355, %v1647
  %v1649 = vpop.f32.mrf.mxu0
  %1650 = vmatprep.mubr.f32.mxu0 0.0
  %v1651 = vand.u32 %v131, 4294901760
  %1652 = vmatmul.mubr.f32.gmra.mxu0 %v1651
  %v1653 = vpop.f32.mrf.mxu0
  %v1654 = vadd.f32 %v1363, %v1653
  %v1655 = vpop.f32.mrf.mxu0
  %1656 = vmatprep.mubr.f32.mxu0 0.0
  %v1657 = vand.u32 %v134, 4294901760
  %1658 = vmatmul.mubr.f32.gmra.mxu0 %v1657
  %v1659 = vpop.f32.mrf.mxu0
  %v1660 = vadd.f32 %v1371, %v1659
  %v1661 = vpop.f32.mrf.mxu0
  %1662 = vmatprep.mubr.f32.mxu0 0.0
  %v1663 = vand.u32 %v137, 4294901760
  %1664 = vmatmul.mubr.f32.gmra.mxu0 %v1663
  %v1665 = vpop.f32.mrf.mxu0
  %v1666 = vadd.f32 %v1379, %v1665
  %v1667 = vpop.f32.mrf.mxu0
  %1668 = vmatprep.mubr.f32.mxu0 0.0
  %v1669 = vand.u32 %v140, 4294901760
  %1670 = vmatmul.mubr.f32.gmra.mxu0 %v1669
  %v1671 = vpop.f32.mrf.mxu0
  %v1672 = vadd.f32 %v1387, %v1671
  %v1673 = vpop.f32.mrf.mxu0
  %1674 = vmatprep.mubr.f32.mxu0 0.0
  %v1675 = vand.u32 %v143, 4294901760
  %1676 = vmatmul.mubr.f32.gmra.mxu0 %v1675
  %v1677 = vpop.f32.mrf.mxu0
  %v1678 = vadd.f32 %v1395, %v1677
  %v1679 = vpop.f32.mrf.mxu0
  %1680 = vmatprep.mubr.f32.mxu0 0.0
  %v1681 = vand.u32 %v146, 4294901760
  %1682 = vmatmul.mubr.f32.gmra.mxu0 %v1681
  %v1683 = vpop.f32.mrf.mxu0
  %v1684 = vadd.f32 %v1403, %v1683
  %v1685 = vpop.f32.mrf.mxu0
  %1686 = vmatprep.mubr.f32.mxu0 0.0
  %v1687 = vand.u32 %v149, 4294901760
  %1688 = vmatmul.mubr.f32.gmra.mxu0 %v1687
  %v1689 = vpop.f32.mrf.mxu0
  %v1690 = vadd.f32 %v1411, %v1689
  %v1691 = vpop.f32.mrf.mxu0
  %1692 = vmatprep.mubr.f32.mxu0 0.0
  %v1693 = vand.u32 %v152, 4294901760
  %1694 = vmatmul.mubr.f32.gmra.mxu0 %v1693
  %v1695 = vpop.f32.mrf.mxu0
  %v1696 = vadd.f32 %v1419, %v1695
  %v1697 = vpop.f32.mrf.mxu0
  %1698 = vmatprep.mubr.f32.mxu0 0.0
  %v1699 = vand.u32 %v155, 4294901760
  %1700 = vmatmul.mubr.f32.gmra.mxu0 %v1699
  %v1701 = vpop.f32.mrf.mxu0
  %v1702 = vadd.f32 %v1427, %v1701
  %v1703 = vpop.f32.mrf.mxu0
  %1704 = vmatprep.mubr.f32.mxu0 0.0
  %v1705 = vand.u32 %v158, 4294901760
  %1706 = vmatmul.mubr.f32.gmra.mxu0 %v1705
  %v1707 = vpop.f32.mrf.mxu0
  %v1708 = vadd.f32 %v1435, %v1707
  %v1709 = vpop.f32.mrf.mxu0
  %1710 = vmatprep.mubr.f32.mxu0 0.0
  %v1711 = vand.u32 %v161, 4294901760
  %1712 = vmatmul.mubr.f32.gmra.mxu0 %v1711
  %v1713 = vpop.f32.mrf.mxu0
  %v1714 = vadd.f32 %v1443, %v1713
  %v1715 = vpop.f32.mrf.mxu0
  %1716 = vmatprep.mubr.f32.mxu0 0.0
  %v1717 = vand.u32 %v164, 4294901760
  %1718 = vmatmul.mubr.f32.gmra.mxu0 %v1717
  %v1719 = vpop.f32.mrf.mxu0
  %v1720 = vadd.f32 %v1451, %v1719
  %v1721 = vpop.f32.mrf.mxu0
  %1722 = vdwg.mxu0
  %1723 = vmatprep.subr.mxu0 0.0
  %1724 = vmatpush1.msra.mxu0 0.0
  %1725 = vmatprep.subr.mxu0 0.0
  %1726 = vmatpush1.msra.mxu0 0.0
  %1727 = vmatprep.subr.mxu0 0.0
  %1728 = vmatpush1.msra.mxu0 0.0
  %1729 = vmatprep.subr.mxu0 0.0
  %1730 = vmatpush1.msra.mxu0 0.0
  %1731 = vmatprep.subr.mxu0 0.0
  %1732 = vmatpush1.msra.mxu0 0.0
  %1733 = vmatprep.subr.mxu0 0.0
  %1734 = vmatpush1.msra.mxu0 0.0
  %1735 = vmatprep.subr.mxu0 0.0
  %1736 = vmatpush1.msra.mxu0 0.0
  %1737 = vmatprep.subr.mxu0 0.0
  %1738 = vmatpush1.msra.mxu0 0.0
  %1739 = vmatprep.subr.mxu0 0.0
  %1740 = vmatpush1.msra.mxu0 0.0
  %1741 = vmatprep.subr.mxu0 0.0
  %1742 = vmatpush1.msra.mxu0 0.0
  %1743 = vmatprep.subr.mxu0 0.0
  %1744 = vmatpush1.msra.mxu0 0.0
  %1745 = vmatprep.subr.mxu0 0.0
  %1746 = vmatpush1.msra.mxu0 0.0
  %1747 = vmatprep.subr.mxu0 0.0
  %v1748 = vand.u32 %v61, 4294901760
  %1749 = vmatpush1.msra.mxu0 %v1748
  %1750 = vmatprep.subr.mxu0 0.0
  %v1751 = vand.u32 %v60, 4294901760
  %1752 = vmatpush1.msra.mxu0 %v1751
  %1753 = vmatprep.subr.mxu0 0.0
  %v1754 = vand.u32 %v59, 4294901760
  %1755 = vmatpush1.msra.mxu0 %v1754
  %1756 = vmatprep.subr.mxu0 0.0
  %v1757 = vand.u32 %v58, 4294901760
  %1758 = vmatpush1.msra.mxu0 %v1757
  %1759 = vmatprep.subr.mxu0 0.0
  %1760 = vmatpush2.msra.mxu0 0.0
  %1761 = vmatprep.subr.mxu0 0.0
  %1762 = vmatpush2.msra.mxu0 0.0
  %1763 = vmatprep.subr.mxu0 0.0
  %1764 = vmatpush2.msra.mxu0 0.0
  %1765 = vmatprep.subr.mxu0 0.0
  %1766 = vmatpush2.msra.mxu0 0.0
  %1767 = vmatprep.subr.mxu0 0.0
  %1768 = vmatpush2.msra.mxu0 0.0
  %1769 = vmatprep.subr.mxu0 0.0
  %1770 = vmatpush2.msra.mxu0 0.0
  %1771 = vmatprep.subr.mxu0 0.0
  %1772 = vmatpush2.msra.mxu0 0.0
  %1773 = vmatprep.subr.mxu0 0.0
  %1774 = vmatpush2.msra.mxu0 0.0
  %1775 = vmatprep.subr.mxu0 0.0
  %1776 = vmatpush2.msra.mxu0 0.0
  %1777 = vmatprep.subr.mxu0 0.0
  %1778 = vmatpush2.msra.mxu0 0.0
  %1779 = vmatprep.subr.mxu0 0.0
  %1780 = vmatpush2.msra.mxu0 0.0
  %1781 = vmatprep.subr.mxu0 0.0
  %1782 = vmatpush2.msra.mxu0 0.0
  %1783 = vmatprep.subr.mxu0 0.0
  %1784 = vmatpush2.msra.mxu0 0.0
  %1785 = vmatprep.subr.mxu0 0.0
  %1786 = vmatpush2.msra.mxu0 0.0
  %1787 = vmatprep.subr.mxu0 0.0
  %1788 = vmatpush2.msra.mxu0 0.0
  %1789 = vmatprep.subr.mxu0 0.0
  %1790 = vmatpush2.msra.mxu0 0.0
  %1791 = vmatprep.mubr.f32.mxu0 0.0
  %v1792 = vand.u32 %v71, 4294901760
  %1793 = vmatmul.mubr.f32.gmra.mxu0 %v1792
  %v1794 = vpop.f32.mrf.mxu0
  %v1795 = vadd.f32 %v1534, %v1794
  %v1796 = vpop.f32.mrf.mxu0
  %1797 = vmatprep.mubr.f32.mxu0 0.0
  %v1798 = vand.u32 %v74, 4294901760
  %1799 = vmatmul.mubr.f32.gmra.mxu0 %v1798
  %v1800 = vpop.f32.mrf.mxu0
  %v1801 = vadd.f32 %v1540, %v1800
  %v1802 = vpop.f32.mrf.mxu0
  %1803 = vmatprep.mubr.f32.mxu0 0.0
  %v1804 = vand.u32 %v77, 4294901760
  %1805 = vmatmul.mubr.f32.gmra.mxu0 %v1804
  %v1806 = vpop.f32.mrf.mxu0
  %v1807 = vadd.f32 %v1546, %v1806
  %v1808 = vpop.f32.mrf.mxu0
  %1809 = vmatprep.mubr.f32.mxu0 0.0
  %v1810 = vand.u32 %v80, 4294901760
  %1811 = vmatmul.mubr.f32.gmra.mxu0 %v1810
  %v1812 = vpop.f32.mrf.mxu0
  %v1813 = vadd.f32 %v1552, %v1812
  %v1814 = vpop.f32.mrf.mxu0
  %1815 = vmatprep.mubr.f32.mxu0 0.0
  %v1816 = vand.u32 %v83, 4294901760
  %1817 = vmatmul.mubr.f32.gmra.mxu0 %v1816
  %v1818 = vpop.f32.mrf.mxu0
  %v1819 = vadd.f32 %v1558, %v1818
  %v1820 = vpop.f32.mrf.mxu0
  %1821 = vmatprep.mubr.f32.mxu0 0.0
  %v1822 = vand.u32 %v86, 4294901760
  %1823 = vmatmul.mubr.f32.gmra.mxu0 %v1822
  %v1824 = vpop.f32.mrf.mxu0
  %v1825 = vadd.f32 %v1564, %v1824
  %v1826 = vpop.f32.mrf.mxu0
  %1827 = vmatprep.mubr.f32.mxu0 0.0
  %v1828 = vand.u32 %v89, 4294901760
  %1829 = vmatmul.mubr.f32.gmra.mxu0 %v1828
  %v1830 = vpop.f32.mrf.mxu0
  %v1831 = vadd.f32 %v1570, %v1830
  %v1832 = vpop.f32.mrf.mxu0
  %1833 = vmatprep.mubr.f32.mxu0 0.0
  %v1834 = vand.u32 %v92, 4294901760
  %1835 = vmatmul.mubr.f32.gmra.mxu0 %v1834
  %v1836 = vpop.f32.mrf.mxu0
  %v1837 = vadd.f32 %v1576, %v1836
  %v1838 = vpop.f32.mrf.mxu0
  %1839 = vmatprep.mubr.f32.mxu0 0.0
  %v1840 = vand.u32 %v95, 4294901760
  %1841 = vmatmul.mubr.f32.gmra.mxu0 %v1840
  %v1842 = vpop.f32.mrf.mxu0
  %v1843 = vadd.f32 %v1582, %v1842
  %v1844 = vpop.f32.mrf.mxu0
  %1845 = vmatprep.mubr.f32.mxu0 0.0
  %v1846 = vand.u32 %v98, 4294901760
  %1847 = vmatmul.mubr.f32.gmra.mxu0 %v1846
  %v1848 = vpop.f32.mrf.mxu0
  %v1849 = vadd.f32 %v1588, %v1848
  %v1850 = vpop.f32.mrf.mxu0
  %1851 = vmatprep.mubr.f32.mxu0 0.0
  %v1852 = vand.u32 %v101, 4294901760
  %1853 = vmatmul.mubr.f32.gmra.mxu0 %v1852
  %v1854 = vpop.f32.mrf.mxu0
  %v1855 = vadd.f32 %v1594, %v1854
  %v1856 = vpop.f32.mrf.mxu0
  %1857 = vmatprep.mubr.f32.mxu0 0.0
  %v1858 = vand.u32 %v104, 4294901760
  %1859 = vmatmul.mubr.f32.gmra.mxu0 %v1858
  %v1860 = vpop.f32.mrf.mxu0
  %v1861 = vadd.f32 %v1600, %v1860
  %v1862 = vpop.f32.mrf.mxu0
  %1863 = vmatprep.mubr.f32.mxu0 0.0
  %v1864 = vand.u32 %v107, 4294901760
  %1865 = vmatmul.mubr.f32.gmra.mxu0 %v1864
  %v1866 = vpop.f32.mrf.mxu0
  %v1867 = vadd.f32 %v1606, %v1866
  %v1868 = vpop.f32.mrf.mxu0
  %1869 = vmatprep.mubr.f32.mxu0 0.0
  %v1870 = vand.u32 %v110, 4294901760
  %1871 = vmatmul.mubr.f32.gmra.mxu0 %v1870
  %v1872 = vpop.f32.mrf.mxu0
  %v1873 = vadd.f32 %v1612, %v1872
  %v1874 = vpop.f32.mrf.mxu0
  %1875 = vmatprep.mubr.f32.mxu0 0.0
  %v1876 = vand.u32 %v113, 4294901760
  %1877 = vmatmul.mubr.f32.gmra.mxu0 %v1876
  %v1878 = vpop.f32.mrf.mxu0
  %v1879 = vadd.f32 %v1618, %v1878
  %v1880 = vpop.f32.mrf.mxu0
  %1881 = vmatprep.mubr.f32.mxu0 0.0
  %v1882 = vand.u32 %v116, 4294901760
  %1883 = vmatmul.mubr.f32.gmra.mxu0 %v1882
  %v1884 = vpop.f32.mrf.mxu0
  %v1885 = vadd.f32 %v1624, %v1884
  %v1886 = vpop.f32.mrf.mxu0
  %1887 = vmatprep.mubr.f32.mxu0 0.0
  %v1888 = vand.u32 %v119, 4294901760
  %1889 = vmatmul.mubr.f32.gmra.mxu0 %v1888
  %v1890 = vpop.f32.mrf.mxu0
  %v1891 = vadd.f32 %v1630, %v1890
  %v1892 = vpop.f32.mrf.mxu0
  %1893 = vmatprep.mubr.f32.mxu0 0.0
  %v1894 = vand.u32 %v122, 4294901760
  %1895 = vmatmul.mubr.f32.gmra.mxu0 %v1894
  %v1896 = vpop.f32.mrf.mxu0
  %v1897 = vadd.f32 %v1636, %v1896
  %v1898 = vpop.f32.mrf.mxu0
  %1899 = vmatprep.mubr.f32.mxu0 0.0
  %v1900 = vand.u32 %v125, 4294901760
  %1901 = vmatmul.mubr.f32.gmra.mxu0 %v1900
  %v1902 = vpop.f32.mrf.mxu0
  %v1903 = vadd.f32 %v1642, %v1902
  %v1904 = vpop.f32.mrf.mxu0
  %1905 = vmatprep.mubr.f32.mxu0 0.0
  %v1906 = vand.u32 %v128, 4294901760
  %1907 = vmatmul.mubr.f32.gmra.mxu0 %v1906
  %v1908 = vpop.f32.mrf.mxu0
  %v1909 = vadd.f32 %v1648, %v1908
  %v1910 = vpop.f32.mrf.mxu0
  %1911 = vmatprep.mubr.f32.mxu0 0.0
  %v1912 = vand.u32 %v131, 4294901760
  %1913 = vmatmul.mubr.f32.gmra.mxu0 %v1912
  %v1914 = vpop.f32.mrf.mxu0
  %v1915 = vadd.f32 %v1654, %v1914
  %v1916 = vpop.f32.mrf.mxu0
  %1917 = vmatprep.mubr.f32.mxu0 0.0
  %v1918 = vand.u32 %v134, 4294901760
  %1919 = vmatmul.mubr.f32.gmra.mxu0 %v1918
  %v1920 = vpop.f32.mrf.mxu0
  %v1921 = vadd.f32 %v1660, %v1920
  %v1922 = vpop.f32.mrf.mxu0
  %1923 = vmatprep.mubr.f32.mxu0 0.0
  %v1924 = vand.u32 %v137, 4294901760
  %1925 = vmatmul.mubr.f32.gmra.mxu0 %v1924
  %v1926 = vpop.f32.mrf.mxu0
  %v1927 = vadd.f32 %v1666, %v1926
  %v1928 = vpop.f32.mrf.mxu0
  %1929 = vmatprep.mubr.f32.mxu0 0.0
  %v1930 = vand.u32 %v140, 4294901760
  %1931 = vmatmul.mubr.f32.gmra.mxu0 %v1930
  %v1932 = vpop.f32.mrf.mxu0
  %v1933 = vadd.f32 %v1672, %v1932
  %v1934 = vpop.f32.mrf.mxu0
  %1935 = vmatprep.mubr.f32.mxu0 0.0
  %v1936 = vand.u32 %v143, 4294901760
  %1937 = vmatmul.mubr.f32.gmra.mxu0 %v1936
  %v1938 = vpop.f32.mrf.mxu0
  %v1939 = vadd.f32 %v1678, %v1938
  %v1940 = vpop.f32.mrf.mxu0
  %1941 = vmatprep.mubr.f32.mxu0 0.0
  %v1942 = vand.u32 %v146, 4294901760
  %1943 = vmatmul.mubr.f32.gmra.mxu0 %v1942
  %v1944 = vpop.f32.mrf.mxu0
  %v1945 = vadd.f32 %v1684, %v1944
  %v1946 = vpop.f32.mrf.mxu0
  %1947 = vmatprep.mubr.f32.mxu0 0.0
  %v1948 = vand.u32 %v149, 4294901760
  %1949 = vmatmul.mubr.f32.gmra.mxu0 %v1948
  %v1950 = vpop.f32.mrf.mxu0
  %v1951 = vadd.f32 %v1690, %v1950
  %v1952 = vpop.f32.mrf.mxu0
  %1953 = vmatprep.mubr.f32.mxu0 0.0
  %v1954 = vand.u32 %v152, 4294901760
  %1955 = vmatmul.mubr.f32.gmra.mxu0 %v1954
  %v1956 = vpop.f32.mrf.mxu0
  %v1957 = vadd.f32 %v1696, %v1956
  %v1958 = vpop.f32.mrf.mxu0
  %1959 = vmatprep.mubr.f32.mxu0 0.0
  %v1960 = vand.u32 %v155, 4294901760
  %1961 = vmatmul.mubr.f32.gmra.mxu0 %v1960
  %v1962 = vpop.f32.mrf.mxu0
  %v1963 = vadd.f32 %v1702, %v1962
  %v1964 = vpop.f32.mrf.mxu0
  %1965 = vmatprep.mubr.f32.mxu0 0.0
  %v1966 = vand.u32 %v158, 4294901760
  %1967 = vmatmul.mubr.f32.gmra.mxu0 %v1966
  %v1968 = vpop.f32.mrf.mxu0
  %v1969 = vadd.f32 %v1708, %v1968
  %v1970 = vpop.f32.mrf.mxu0
  %1971 = vmatprep.mubr.f32.mxu0 0.0
  %v1972 = vand.u32 %v161, 4294901760
  %1973 = vmatmul.mubr.f32.gmra.mxu0 %v1972
  %v1974 = vpop.f32.mrf.mxu0
  %v1975 = vadd.f32 %v1714, %v1974
  %v1976 = vpop.f32.mrf.mxu0
  %1977 = vmatprep.mubr.f32.mxu0 0.0
  %v1978 = vand.u32 %v164, 4294901760
  %1979 = vmatmul.mubr.f32.gmra.mxu0 %v1978
  %v1980 = vpop.f32.mrf.mxu0
  %v1981 = vadd.f32 %v1720, %v1980
  %v1982 = vpop.f32.mrf.mxu0
  %1983 = vdwg.mxu0
  %v1984 = vld [vmem:[%s1] sm:$0xff]
  %v1985 = vld [vmem:[%s1 + $0x8] sm:$0xff]
  %v1986 = vld [vmem:[%s1 + $0x10] sm:$0xff]
  %v1987 = vld [vmem:[%s1 + $0x18] sm:$0xff]
  %v1988 = vld [vmem:[%s1 + $0x20] sm:$0xff]
  %v1989 = vld [vmem:[%s1 + $0x28] sm:$0xff]
  %v1990 = vld [vmem:[%s1 + $0x30] sm:$0xff]
  %v1991 = vld [vmem:[%s1 + $0x38] sm:$0xff]
  %v1992 = vld [vmem:[%s1 + $0x40] sm:$0xff]
  %v1993 = vld [vmem:[%s1 + $0x48] sm:$0xff]
  %v1994 = vld [vmem:[%s1 + $0x50] sm:$0xff]
  %v1995 = vld [vmem:[%s1 + $0x58] sm:$0xff]
  %v1996 = vld [vmem:[%s1 + $0x60] sm:$0xff]
  %v1997 = vld [vmem:[%s1 + $0x68] sm:$0xff]
  %v1998 = vld [vmem:[%s1 + $0x70] sm:$0xff]
  %v1999 = vld [vmem:[%s1 + $0x78] sm:$0xff]
  %v2000 = vld [vmem:[%s1 + $0x80] sm:$0xff]
  %v2001 = vld [vmem:[%s1 + $0x88] sm:$0xff]
  %v2002 = vld [vmem:[%s1 + $0x90] sm:$0xff]
  %v2003 = vld [vmem:[%s1 + $0x98] sm:$0xff]
  %v2004 = vld [vmem:[%s1 + $0xa0] sm:$0xff]
  %v2005 = vld [vmem:[%s1 + $0xa8] sm:$0xff]
  %v2006 = vld [vmem:[%s1 + $0xb0] sm:$0xff]
  %v2007 = vld [vmem:[%s1 + $0xb8] sm:$0xff]
  %v2008 = vld [vmem:[%s1 + $0xc0] sm:$0xff]
  %v2009 = vld [vmem:[%s1 + $0xc8] sm:$0xff]
  %v2010 = vld [vmem:[%s1 + $0xd0] sm:$0xff]
  %v2011 = vld [vmem:[%s1 + $0xd8] sm:$0xff]
  %v2012 = vld [vmem:[%s1 + $0xe0] sm:$0xff]
  %v2013 = vld [vmem:[%s1 + $0xe8] sm:$0xff]
  %v2014 = vld [vmem:[%s1 + $0xf0] sm:$0xff]
  %v2015 = vld [vmem:[%s1 + $0xf8] sm:$0xff]
  %v2016 = vld [vmem:[%s5] sm:$0xff]
  %v2017 = vld [vmem:[%s5 + $0x8] sm:$0xff]
  %v2018 = vld [vmem:[%s5 + $0x10] sm:$0xff]
  %v2019 = vld [vmem:[%s5 + $0x18] sm:$0xff]
  %v2020 = vld [vmem:[%s6] sm:$0x1]
  %v2022 = vlaneseq
  %v2023 = vshrl.u32 %v2022, 7
  %v2024 = vsub.s32 0, %v2023
  %v2025 = vrot.slane %v2020, %v2024
  %v2028 = vsel %vm69, %v1984, 0
  %v2031 = vsel %vm69, %v1985, 0
  %v2034 = vsel %vm69, %v1986, 0
  %v2037 = vsel %vm69, %v1987, 0
  %v2040 = vsel %vm69, %v1988, 0
  %v2043 = vsel %vm69, %v1989, 0
  %v2046 = vsel %vm69, %v1990, 0
  %v2049 = vsel %vm69, %v1991, 0
  %v2052 = vsel %vm69, %v1992, 0
  %v2055 = vsel %vm69, %v1993, 0
  %v2058 = vsel %vm69, %v1994, 0
  %v2061 = vsel %vm69, %v1995, 0
  %v2064 = vsel %vm69, %v1996, 0
  %v2067 = vsel %vm69, %v1997, 0
  %v2070 = vsel %vm69, %v1998, 0
  %v2073 = vsel %vm69, %v1999, 0
  %v2076 = vsel %vm69, %v2000, 0
  %v2079 = vsel %vm69, %v2001, 0
  %v2082 = vsel %vm69, %v2002, 0
  %v2085 = vsel %vm69, %v2003, 0
  %v2088 = vsel %vm69, %v2004, 0
  %v2091 = vsel %vm69, %v2005, 0
  %v2094 = vsel %vm69, %v2006, 0
  %v2097 = vsel %vm69, %v2007, 0
  %v2100 = vsel %vm69, %v2008, 0
  %v2103 = vsel %vm69, %v2009, 0
  %v2106 = vsel %vm69, %v2010, 0
  %v2109 = vsel %vm69, %v2011, 0
  %v2112 = vsel %vm69, %v2012, 0
  %v2115 = vsel %vm69, %v2013, 0
  %v2118 = vsel %vm69, %v2014, 0
  %v2121 = vsel %vm69, %v2015, 0
  %2123 = vmatprep.subr.mxu0 0.0
  %2124 = vmatpush1.msra.mxu0 0.0
  %2125 = vmatprep.subr.mxu0 0.0
  %2126 = vmatpush1.msra.mxu0 0.0
  %2127 = vmatprep.subr.mxu0 0.0
  %2128 = vmatpush1.msra.mxu0 0.0
  %2129 = vmatprep.subr.mxu0 0.0
  %2130 = vmatpush1.msra.mxu0 0.0
  %2131 = vmatprep.subr.mxu0 0.0
  %2132 = vmatpush1.msra.mxu0 0.0
  %2133 = vmatprep.subr.mxu0 0.0
  %2134 = vmatpush1.msra.mxu0 0.0
  %2135 = vmatprep.subr.mxu0 0.0
  %2136 = vmatpush1.msra.mxu0 0.0
  %2137 = vmatprep.subr.mxu0 0.0
  %2138 = vmatpush1.msra.mxu0 0.0
  %2139 = vmatprep.subr.mxu0 0.0
  %2140 = vmatpush1.msra.mxu0 0.0
  %2141 = vmatprep.subr.mxu0 0.0
  %2142 = vmatpush1.msra.mxu0 0.0
  %2143 = vmatprep.subr.mxu0 0.0
  %2144 = vmatpush1.msra.mxu0 0.0
  %2145 = vmatprep.subr.mxu0 0.0
  %2146 = vmatpush1.msra.mxu0 0.0
  %2147 = vmatprep.subr.mxu0 0.0
  %v2148 = vand.u32 %v2019, 4294901760
  %2149 = vmatpush1.msra.mxu0 %v2148
  %2150 = vmatprep.subr.mxu0 0.0
  %v2151 = vand.u32 %v2018, 4294901760
  %2152 = vmatpush1.msra.mxu0 %v2151
  %2153 = vmatprep.subr.mxu0 0.0
  %v2154 = vand.u32 %v2017, 4294901760
  %2155 = vmatpush1.msra.mxu0 %v2154
  %2156 = vmatprep.subr.mxu0 0.0
  %v2157 = vand.u32 %v2016, 4294901760
  %2158 = vmatpush1.msra.mxu0 %v2157
  %2159 = vmatprep.subr.mxu0 0.0
  %2160 = vmatpush2.msra.mxu0 0.0
  %2161 = vmatprep.subr.mxu0 0.0
  %2162 = vmatpush2.msra.mxu0 0.0
  %2163 = vmatprep.subr.mxu0 0.0
  %2164 = vmatpush2.msra.mxu0 0.0
  %2165 = vmatprep.subr.mxu0 0.0
  %2166 = vmatpush2.msra.mxu0 0.0
  %2167 = vmatprep.subr.mxu0 0.0
  %2168 = vmatpush2.msra.mxu0 0.0
  %2169 = vmatprep.subr.mxu0 0.0
  %2170 = vmatpush2.msra.mxu0 0.0
  %2171 = vmatprep.subr.mxu0 0.0
  %2172 = vmatpush2.msra.mxu0 0.0
  %2173 = vmatprep.subr.mxu0 0.0
  %2174 = vmatpush2.msra.mxu0 0.0
  %2175 = vmatprep.subr.mxu0 0.0
  %2176 = vmatpush2.msra.mxu0 0.0
  %2177 = vmatprep.subr.mxu0 0.0
  %2178 = vmatpush2.msra.mxu0 0.0
  %2179 = vmatprep.subr.mxu0 0.0
  %2180 = vmatpush2.msra.mxu0 0.0
  %2181 = vmatprep.subr.mxu0 0.0
  %2182 = vmatpush2.msra.mxu0 0.0
  %2183 = vmatprep.subr.mxu0 0.0
  %2184 = vmatpush2.msra.mxu0 0.0
  %2185 = vmatprep.subr.mxu0 0.0
  %2186 = vmatpush2.msra.mxu0 0.0
  %2187 = vmatprep.subr.mxu0 0.0
  %2188 = vmatpush2.msra.mxu0 0.0
  %2189 = vmatprep.subr.mxu0 0.0
  %2190 = vmatpush2.msra.mxu0 0.0
  %2191 = vmatprep.mubr.f32.mxu0 0.0
  %v2192 = vand.u32 %v2028, 4294901760
  %v2193 = vsub.f32 %v2028, %v2192
  %v2194 = vand.u32 %v2193, 4294901760
  %v2195 = vsub.f32 %v2193, %v2194
  %v2196 = vand.u32 %v2195, 4294901760
  %2197 = vmatmul.mubr.f32.gmra.mxu0 %v2196
  %v2198 = vpop.f32.mrf.mxu0
  %v2199 = vadd.f32 %v2025, %v2198
  %v2200 = vpop.f32.mrf.mxu0
  %2201 = vmatprep.mubr.f32.mxu0 0.0
  %v2202 = vand.u32 %v2031, 4294901760
  %v2203 = vsub.f32 %v2031, %v2202
  %v2204 = vand.u32 %v2203, 4294901760
  %v2205 = vsub.f32 %v2203, %v2204
  %v2206 = vand.u32 %v2205, 4294901760
  %2207 = vmatmul.mubr.f32.gmra.mxu0 %v2206
  %v2208 = vpop.f32.mrf.mxu0
  %v2209 = vadd.f32 %v2025, %v2208
  %v2210 = vpop.f32.mrf.mxu0
  %2211 = vmatprep.mubr.f32.mxu0 0.0
  %v2212 = vand.u32 %v2034, 4294901760
  %v2213 = vsub.f32 %v2034, %v2212
  %v2214 = vand.u32 %v2213, 4294901760
  %v2215 = vsub.f32 %v2213, %v2214
  %v2216 = vand.u32 %v2215, 4294901760
  %2217 = vmatmul.mubr.f32.gmra.mxu0 %v2216
  %v2218 = vpop.f32.mrf.mxu0
  %v2219 = vadd.f32 %v2025, %v2218
  %v2220 = vpop.f32.mrf.mxu0
  %2221 = vmatprep.mubr.f32.mxu0 0.0
  %v2222 = vand.u32 %v2037, 4294901760
  %v2223 = vsub.f32 %v2037, %v2222
  %v2224 = vand.u32 %v2223, 4294901760
  %v2225 = vsub.f32 %v2223, %v2224
  %v2226 = vand.u32 %v2225, 4294901760
  %2227 = vmatmul.mubr.f32.gmra.mxu0 %v2226
  %v2228 = vpop.f32.mrf.mxu0
  %v2229 = vadd.f32 %v2025, %v2228
  %v2230 = vpop.f32.mrf.mxu0
  %2231 = vmatprep.mubr.f32.mxu0 0.0
  %v2232 = vand.u32 %v2040, 4294901760
  %v2233 = vsub.f32 %v2040, %v2232
  %v2234 = vand.u32 %v2233, 4294901760
  %v2235 = vsub.f32 %v2233, %v2234
  %v2236 = vand.u32 %v2235, 4294901760
  %2237 = vmatmul.mubr.f32.gmra.mxu0 %v2236
  %v2238 = vpop.f32.mrf.mxu0
  %v2239 = vadd.f32 %v2025, %v2238
  %v2240 = vpop.f32.mrf.mxu0
  %2241 = vmatprep.mubr.f32.mxu0 0.0
  %v2242 = vand.u32 %v2043, 4294901760
  %v2243 = vsub.f32 %v2043, %v2242
  %v2244 = vand.u32 %v2243, 4294901760
  %v2245 = vsub.f32 %v2243, %v2244
  %v2246 = vand.u32 %v2245, 4294901760
  %2247 = vmatmul.mubr.f32.gmra.mxu0 %v2246
  %v2248 = vpop.f32.mrf.mxu0
  %v2249 = vadd.f32 %v2025, %v2248
  %v2250 = vpop.f32.mrf.mxu0
  %2251 = vmatprep.mubr.f32.mxu0 0.0
  %v2252 = vand.u32 %v2046, 4294901760
  %v2253 = vsub.f32 %v2046, %v2252
  %v2254 = vand.u32 %v2253, 4294901760
  %v2255 = vsub.f32 %v2253, %v2254
  %v2256 = vand.u32 %v2255, 4294901760
  %2257 = vmatmul.mubr.f32.gmra.mxu0 %v2256
  %v2258 = vpop.f32.mrf.mxu0
  %v2259 = vadd.f32 %v2025, %v2258
  %v2260 = vpop.f32.mrf.mxu0
  %2261 = vmatprep.mubr.f32.mxu0 0.0
  %v2262 = vand.u32 %v2049, 4294901760
  %v2263 = vsub.f32 %v2049, %v2262
  %v2264 = vand.u32 %v2263, 4294901760
  %v2265 = vsub.f32 %v2263, %v2264
  %v2266 = vand.u32 %v2265, 4294901760
  %2267 = vmatmul.mubr.f32.gmra.mxu0 %v2266
  %v2268 = vpop.f32.mrf.mxu0
  %v2269 = vadd.f32 %v2025, %v2268
  %v2270 = vpop.f32.mrf.mxu0
  %2271 = vmatprep.mubr.f32.mxu0 0.0
  %v2272 = vand.u32 %v2052, 4294901760
  %v2273 = vsub.f32 %v2052, %v2272
  %v2274 = vand.u32 %v2273, 4294901760
  %v2275 = vsub.f32 %v2273, %v2274
  %v2276 = vand.u32 %v2275, 4294901760
  %2277 = vmatmul.mubr.f32.gmra.mxu0 %v2276
  %v2278 = vpop.f32.mrf.mxu0
  %v2279 = vadd.f32 %v2025, %v2278
  %v2280 = vpop.f32.mrf.mxu0
  %2281 = vmatprep.mubr.f32.mxu0 0.0
  %v2282 = vand.u32 %v2055, 4294901760
  %v2283 = vsub.f32 %v2055, %v2282
  %v2284 = vand.u32 %v2283, 4294901760
  %v2285 = vsub.f32 %v2283, %v2284
  %v2286 = vand.u32 %v2285, 4294901760
  %2287 = vmatmul.mubr.f32.gmra.mxu0 %v2286
  %v2288 = vpop.f32.mrf.mxu0
  %v2289 = vadd.f32 %v2025, %v2288
  %v2290 = vpop.f32.mrf.mxu0
  %2291 = vmatprep.mubr.f32.mxu0 0.0
  %v2292 = vand.u32 %v2058, 4294901760
  %v2293 = vsub.f32 %v2058, %v2292
  %v2294 = vand.u32 %v2293, 4294901760
  %v2295 = vsub.f32 %v2293, %v2294
  %v2296 = vand.u32 %v2295, 4294901760
  %2297 = vmatmul.mubr.f32.gmra.mxu0 %v2296
  %v2298 = vpop.f32.mrf.mxu0
  %v2299 = vadd.f32 %v2025, %v2298
  %v2300 = vpop.f32.mrf.mxu0
  %2301 = vmatprep.mubr.f32.mxu0 0.0
  %v2302 = vand.u32 %v2061, 4294901760
  %v2303 = vsub.f32 %v2061, %v2302
  %v2304 = vand.u32 %v2303, 4294901760
  %v2305 = vsub.f32 %v2303, %v2304
  %v2306 = vand.u32 %v2305, 4294901760
  %2307 = vmatmul.mubr.f32.gmra.mxu0 %v2306
  %v2308 = vpop.f32.mrf.mxu0
  %v2309 = vadd.f32 %v2025, %v2308
  %v2310 = vpop.f32.mrf.mxu0
  %2311 = vmatprep.mubr.f32.mxu0 0.0
  %v2312 = vand.u32 %v2064, 4294901760
  %v2313 = vsub.f32 %v2064, %v2312
  %v2314 = vand.u32 %v2313, 4294901760
  %v2315 = vsub.f32 %v2313, %v2314
  %v2316 = vand.u32 %v2315, 4294901760
  %2317 = vmatmul.mubr.f32.gmra.mxu0 %v2316
  %v2318 = vpop.f32.mrf.mxu0
  %v2319 = vadd.f32 %v2025, %v2318
  %v2320 = vpop.f32.mrf.mxu0
  %2321 = vmatprep.mubr.f32.mxu0 0.0
  %v2322 = vand.u32 %v2067, 4294901760
  %v2323 = vsub.f32 %v2067, %v2322
  %v2324 = vand.u32 %v2323, 4294901760
  %v2325 = vsub.f32 %v2323, %v2324
  %v2326 = vand.u32 %v2325, 4294901760
  %2327 = vmatmul.mubr.f32.gmra.mxu0 %v2326
  %v2328 = vpop.f32.mrf.mxu0
  %v2329 = vadd.f32 %v2025, %v2328
  %v2330 = vpop.f32.mrf.mxu0
  %2331 = vmatprep.mubr.f32.mxu0 0.0
  %v2332 = vand.u32 %v2070, 4294901760
  %v2333 = vsub.f32 %v2070, %v2332
  %v2334 = vand.u32 %v2333, 4294901760
  %v2335 = vsub.f32 %v2333, %v2334
  %v2336 = vand.u32 %v2335, 4294901760
  %2337 = vmatmul.mubr.f32.gmra.mxu0 %v2336
  %v2338 = vpop.f32.mrf.mxu0
  %v2339 = vadd.f32 %v2025, %v2338
  %v2340 = vpop.f32.mrf.mxu0
  %2341 = vmatprep.mubr.f32.mxu0 0.0
  %v2342 = vand.u32 %v2073, 4294901760
  %v2343 = vsub.f32 %v2073, %v2342
  %v2344 = vand.u32 %v2343, 4294901760
  %v2345 = vsub.f32 %v2343, %v2344
  %v2346 = vand.u32 %v2345, 4294901760
  %2347 = vmatmul.mubr.f32.gmra.mxu0 %v2346
  %v2348 = vpop.f32.mrf.mxu0
  %v2349 = vadd.f32 %v2025, %v2348
  %v2350 = vpop.f32.mrf.mxu0
  %2351 = vmatprep.mubr.f32.mxu0 0.0
  %v2352 = vand.u32 %v2076, 4294901760
  %v2353 = vsub.f32 %v2076, %v2352
  %v2354 = vand.u32 %v2353, 4294901760
  %v2355 = vsub.f32 %v2353, %v2354
  %v2356 = vand.u32 %v2355, 4294901760
  %2357 = vmatmul.mubr.f32.gmra.mxu0 %v2356
  %v2358 = vpop.f32.mrf.mxu0
  %v2359 = vadd.f32 %v2025, %v2358
  %v2360 = vpop.f32.mrf.mxu0
  %2361 = vmatprep.mubr.f32.mxu0 0.0
  %v2362 = vand.u32 %v2079, 4294901760
  %v2363 = vsub.f32 %v2079, %v2362
  %v2364 = vand.u32 %v2363, 4294901760
  %v2365 = vsub.f32 %v2363, %v2364
  %v2366 = vand.u32 %v2365, 4294901760
  %2367 = vmatmul.mubr.f32.gmra.mxu0 %v2366
  %v2368 = vpop.f32.mrf.mxu0
  %v2369 = vadd.f32 %v2025, %v2368
  %v2370 = vpop.f32.mrf.mxu0
  %2371 = vmatprep.mubr.f32.mxu0 0.0
  %v2372 = vand.u32 %v2082, 4294901760
  %v2373 = vsub.f32 %v2082, %v2372
  %v2374 = vand.u32 %v2373, 4294901760
  %v2375 = vsub.f32 %v2373, %v2374
  %v2376 = vand.u32 %v2375, 4294901760
  %2377 = vmatmul.mubr.f32.gmra.mxu0 %v2376
  %v2378 = vpop.f32.mrf.mxu0
  %v2379 = vadd.f32 %v2025, %v2378
  %v2380 = vpop.f32.mrf.mxu0
  %2381 = vmatprep.mubr.f32.mxu0 0.0
  %v2382 = vand.u32 %v2085, 4294901760
  %v2383 = vsub.f32 %v2085, %v2382
  %v2384 = vand.u32 %v2383, 4294901760
  %v2385 = vsub.f32 %v2383, %v2384
  %v2386 = vand.u32 %v2385, 4294901760
  %2387 = vmatmul.mubr.f32.gmra.mxu0 %v2386
  %v2388 = vpop.f32.mrf.mxu0
  %v2389 = vadd.f32 %v2025, %v2388
  %v2390 = vpop.f32.mrf.mxu0
  %2391 = vmatprep.mubr.f32.mxu0 0.0
  %v2392 = vand.u32 %v2088, 4294901760
  %v2393 = vsub.f32 %v2088, %v2392
  %v2394 = vand.u32 %v2393, 4294901760
  %v2395 = vsub.f32 %v2393, %v2394
  %v2396 = vand.u32 %v2395, 4294901760
  %2397 = vmatmul.mubr.f32.gmra.mxu0 %v2396
  %v2398 = vpop.f32.mrf.mxu0
  %v2399 = vadd.f32 %v2025, %v2398
  %v2400 = vpop.f32.mrf.mxu0
  %2401 = vmatprep.mubr.f32.mxu0 0.0
  %v2402 = vand.u32 %v2091, 4294901760
  %v2403 = vsub.f32 %v2091, %v2402
  %v2404 = vand.u32 %v2403, 4294901760
  %v2405 = vsub.f32 %v2403, %v2404
  %v2406 = vand.u32 %v2405, 4294901760
  %2407 = vmatmul.mubr.f32.gmra.mxu0 %v2406
  %v2408 = vpop.f32.mrf.mxu0
  %v2409 = vadd.f32 %v2025, %v2408
  %v2410 = vpop.f32.mrf.mxu0
  %2411 = vmatprep.mubr.f32.mxu0 0.0
  %v2412 = vand.u32 %v2094, 4294901760
  %v2413 = vsub.f32 %v2094, %v2412
  %v2414 = vand.u32 %v2413, 4294901760
  %v2415 = vsub.f32 %v2413, %v2414
  %v2416 = vand.u32 %v2415, 4294901760
  %2417 = vmatmul.mubr.f32.gmra.mxu0 %v2416
  %v2418 = vpop.f32.mrf.mxu0
  %v2419 = vadd.f32 %v2025, %v2418
  %v2420 = vpop.f32.mrf.mxu0
  %2421 = vmatprep.mubr.f32.mxu0 0.0
  %v2422 = vand.u32 %v2097, 4294901760
  %v2423 = vsub.f32 %v2097, %v2422
  %v2424 = vand.u32 %v2423, 4294901760
  %v2425 = vsub.f32 %v2423, %v2424
  %v2426 = vand.u32 %v2425, 4294901760
  %2427 = vmatmul.mubr.f32.gmra.mxu0 %v2426
  %v2428 = vpop.f32.mrf.mxu0
  %v2429 = vadd.f32 %v2025, %v2428
  %v2430 = vpop.f32.mrf.mxu0
  %2431 = vmatprep.mubr.f32.mxu0 0.0
  %v2432 = vand.u32 %v2100, 4294901760
  %v2433 = vsub.f32 %v2100, %v2432
  %v2434 = vand.u32 %v2433, 4294901760
  %v2435 = vsub.f32 %v2433, %v2434
  %v2436 = vand.u32 %v2435, 4294901760
  %2437 = vmatmul.mubr.f32.gmra.mxu0 %v2436
  %v2438 = vpop.f32.mrf.mxu0
  %v2439 = vadd.f32 %v2025, %v2438
  %v2440 = vpop.f32.mrf.mxu0
  %2441 = vmatprep.mubr.f32.mxu0 0.0
  %v2442 = vand.u32 %v2103, 4294901760
  %v2443 = vsub.f32 %v2103, %v2442
  %v2444 = vand.u32 %v2443, 4294901760
  %v2445 = vsub.f32 %v2443, %v2444
  %v2446 = vand.u32 %v2445, 4294901760
  %2447 = vmatmul.mubr.f32.gmra.mxu0 %v2446
  %v2448 = vpop.f32.mrf.mxu0
  %v2449 = vadd.f32 %v2025, %v2448
  %v2450 = vpop.f32.mrf.mxu0
  %2451 = vmatprep.mubr.f32.mxu0 0.0
  %v2452 = vand.u32 %v2106, 4294901760
  %v2453 = vsub.f32 %v2106, %v2452
  %v2454 = vand.u32 %v2453, 4294901760
  %v2455 = vsub.f32 %v2453, %v2454
  %v2456 = vand.u32 %v2455, 4294901760
  %2457 = vmatmul.mubr.f32.gmra.mxu0 %v2456
  %v2458 = vpop.f32.mrf.mxu0
  %v2459 = vadd.f32 %v2025, %v2458
  %v2460 = vpop.f32.mrf.mxu0
  %2461 = vmatprep.mubr.f32.mxu0 0.0
  %v2462 = vand.u32 %v2109, 4294901760
  %v2463 = vsub.f32 %v2109, %v2462
  %v2464 = vand.u32 %v2463, 4294901760
  %v2465 = vsub.f32 %v2463, %v2464
  %v2466 = vand.u32 %v2465, 4294901760
  %2467 = vmatmul.mubr.f32.gmra.mxu0 %v2466
  %v2468 = vpop.f32.mrf.mxu0
  %v2469 = vadd.f32 %v2025, %v2468
  %v2470 = vpop.f32.mrf.mxu0
  %2471 = vmatprep.mubr.f32.mxu0 0.0
  %v2472 = vand.u32 %v2112, 4294901760
  %v2473 = vsub.f32 %v2112, %v2472
  %v2474 = vand.u32 %v2473, 4294901760
  %v2475 = vsub.f32 %v2473, %v2474
  %v2476 = vand.u32 %v2475, 4294901760
  %2477 = vmatmul.mubr.f32.gmra.mxu0 %v2476
  %v2478 = vpop.f32.mrf.mxu0
  %v2479 = vadd.f32 %v2025, %v2478
  %v2480 = vpop.f32.mrf.mxu0
  %2481 = vmatprep.mubr.f32.mxu0 0.0
  %v2482 = vand.u32 %v2115, 4294901760
  %v2483 = vsub.f32 %v2115, %v2482
  %v2484 = vand.u32 %v2483, 4294901760
  %v2485 = vsub.f32 %v2483, %v2484
  %v2486 = vand.u32 %v2485, 4294901760
  %2487 = vmatmul.mubr.f32.gmra.mxu0 %v2486
  %v2488 = vpop.f32.mrf.mxu0
  %v2489 = vadd.f32 %v2025, %v2488
  %v2490 = vpop.f32.mrf.mxu0
  %2491 = vmatprep.mubr.f32.mxu0 0.0
  %v2492 = vand.u32 %v2118, 4294901760
  %v2493 = vsub.f32 %v2118, %v2492
  %v2494 = vand.u32 %v2493, 4294901760
  %v2495 = vsub.f32 %v2493, %v2494
  %v2496 = vand.u32 %v2495, 4294901760
  %2497 = vmatmul.mubr.f32.gmra.mxu0 %v2496
  %v2498 = vpop.f32.mrf.mxu0
  %v2499 = vadd.f32 %v2025, %v2498
  %v2500 = vpop.f32.mrf.mxu0
  %2501 = vmatprep.mubr.f32.mxu0 0.0
  %v2502 = vand.u32 %v2121, 4294901760
  %v2503 = vsub.f32 %v2121, %v2502
  %v2504 = vand.u32 %v2503, 4294901760
  %v2505 = vsub.f32 %v2503, %v2504
  %v2506 = vand.u32 %v2505, 4294901760
  %2507 = vmatmul.mubr.f32.gmra.mxu0 %v2506
  %v2508 = vpop.f32.mrf.mxu0
  %v2509 = vadd.f32 %v2025, %v2508
  %v2510 = vpop.f32.mrf.mxu0
  %2511 = vdwg.mxu0
  %2512 = vmatprep.subr.mxu0 0.0
  %2513 = vmatpush1.msra.mxu0 0.0
  %2514 = vmatprep.subr.mxu0 0.0
  %2515 = vmatpush1.msra.mxu0 0.0
  %2516 = vmatprep.subr.mxu0 0.0
  %2517 = vmatpush1.msra.mxu0 0.0
  %2518 = vmatprep.subr.mxu0 0.0
  %2519 = vmatpush1.msra.mxu0 0.0
  %2520 = vmatprep.subr.mxu0 0.0
  %2521 = vmatpush1.msra.mxu0 0.0
  %2522 = vmatprep.subr.mxu0 0.0
  %2523 = vmatpush1.msra.mxu0 0.0
  %2524 = vmatprep.subr.mxu0 0.0
  %2525 = vmatpush1.msra.mxu0 0.0
  %2526 = vmatprep.subr.mxu0 0.0
  %2527 = vmatpush1.msra.mxu0 0.0
  %2528 = vmatprep.subr.mxu0 0.0
  %2529 = vmatpush1.msra.mxu0 0.0
  %2530 = vmatprep.subr.mxu0 0.0
  %2531 = vmatpush1.msra.mxu0 0.0
  %2532 = vmatprep.subr.mxu0 0.0
  %2533 = vmatpush1.msra.mxu0 0.0
  %2534 = vmatprep.subr.mxu0 0.0
  %2535 = vmatpush1.msra.mxu0 0.0
  %2536 = vmatprep.subr.mxu0 0.0
  %v2537 = vand.u32 %v2019, 4294901760
  %v2538 = vsub.f32 %v2019, %v2537
  %v2539 = vand.u32 %v2538, 4294901760
  %v2540 = vsub.f32 %v2538, %v2539
  %v2541 = vand.u32 %v2540, 4294901760
  %2542 = vmatpush1.msra.mxu0 %v2541
  %2543 = vmatprep.subr.mxu0 0.0
  %v2544 = vand.u32 %v2018, 4294901760
  %v2545 = vsub.f32 %v2018, %v2544
  %v2546 = vand.u32 %v2545, 4294901760
  %v2547 = vsub.f32 %v2545, %v2546
  %v2548 = vand.u32 %v2547, 4294901760
  %2549 = vmatpush1.msra.mxu0 %v2548
  %2550 = vmatprep.subr.mxu0 0.0
  %v2551 = vand.u32 %v2017, 4294901760
  %v2552 = vsub.f32 %v2017, %v2551
  %v2553 = vand.u32 %v2552, 4294901760
  %v2554 = vsub.f32 %v2552, %v2553
  %v2555 = vand.u32 %v2554, 4294901760
  %2556 = vmatpush1.msra.mxu0 %v2555
  %2557 = vmatprep.subr.mxu0 0.0
  %v2558 = vand.u32 %v2016, 4294901760
  %v2559 = vsub.f32 %v2016, %v2558
  %v2560 = vand.u32 %v2559, 4294901760
  %v2561 = vsub.f32 %v2559, %v2560
  %v2562 = vand.u32 %v2561, 4294901760
  %2563 = vmatpush1.msra.mxu0 %v2562
  %2564 = vmatprep.subr.mxu0 0.0
  %2565 = vmatpush2.msra.mxu0 0.0
  %2566 = vmatprep.subr.mxu0 0.0
  %2567 = vmatpush2.msra.mxu0 0.0
  %2568 = vmatprep.subr.mxu0 0.0
  %2569 = vmatpush2.msra.mxu0 0.0
  %2570 = vmatprep.subr.mxu0 0.0
  %2571 = vmatpush2.msra.mxu0 0.0
  %2572 = vmatprep.subr.mxu0 0.0
  %2573 = vmatpush2.msra.mxu0 0.0
  %2574 = vmatprep.subr.mxu0 0.0
  %2575 = vmatpush2.msra.mxu0 0.0
  %2576 = vmatprep.subr.mxu0 0.0
  %2577 = vmatpush2.msra.mxu0 0.0
  %2578 = vmatprep.subr.mxu0 0.0
  %2579 = vmatpush2.msra.mxu0 0.0
  %2580 = vmatprep.subr.mxu0 0.0
  %2581 = vmatpush2.msra.mxu0 0.0
  %2582 = vmatprep.subr.mxu0 0.0
  %2583 = vmatpush2.msra.mxu0 0.0
  %2584 = vmatprep.subr.mxu0 0.0
  %2585 = vmatpush2.msra.mxu0 0.0
  %2586 = vmatprep.subr.mxu0 0.0
  %2587 = vmatpush2.msra.mxu0 0.0
  %2588 = vmatprep.subr.mxu0 0.0
  %2589 = vmatpush2.msra.mxu0 0.0
  %2590 = vmatprep.subr.mxu0 0.0
  %2591 = vmatpush2.msra.mxu0 0.0
  %2592 = vmatprep.subr.mxu0 0.0
  %2593 = vmatpush2.msra.mxu0 0.0
  %2594 = vmatprep.subr.mxu0 0.0
  %2595 = vmatpush2.msra.mxu0 0.0
  %2596 = vmatprep.mubr.f32.mxu0 0.0
  %v2597 = vand.u32 %v2028, 4294901760
  %2598 = vmatmul.mubr.f32.gmra.mxu0 %v2597
  %v2599 = vpop.f32.mrf.mxu0
  %v2600 = vadd.f32 %v2199, %v2599
  %v2601 = vpop.f32.mrf.mxu0
  %2602 = vmatprep.mubr.f32.mxu0 0.0
  %v2603 = vand.u32 %v2031, 4294901760
  %2604 = vmatmul.mubr.f32.gmra.mxu0 %v2603
  %v2605 = vpop.f32.mrf.mxu0
  %v2606 = vadd.f32 %v2209, %v2605
  %v2607 = vpop.f32.mrf.mxu0
  %2608 = vmatprep.mubr.f32.mxu0 0.0
  %v2609 = vand.u32 %v2034, 4294901760
  %2610 = vmatmul.mubr.f32.gmra.mxu0 %v2609
  %v2611 = vpop.f32.mrf.mxu0
  %v2612 = vadd.f32 %v2219, %v2611
  %v2613 = vpop.f32.mrf.mxu0
  %2614 = vmatprep.mubr.f32.mxu0 0.0
  %v2615 = vand.u32 %v2037, 4294901760
  %2616 = vmatmul.mubr.f32.gmra.mxu0 %v2615
  %v2617 = vpop.f32.mrf.mxu0
  %v2618 = vadd.f32 %v2229, %v2617
  %v2619 = vpop.f32.mrf.mxu0
  %2620 = vmatprep.mubr.f32.mxu0 0.0
  %v2621 = vand.u32 %v2040, 4294901760
  %2622 = vmatmul.mubr.f32.gmra.mxu0 %v2621
  %v2623 = vpop.f32.mrf.mxu0
  %v2624 = vadd.f32 %v2239, %v2623
  %v2625 = vpop.f32.mrf.mxu0
  %2626 = vmatprep.mubr.f32.mxu0 0.0
  %v2627 = vand.u32 %v2043, 4294901760
  %2628 = vmatmul.mubr.f32.gmra.mxu0 %v2627
  %v2629 = vpop.f32.mrf.mxu0
  %v2630 = vadd.f32 %v2249, %v2629
  %v2631 = vpop.f32.mrf.mxu0
  %2632 = vmatprep.mubr.f32.mxu0 0.0
  %v2633 = vand.u32 %v2046, 4294901760
  %2634 = vmatmul.mubr.f32.gmra.mxu0 %v2633
  %v2635 = vpop.f32.mrf.mxu0
  %v2636 = vadd.f32 %v2259, %v2635
  %v2637 = vpop.f32.mrf.mxu0
  %2638 = vmatprep.mubr.f32.mxu0 0.0
  %v2639 = vand.u32 %v2049, 4294901760
  %2640 = vmatmul.mubr.f32.gmra.mxu0 %v2639
  %v2641 = vpop.f32.mrf.mxu0
  %v2642 = vadd.f32 %v2269, %v2641
  %v2643 = vpop.f32.mrf.mxu0
  %2644 = vmatprep.mubr.f32.mxu0 0.0
  %v2645 = vand.u32 %v2052, 4294901760
  %2646 = vmatmul.mubr.f32.gmra.mxu0 %v2645
  %v2647 = vpop.f32.mrf.mxu0
  %v2648 = vadd.f32 %v2279, %v2647
  %v2649 = vpop.f32.mrf.mxu0
  %2650 = vmatprep.mubr.f32.mxu0 0.0
  %v2651 = vand.u32 %v2055, 4294901760
  %2652 = vmatmul.mubr.f32.gmra.mxu0 %v2651
  %v2653 = vpop.f32.mrf.mxu0
  %v2654 = vadd.f32 %v2289, %v2653
  %v2655 = vpop.f32.mrf.mxu0
  %2656 = vmatprep.mubr.f32.mxu0 0.0
  %v2657 = vand.u32 %v2058, 4294901760
  %2658 = vmatmul.mubr.f32.gmra.mxu0 %v2657
  %v2659 = vpop.f32.mrf.mxu0
  %v2660 = vadd.f32 %v2299, %v2659
  %v2661 = vpop.f32.mrf.mxu0
  %2662 = vmatprep.mubr.f32.mxu0 0.0
  %v2663 = vand.u32 %v2061, 4294901760
  %2664 = vmatmul.mubr.f32.gmra.mxu0 %v2663
  %v2665 = vpop.f32.mrf.mxu0
  %v2666 = vadd.f32 %v2309, %v2665
  %v2667 = vpop.f32.mrf.mxu0
  %2668 = vmatprep.mubr.f32.mxu0 0.0
  %v2669 = vand.u32 %v2064, 4294901760
  %2670 = vmatmul.mubr.f32.gmra.mxu0 %v2669
  %v2671 = vpop.f32.mrf.mxu0
  %v2672 = vadd.f32 %v2319, %v2671
  %v2673 = vpop.f32.mrf.mxu0
  %2674 = vmatprep.mubr.f32.mxu0 0.0
  %v2675 = vand.u32 %v2067, 4294901760
  %2676 = vmatmul.mubr.f32.gmra.mxu0 %v2675
  %v2677 = vpop.f32.mrf.mxu0
  %v2678 = vadd.f32 %v2329, %v2677
  %v2679 = vpop.f32.mrf.mxu0
  %2680 = vmatprep.mubr.f32.mxu0 0.0
  %v2681 = vand.u32 %v2070, 4294901760
  %2682 = vmatmul.mubr.f32.gmra.mxu0 %v2681
  %v2683 = vpop.f32.mrf.mxu0
  %v2684 = vadd.f32 %v2339, %v2683
  %v2685 = vpop.f32.mrf.mxu0
  %2686 = vmatprep.mubr.f32.mxu0 0.0
  %v2687 = vand.u32 %v2073, 4294901760
  %2688 = vmatmul.mubr.f32.gmra.mxu0 %v2687
  %v2689 = vpop.f32.mrf.mxu0
  %v2690 = vadd.f32 %v2349, %v2689
  %v2691 = vpop.f32.mrf.mxu0
  %2692 = vmatprep.mubr.f32.mxu0 0.0
  %v2693 = vand.u32 %v2076, 4294901760
  %2694 = vmatmul.mubr.f32.gmra.mxu0 %v2693
  %v2695 = vpop.f32.mrf.mxu0
  %v2696 = vadd.f32 %v2359, %v2695
  %v2697 = vpop.f32.mrf.mxu0
  %2698 = vmatprep.mubr.f32.mxu0 0.0
  %v2699 = vand.u32 %v2079, 4294901760
  %2700 = vmatmul.mubr.f32.gmra.mxu0 %v2699
  %v2701 = vpop.f32.mrf.mxu0
  %v2702 = vadd.f32 %v2369, %v2701
  %v2703 = vpop.f32.mrf.mxu0
  %2704 = vmatprep.mubr.f32.mxu0 0.0
  %v2705 = vand.u32 %v2082, 4294901760
  %2706 = vmatmul.mubr.f32.gmra.mxu0 %v2705
  %v2707 = vpop.f32.mrf.mxu0
  %v2708 = vadd.f32 %v2379, %v2707
  %v2709 = vpop.f32.mrf.mxu0
  %2710 = vmatprep.mubr.f32.mxu0 0.0
  %v2711 = vand.u32 %v2085, 4294901760
  %2712 = vmatmul.mubr.f32.gmra.mxu0 %v2711
  %v2713 = vpop.f32.mrf.mxu0
  %v2714 = vadd.f32 %v2389, %v2713
  %v2715 = vpop.f32.mrf.mxu0
  %2716 = vmatprep.mubr.f32.mxu0 0.0
  %v2717 = vand.u32 %v2088, 4294901760
  %2718 = vmatmul.mubr.f32.gmra.mxu0 %v2717
  %v2719 = vpop.f32.mrf.mxu0
  %v2720 = vadd.f32 %v2399, %v2719
  %v2721 = vpop.f32.mrf.mxu0
  %2722 = vmatprep.mubr.f32.mxu0 0.0
  %v2723 = vand.u32 %v2091, 4294901760
  %2724 = vmatmul.mubr.f32.gmra.mxu0 %v2723
  %v2725 = vpop.f32.mrf.mxu0
  %v2726 = vadd.f32 %v2409, %v2725
  %v2727 = vpop.f32.mrf.mxu0
  %2728 = vmatprep.mubr.f32.mxu0 0.0
  %v2729 = vand.u32 %v2094, 4294901760
  %2730 = vmatmul.mubr.f32.gmra.mxu0 %v2729
  %v2731 = vpop.f32.mrf.mxu0
  %v2732 = vadd.f32 %v2419, %v2731
  %v2733 = vpop.f32.mrf.mxu0
  %2734 = vmatprep.mubr.f32.mxu0 0.0
  %v2735 = vand.u32 %v2097, 4294901760
  %2736 = vmatmul.mubr.f32.gmra.mxu0 %v2735
  %v2737 = vpop.f32.mrf.mxu0
  %v2738 = vadd.f32 %v2429, %v2737
  %v2739 = vpop.f32.mrf.mxu0
  %2740 = vmatprep.mubr.f32.mxu0 0.0
  %v2741 = vand.u32 %v2100, 4294901760
  %2742 = vmatmul.mubr.f32.gmra.mxu0 %v2741
  %v2743 = vpop.f32.mrf.mxu0
  %v2744 = vadd.f32 %v2439, %v2743
  %v2745 = vpop.f32.mrf.mxu0
  %2746 = vmatprep.mubr.f32.mxu0 0.0
  %v2747 = vand.u32 %v2103, 4294901760
  %2748 = vmatmul.mubr.f32.gmra.mxu0 %v2747
  %v2749 = vpop.f32.mrf.mxu0
  %v2750 = vadd.f32 %v2449, %v2749
  %v2751 = vpop.f32.mrf.mxu0
  %2752 = vmatprep.mubr.f32.mxu0 0.0
  %v2753 = vand.u32 %v2106, 4294901760
  %2754 = vmatmul.mubr.f32.gmra.mxu0 %v2753
  %v2755 = vpop.f32.mrf.mxu0
  %v2756 = vadd.f32 %v2459, %v2755
  %v2757 = vpop.f32.mrf.mxu0
  %2758 = vmatprep.mubr.f32.mxu0 0.0
  %v2759 = vand.u32 %v2109, 4294901760
  %2760 = vmatmul.mubr.f32.gmra.mxu0 %v2759
  %v2761 = vpop.f32.mrf.mxu0
  %v2762 = vadd.f32 %v2469, %v2761
  %v2763 = vpop.f32.mrf.mxu0
  %2764 = vmatprep.mubr.f32.mxu0 0.0
  %v2765 = vand.u32 %v2112, 4294901760
  %2766 = vmatmul.mubr.f32.gmra.mxu0 %v2765
  %v2767 = vpop.f32.mrf.mxu0
  %v2768 = vadd.f32 %v2479, %v2767
  %v2769 = vpop.f32.mrf.mxu0
  %2770 = vmatprep.mubr.f32.mxu0 0.0
  %v2771 = vand.u32 %v2115, 4294901760
  %2772 = vmatmul.mubr.f32.gmra.mxu0 %v2771
  %v2773 = vpop.f32.mrf.mxu0
  %v2774 = vadd.f32 %v2489, %v2773
  %v2775 = vpop.f32.mrf.mxu0
  %2776 = vmatprep.mubr.f32.mxu0 0.0
  %v2777 = vand.u32 %v2118, 4294901760
  %2778 = vmatmul.mubr.f32.gmra.mxu0 %v2777
  %v2779 = vpop.f32.mrf.mxu0
  %v2780 = vadd.f32 %v2499, %v2779
  %v2781 = vpop.f32.mrf.mxu0
  %2782 = vmatprep.mubr.f32.mxu0 0.0
  %v2783 = vand.u32 %v2121, 4294901760
  %2784 = vmatmul.mubr.f32.gmra.mxu0 %v2783
  %v2785 = vpop.f32.mrf.mxu0
  %v2786 = vadd.f32 %v2509, %v2785
  %v2787 = vpop.f32.mrf.mxu0
  %2788 = vdwg.mxu0
  %2789 = vmatprep.subr.mxu0 0.0
  %2790 = vmatpush1.msra.mxu0 0.0
  %2791 = vmatprep.subr.mxu0 0.0
  %2792 = vmatpush1.msra.mxu0 0.0
  %2793 = vmatprep.subr.mxu0 0.0
  %2794 = vmatpush1.msra.mxu0 0.0
  %2795 = vmatprep.subr.mxu0 0.0
  %2796 = vmatpush1.msra.mxu0 0.0
  %2797 = vmatprep.subr.mxu0 0.0
  %2798 = vmatpush1.msra.mxu0 0.0
  %2799 = vmatprep.subr.mxu0 0.0
  %2800 = vmatpush1.msra.mxu0 0.0
  %2801 = vmatprep.subr.mxu0 0.0
  %2802 = vmatpush1.msra.mxu0 0.0
  %2803 = vmatprep.subr.mxu0 0.0
  %2804 = vmatpush1.msra.mxu0 0.0
  %2805 = vmatprep.subr.mxu0 0.0
  %2806 = vmatpush1.msra.mxu0 0.0
  %2807 = vmatprep.subr.mxu0 0.0
  %2808 = vmatpush1.msra.mxu0 0.0
  %2809 = vmatprep.subr.mxu0 0.0
  %2810 = vmatpush1.msra.mxu0 0.0
  %2811 = vmatprep.subr.mxu0 0.0
  %2812 = vmatpush1.msra.mxu0 0.0
  %2813 = vmatprep.subr.mxu0 0.0
  %v2814 = vand.u32 %v2019, 4294901760
  %v2815 = vsub.f32 %v2019, %v2814
  %2816 = vmatpush1.msra.mxu0 %v2815
  %2817 = vmatprep.subr.mxu0 0.0
  %v2818 = vand.u32 %v2018, 4294901760
  %v2819 = vsub.f32 %v2018, %v2818
  %2820 = vmatpush1.msra.mxu0 %v2819
  %2821 = vmatprep.subr.mxu0 0.0
  %v2822 = vand.u32 %v2017, 4294901760
  %v2823 = vsub.f32 %v2017, %v2822
  %2824 = vmatpush1.msra.mxu0 %v2823
  %2825 = vmatprep.subr.mxu0 0.0
  %v2826 = vand.u32 %v2016, 4294901760
  %v2827 = vsub.f32 %v2016, %v2826
  %2828 = vmatpush1.msra.mxu0 %v2827
  %2829 = vmatprep.subr.mxu0 0.0
  %2830 = vmatpush2.msra.mxu0 0.0
  %2831 = vmatprep.subr.mxu0 0.0
  %2832 = vmatpush2.msra.mxu0 0.0
  %2833 = vmatprep.subr.mxu0 0.0
  %2834 = vmatpush2.msra.mxu0 0.0
  %2835 = vmatprep.subr.mxu0 0.0
  %2836 = vmatpush2.msra.mxu0 0.0
  %2837 = vmatprep.subr.mxu0 0.0
  %2838 = vmatpush2.msra.mxu0 0.0
  %2839 = vmatprep.subr.mxu0 0.0
  %2840 = vmatpush2.msra.mxu0 0.0
  %2841 = vmatprep.subr.mxu0 0.0
  %2842 = vmatpush2.msra.mxu0 0.0
  %2843 = vmatprep.subr.mxu0 0.0
  %2844 = vmatpush2.msra.mxu0 0.0
  %2845 = vmatprep.subr.mxu0 0.0
  %2846 = vmatpush2.msra.mxu0 0.0
  %2847 = vmatprep.subr.mxu0 0.0
  %2848 = vmatpush2.msra.mxu0 0.0
  %2849 = vmatprep.subr.mxu0 0.0
  %2850 = vmatpush2.msra.mxu0 0.0
  %2851 = vmatprep.subr.mxu0 0.0
  %2852 = vmatpush2.msra.mxu0 0.0
  %2853 = vmatprep.subr.mxu0 0.0
  %2854 = vmatpush2.msra.mxu0 0.0
  %2855 = vmatprep.subr.mxu0 0.0
  %2856 = vmatpush2.msra.mxu0 0.0
  %2857 = vmatprep.subr.mxu0 0.0
  %2858 = vmatpush2.msra.mxu0 0.0
  %2859 = vmatprep.subr.mxu0 0.0
  %2860 = vmatpush2.msra.mxu0 0.0
  %2861 = vmatprep.mubr.f32.mxu0 0.0
  %v2862 = vand.u32 %v2028, 4294901760
  %v2863 = vsub.f32 %v2028, %v2862
  %2864 = vmatmul.mubr.f32.gmra.mxu0 %v2863
  %v2865 = vpop.f32.mrf.mxu0
  %v2866 = vadd.f32 %v2600, %v2865
  %v2867 = vpop.f32.mrf.mxu0
  %2868 = vmatprep.mubr.f32.mxu0 0.0
  %v2869 = vand.u32 %v2031, 4294901760
  %v2870 = vsub.f32 %v2031, %v2869
  %2871 = vmatmul.mubr.f32.gmra.mxu0 %v2870
  %v2872 = vpop.f32.mrf.mxu0
  %v2873 = vadd.f32 %v2606, %v2872
  %v2874 = vpop.f32.mrf.mxu0
  %2875 = vmatprep.mubr.f32.mxu0 0.0
  %v2876 = vand.u32 %v2034, 4294901760
  %v2877 = vsub.f32 %v2034, %v2876
  %2878 = vmatmul.mubr.f32.gmra.mxu0 %v2877
  %v2879 = vpop.f32.mrf.mxu0
  %v2880 = vadd.f32 %v2612, %v2879
  %v2881 = vpop.f32.mrf.mxu0
  %2882 = vmatprep.mubr.f32.mxu0 0.0
  %v2883 = vand.u32 %v2037, 4294901760
  %v2884 = vsub.f32 %v2037, %v2883
  %2885 = vmatmul.mubr.f32.gmra.mxu0 %v2884
  %v2886 = vpop.f32.mrf.mxu0
  %v2887 = vadd.f32 %v2618, %v2886
  %v2888 = vpop.f32.mrf.mxu0
  %2889 = vmatprep.mubr.f32.mxu0 0.0
  %v2890 = vand.u32 %v2040, 4294901760
  %v2891 = vsub.f32 %v2040, %v2890
  %2892 = vmatmul.mubr.f32.gmra.mxu0 %v2891
  %v2893 = vpop.f32.mrf.mxu0
  %v2894 = vadd.f32 %v2624, %v2893
  %v2895 = vpop.f32.mrf.mxu0
  %2896 = vmatprep.mubr.f32.mxu0 0.0
  %v2897 = vand.u32 %v2043, 4294901760
  %v2898 = vsub.f32 %v2043, %v2897
  %2899 = vmatmul.mubr.f32.gmra.mxu0 %v2898
  %v2900 = vpop.f32.mrf.mxu0
  %v2901 = vadd.f32 %v2630, %v2900
  %v2902 = vpop.f32.mrf.mxu0
  %2903 = vmatprep.mubr.f32.mxu0 0.0
  %v2904 = vand.u32 %v2046, 4294901760
  %v2905 = vsub.f32 %v2046, %v2904
  %2906 = vmatmul.mubr.f32.gmra.mxu0 %v2905
  %v2907 = vpop.f32.mrf.mxu0
  %v2908 = vadd.f32 %v2636, %v2907
  %v2909 = vpop.f32.mrf.mxu0
  %2910 = vmatprep.mubr.f32.mxu0 0.0
  %v2911 = vand.u32 %v2049, 4294901760
  %v2912 = vsub.f32 %v2049, %v2911
  %2913 = vmatmul.mubr.f32.gmra.mxu0 %v2912
  %v2914 = vpop.f32.mrf.mxu0
  %v2915 = vadd.f32 %v2642, %v2914
  %v2916 = vpop.f32.mrf.mxu0
  %2917 = vmatprep.mubr.f32.mxu0 0.0
  %v2918 = vand.u32 %v2052, 4294901760
  %v2919 = vsub.f32 %v2052, %v2918
  %2920 = vmatmul.mubr.f32.gmra.mxu0 %v2919
  %v2921 = vpop.f32.mrf.mxu0
  %v2922 = vadd.f32 %v2648, %v2921
  %v2923 = vpop.f32.mrf.mxu0
  %2924 = vmatprep.mubr.f32.mxu0 0.0
  %v2925 = vand.u32 %v2055, 4294901760
  %v2926 = vsub.f32 %v2055, %v2925
  %2927 = vmatmul.mubr.f32.gmra.mxu0 %v2926
  %v2928 = vpop.f32.mrf.mxu0
  %v2929 = vadd.f32 %v2654, %v2928
  %v2930 = vpop.f32.mrf.mxu0
  %2931 = vmatprep.mubr.f32.mxu0 0.0
  %v2932 = vand.u32 %v2058, 4294901760
  %v2933 = vsub.f32 %v2058, %v2932
  %2934 = vmatmul.mubr.f32.gmra.mxu0 %v2933
  %v2935 = vpop.f32.mrf.mxu0
  %v2936 = vadd.f32 %v2660, %v2935
  %v2937 = vpop.f32.mrf.mxu0
  %2938 = vmatprep.mubr.f32.mxu0 0.0
  %v2939 = vand.u32 %v2061, 4294901760
  %v2940 = vsub.f32 %v2061, %v2939
  %2941 = vmatmul.mubr.f32.gmra.mxu0 %v2940
  %v2942 = vpop.f32.mrf.mxu0
  %v2943 = vadd.f32 %v2666, %v2942
  %v2944 = vpop.f32.mrf.mxu0
  %2945 = vmatprep.mubr.f32.mxu0 0.0
  %v2946 = vand.u32 %v2064, 4294901760
  %v2947 = vsub.f32 %v2064, %v2946
  %2948 = vmatmul.mubr.f32.gmra.mxu0 %v2947
  %v2949 = vpop.f32.mrf.mxu0
  %v2950 = vadd.f32 %v2672, %v2949
  %v2951 = vpop.f32.mrf.mxu0
  %2952 = vmatprep.mubr.f32.mxu0 0.0
  %v2953 = vand.u32 %v2067, 4294901760
  %v2954 = vsub.f32 %v2067, %v2953
  %2955 = vmatmul.mubr.f32.gmra.mxu0 %v2954
  %v2956 = vpop.f32.mrf.mxu0
  %v2957 = vadd.f32 %v2678, %v2956
  %v2958 = vpop.f32.mrf.mxu0
  %2959 = vmatprep.mubr.f32.mxu0 0.0
  %v2960 = vand.u32 %v2070, 4294901760
  %v2961 = vsub.f32 %v2070, %v2960
  %2962 = vmatmul.mubr.f32.gmra.mxu0 %v2961
  %v2963 = vpop.f32.mrf.mxu0
  %v2964 = vadd.f32 %v2684, %v2963
  %v2965 = vpop.f32.mrf.mxu0
  %2966 = vmatprep.mubr.f32.mxu0 0.0
  %v2967 = vand.u32 %v2073, 4294901760
  %v2968 = vsub.f32 %v2073, %v2967
  %2969 = vmatmul.mubr.f32.gmra.mxu0 %v2968
  %v2970 = vpop.f32.mrf.mxu0
  %v2971 = vadd.f32 %v2690, %v2970
  %v2972 = vpop.f32.mrf.mxu0
  %2973 = vmatprep.mubr.f32.mxu0 0.0
  %v2974 = vand.u32 %v2076, 4294901760
  %v2975 = vsub.f32 %v2076, %v2974
  %2976 = vmatmul.mubr.f32.gmra.mxu0 %v2975
  %v2977 = vpop.f32.mrf.mxu0
  %v2978 = vadd.f32 %v2696, %v2977
  %v2979 = vpop.f32.mrf.mxu0
  %2980 = vmatprep.mubr.f32.mxu0 0.0
  %v2981 = vand.u32 %v2079, 4294901760
  %v2982 = vsub.f32 %v2079, %v2981
  %2983 = vmatmul.mubr.f32.gmra.mxu0 %v2982
  %v2984 = vpop.f32.mrf.mxu0
  %v2985 = vadd.f32 %v2702, %v2984
  %v2986 = vpop.f32.mrf.mxu0
  %2987 = vmatprep.mubr.f32.mxu0 0.0
  %v2988 = vand.u32 %v2082, 4294901760
  %v2989 = vsub.f32 %v2082, %v2988
  %2990 = vmatmul.mubr.f32.gmra.mxu0 %v2989
  %v2991 = vpop.f32.mrf.mxu0
  %v2992 = vadd.f32 %v2708, %v2991
  %v2993 = vpop.f32.mrf.mxu0
  %2994 = vmatprep.mubr.f32.mxu0 0.0
  %v2995 = vand.u32 %v2085, 4294901760
  %v2996 = vsub.f32 %v2085, %v2995
  %2997 = vmatmul.mubr.f32.gmra.mxu0 %v2996
  %v2998 = vpop.f32.mrf.mxu0
  %v2999 = vadd.f32 %v2714, %v2998
  %v3000 = vpop.f32.mrf.mxu0
  %3001 = vmatprep.mubr.f32.mxu0 0.0
  %v3002 = vand.u32 %v2088, 4294901760
  %v3003 = vsub.f32 %v2088, %v3002
  %3004 = vmatmul.mubr.f32.gmra.mxu0 %v3003
  %v3005 = vpop.f32.mrf.mxu0
  %v3006 = vadd.f32 %v2720, %v3005
  %v3007 = vpop.f32.mrf.mxu0
  %3008 = vmatprep.mubr.f32.mxu0 0.0
  %v3009 = vand.u32 %v2091, 4294901760
  %v3010 = vsub.f32 %v2091, %v3009
  %3011 = vmatmul.mubr.f32.gmra.mxu0 %v3010
  %v3012 = vpop.f32.mrf.mxu0
  %v3013 = vadd.f32 %v2726, %v3012
  %v3014 = vpop.f32.mrf.mxu0
  %3015 = vmatprep.mubr.f32.mxu0 0.0
  %v3016 = vand.u32 %v2094, 4294901760
  %v3017 = vsub.f32 %v2094, %v3016
  %3018 = vmatmul.mubr.f32.gmra.mxu0 %v3017
  %v3019 = vpop.f32.mrf.mxu0
  %v3020 = vadd.f32 %v2732, %v3019
  %v3021 = vpop.f32.mrf.mxu0
  %3022 = vmatprep.mubr.f32.mxu0 0.0
  %v3023 = vand.u32 %v2097, 4294901760
  %v3024 = vsub.f32 %v2097, %v3023
  %3025 = vmatmul.mubr.f32.gmra.mxu0 %v3024
  %v3026 = vpop.f32.mrf.mxu0
  %v3027 = vadd.f32 %v2738, %v3026
  %v3028 = vpop.f32.mrf.mxu0
  %3029 = vmatprep.mubr.f32.mxu0 0.0
  %v3030 = vand.u32 %v2100, 4294901760
  %v3031 = vsub.f32 %v2100, %v3030
  %3032 = vmatmul.mubr.f32.gmra.mxu0 %v3031
  %v3033 = vpop.f32.mrf.mxu0
  %v3034 = vadd.f32 %v2744, %v3033
  %v3035 = vpop.f32.mrf.mxu0
  %3036 = vmatprep.mubr.f32.mxu0 0.0
  %v3037 = vand.u32 %v2103, 4294901760
  %v3038 = vsub.f32 %v2103, %v3037
  %3039 = vmatmul.mubr.f32.gmra.mxu0 %v3038
  %v3040 = vpop.f32.mrf.mxu0
  %v3041 = vadd.f32 %v2750, %v3040
  %v3042 = vpop.f32.mrf.mxu0
  %3043 = vmatprep.mubr.f32.mxu0 0.0
  %v3044 = vand.u32 %v2106, 4294901760
  %v3045 = vsub.f32 %v2106, %v3044
  %3046 = vmatmul.mubr.f32.gmra.mxu0 %v3045
  %v3047 = vpop.f32.mrf.mxu0
  %v3048 = vadd.f32 %v2756, %v3047
  %v3049 = vpop.f32.mrf.mxu0
  %3050 = vmatprep.mubr.f32.mxu0 0.0
  %v3051 = vand.u32 %v2109, 4294901760
  %v3052 = vsub.f32 %v2109, %v3051
  %3053 = vmatmul.mubr.f32.gmra.mxu0 %v3052
  %v3054 = vpop.f32.mrf.mxu0
  %v3055 = vadd.f32 %v2762, %v3054
  %v3056 = vpop.f32.mrf.mxu0
  %3057 = vmatprep.mubr.f32.mxu0 0.0
  %v3058 = vand.u32 %v2112, 4294901760
  %v3059 = vsub.f32 %v2112, %v3058
  %3060 = vmatmul.mubr.f32.gmra.mxu0 %v3059
  %v3061 = vpop.f32.mrf.mxu0
  %v3062 = vadd.f32 %v2768, %v3061
  %v3063 = vpop.f32.mrf.mxu0
  %3064 = vmatprep.mubr.f32.mxu0 0.0
  %v3065 = vand.u32 %v2115, 4294901760
  %v3066 = vsub.f32 %v2115, %v3065
  %3067 = vmatmul.mubr.f32.gmra.mxu0 %v3066
  %v3068 = vpop.f32.mrf.mxu0
  %v3069 = vadd.f32 %v2774, %v3068
  %v3070 = vpop.f32.mrf.mxu0
  %3071 = vmatprep.mubr.f32.mxu0 0.0
  %v3072 = vand.u32 %v2118, 4294901760
  %v3073 = vsub.f32 %v2118, %v3072
  %3074 = vmatmul.mubr.f32.gmra.mxu0 %v3073
  %v3075 = vpop.f32.mrf.mxu0
  %v3076 = vadd.f32 %v2780, %v3075
  %v3077 = vpop.f32.mrf.mxu0
  %3078 = vmatprep.mubr.f32.mxu0 0.0
  %v3079 = vand.u32 %v2121, 4294901760
  %v3080 = vsub.f32 %v2121, %v3079
  %3081 = vmatmul.mubr.f32.gmra.mxu0 %v3080
  %v3082 = vpop.f32.mrf.mxu0
  %v3083 = vadd.f32 %v2786, %v3082
  %v3084 = vpop.f32.mrf.mxu0
  %3085 = vdwg.mxu0
  %3086 = vmatprep.subr.mxu0 0.0
  %3087 = vmatpush1.msra.mxu0 0.0
  %3088 = vmatprep.subr.mxu0 0.0
  %3089 = vmatpush1.msra.mxu0 0.0
  %3090 = vmatprep.subr.mxu0 0.0
  %3091 = vmatpush1.msra.mxu0 0.0
  %3092 = vmatprep.subr.mxu0 0.0
  %3093 = vmatpush1.msra.mxu0 0.0
  %3094 = vmatprep.subr.mxu0 0.0
  %3095 = vmatpush1.msra.mxu0 0.0
  %3096 = vmatprep.subr.mxu0 0.0
  %3097 = vmatpush1.msra.mxu0 0.0
  %3098 = vmatprep.subr.mxu0 0.0
  %3099 = vmatpush1.msra.mxu0 0.0
  %3100 = vmatprep.subr.mxu0 0.0
  %3101 = vmatpush1.msra.mxu0 0.0
  %3102 = vmatprep.subr.mxu0 0.0
  %3103 = vmatpush1.msra.mxu0 0.0
  %3104 = vmatprep.subr.mxu0 0.0
  %3105 = vmatpush1.msra.mxu0 0.0
  %3106 = vmatprep.subr.mxu0 0.0
  %3107 = vmatpush1.msra.mxu0 0.0
  %3108 = vmatprep.subr.mxu0 0.0
  %3109 = vmatpush1.msra.mxu0 0.0
  %3110 = vmatprep.subr.mxu0 0.0
  %v3111 = vand.u32 %v2019, 4294901760
  %3112 = vmatpush1.msra.mxu0 %v3111
  %3113 = vmatprep.subr.mxu0 0.0
  %v3114 = vand.u32 %v2018, 4294901760
  %3115 = vmatpush1.msra.mxu0 %v3114
  %3116 = vmatprep.subr.mxu0 0.0
  %v3117 = vand.u32 %v2017, 4294901760
  %3118 = vmatpush1.msra.mxu0 %v3117
  %3119 = vmatprep.subr.mxu0 0.0
  %v3120 = vand.u32 %v2016, 4294901760
  %3121 = vmatpush1.msra.mxu0 %v3120
  %3122 = vmatprep.subr.mxu0 0.0
  %3123 = vmatpush2.msra.mxu0 0.0
  %3124 = vmatprep.subr.mxu0 0.0
  %3125 = vmatpush2.msra.mxu0 0.0
  %3126 = vmatprep.subr.mxu0 0.0
  %3127 = vmatpush2.msra.mxu0 0.0
  %3128 = vmatprep.subr.mxu0 0.0
  %3129 = vmatpush2.msra.mxu0 0.0
  %3130 = vmatprep.subr.mxu0 0.0
  %3131 = vmatpush2.msra.mxu0 0.0
  %3132 = vmatprep.subr.mxu0 0.0
  %3133 = vmatpush2.msra.mxu0 0.0
  %3134 = vmatprep.subr.mxu0 0.0
  %3135 = vmatpush2.msra.mxu0 0.0
  %3136 = vmatprep.subr.mxu0 0.0
  %3137 = vmatpush2.msra.mxu0 0.0
  %3138 = vmatprep.subr.mxu0 0.0
  %3139 = vmatpush2.msra.mxu0 0.0
  %3140 = vmatprep.subr.mxu0 0.0
  %3141 = vmatpush2.msra.mxu0 0.0
  %3142 = vmatprep.subr.mxu0 0.0
  %3143 = vmatpush2.msra.mxu0 0.0
  %3144 = vmatprep.subr.mxu0 0.0
  %3145 = vmatpush2.msra.mxu0 0.0
  %3146 = vmatprep.subr.mxu0 0.0
  %3147 = vmatpush2.msra.mxu0 0.0
  %3148 = vmatprep.subr.mxu0 0.0
  %3149 = vmatpush2.msra.mxu0 0.0
  %3150 = vmatprep.subr.mxu0 0.0
  %3151 = vmatpush2.msra.mxu0 0.0
  %3152 = vmatprep.subr.mxu0 0.0
  %3153 = vmatpush2.msra.mxu0 0.0
  %3154 = vmatprep.mubr.f32.mxu0 0.0
  %v3155 = vand.u32 %v2028, 4294901760
  %v3156 = vsub.f32 %v2028, %v3155
  %v3157 = vand.u32 %v3156, 4294901760
  %3158 = vmatmul.mubr.f32.gmra.mxu0 %v3157
  %v3159 = vpop.f32.mrf.mxu0
  %v3160 = vadd.f32 %v2866, %v3159
  %v3161 = vpop.f32.mrf.mxu0
  %3162 = vmatprep.mubr.f32.mxu0 0.0
  %v3163 = vand.u32 %v2031, 4294901760
  %v3164 = vsub.f32 %v2031, %v3163
  %v3165 = vand.u32 %v3164, 4294901760
  %3166 = vmatmul.mubr.f32.gmra.mxu0 %v3165
  %v3167 = vpop.f32.mrf.mxu0
  %v3168 = vadd.f32 %v2873, %v3167
  %v3169 = vpop.f32.mrf.mxu0
  %3170 = vmatprep.mubr.f32.mxu0 0.0
  %v3171 = vand.u32 %v2034, 4294901760
  %v3172 = vsub.f32 %v2034, %v3171
  %v3173 = vand.u32 %v3172, 4294901760
  %3174 = vmatmul.mubr.f32.gmra.mxu0 %v3173
  %v3175 = vpop.f32.mrf.mxu0
  %v3176 = vadd.f32 %v2880, %v3175
  %v3177 = vpop.f32.mrf.mxu0
  %3178 = vmatprep.mubr.f32.mxu0 0.0
  %v3179 = vand.u32 %v2037, 4294901760
  %v3180 = vsub.f32 %v2037, %v3179
  %v3181 = vand.u32 %v3180, 4294901760
  %3182 = vmatmul.mubr.f32.gmra.mxu0 %v3181
  %v3183 = vpop.f32.mrf.mxu0
  %v3184 = vadd.f32 %v2887, %v3183
  %v3185 = vpop.f32.mrf.mxu0
  %3186 = vmatprep.mubr.f32.mxu0 0.0
  %v3187 = vand.u32 %v2040, 4294901760
  %v3188 = vsub.f32 %v2040, %v3187
  %v3189 = vand.u32 %v3188, 4294901760
  %3190 = vmatmul.mubr.f32.gmra.mxu0 %v3189
  %v3191 = vpop.f32.mrf.mxu0
  %v3192 = vadd.f32 %v2894, %v3191
  %v3193 = vpop.f32.mrf.mxu0
  %3194 = vmatprep.mubr.f32.mxu0 0.0
  %v3195 = vand.u32 %v2043, 4294901760
  %v3196 = vsub.f32 %v2043, %v3195
  %v3197 = vand.u32 %v3196, 4294901760
  %3198 = vmatmul.mubr.f32.gmra.mxu0 %v3197
  %v3199 = vpop.f32.mrf.mxu0
  %v3200 = vadd.f32 %v2901, %v3199
  %v3201 = vpop.f32.mrf.mxu0
  %3202 = vmatprep.mubr.f32.mxu0 0.0
  %v3203 = vand.u32 %v2046, 4294901760
  %v3204 = vsub.f32 %v2046, %v3203
  %v3205 = vand.u32 %v3204, 4294901760
  %3206 = vmatmul.mubr.f32.gmra.mxu0 %v3205
  %v3207 = vpop.f32.mrf.mxu0
  %v3208 = vadd.f32 %v2908, %v3207
  %v3209 = vpop.f32.mrf.mxu0
  %3210 = vmatprep.mubr.f32.mxu0 0.0
  %v3211 = vand.u32 %v2049, 4294901760
  %v3212 = vsub.f32 %v2049, %v3211
  %v3213 = vand.u32 %v3212, 4294901760
  %3214 = vmatmul.mubr.f32.gmra.mxu0 %v3213
  %v3215 = vpop.f32.mrf.mxu0
  %v3216 = vadd.f32 %v2915, %v3215
  %v3217 = vpop.f32.mrf.mxu0
  %3218 = vmatprep.mubr.f32.mxu0 0.0
  %v3219 = vand.u32 %v2052, 4294901760
  %v3220 = vsub.f32 %v2052, %v3219
  %v3221 = vand.u32 %v3220, 4294901760
  %3222 = vmatmul.mubr.f32.gmra.mxu0 %v3221
  %v3223 = vpop.f32.mrf.mxu0
  %v3224 = vadd.f32 %v2922, %v3223
  %v3225 = vpop.f32.mrf.mxu0
  %3226 = vmatprep.mubr.f32.mxu0 0.0
  %v3227 = vand.u32 %v2055, 4294901760
  %v3228 = vsub.f32 %v2055, %v3227
  %v3229 = vand.u32 %v3228, 4294901760
  %3230 = vmatmul.mubr.f32.gmra.mxu0 %v3229
  %v3231 = vpop.f32.mrf.mxu0
  %v3232 = vadd.f32 %v2929, %v3231
  %v3233 = vpop.f32.mrf.mxu0
  %3234 = vmatprep.mubr.f32.mxu0 0.0
  %v3235 = vand.u32 %v2058, 4294901760
  %v3236 = vsub.f32 %v2058, %v3235
  %v3237 = vand.u32 %v3236, 4294901760
  %3238 = vmatmul.mubr.f32.gmra.mxu0 %v3237
  %v3239 = vpop.f32.mrf.mxu0
  %v3240 = vadd.f32 %v2936, %v3239
  %v3241 = vpop.f32.mrf.mxu0
  %3242 = vmatprep.mubr.f32.mxu0 0.0
  %v3243 = vand.u32 %v2061, 4294901760
  %v3244 = vsub.f32 %v2061, %v3243
  %v3245 = vand.u32 %v3244, 4294901760
  %3246 = vmatmul.mubr.f32.gmra.mxu0 %v3245
  %v3247 = vpop.f32.mrf.mxu0
  %v3248 = vadd.f32 %v2943, %v3247
  %v3249 = vpop.f32.mrf.mxu0
  %3250 = vmatprep.mubr.f32.mxu0 0.0
  %v3251 = vand.u32 %v2064, 4294901760
  %v3252 = vsub.f32 %v2064, %v3251
  %v3253 = vand.u32 %v3252, 4294901760
  %3254 = vmatmul.mubr.f32.gmra.mxu0 %v3253
  %v3255 = vpop.f32.mrf.mxu0
  %v3256 = vadd.f32 %v2950, %v3255
  %v3257 = vpop.f32.mrf.mxu0
  %3258 = vmatprep.mubr.f32.mxu0 0.0
  %v3259 = vand.u32 %v2067, 4294901760
  %v3260 = vsub.f32 %v2067, %v3259
  %v3261 = vand.u32 %v3260, 4294901760
  %3262 = vmatmul.mubr.f32.gmra.mxu0 %v3261
  %v3263 = vpop.f32.mrf.mxu0
  %v3264 = vadd.f32 %v2957, %v3263
  %v3265 = vpop.f32.mrf.mxu0
  %3266 = vmatprep.mubr.f32.mxu0 0.0
  %v3267 = vand.u32 %v2070, 4294901760
  %v3268 = vsub.f32 %v2070, %v3267
  %v3269 = vand.u32 %v3268, 4294901760
  %3270 = vmatmul.mubr.f32.gmra.mxu0 %v3269
  %v3271 = vpop.f32.mrf.mxu0
  %v3272 = vadd.f32 %v2964, %v3271
  %v3273 = vpop.f32.mrf.mxu0
  %3274 = vmatprep.mubr.f32.mxu0 0.0
  %v3275 = vand.u32 %v2073, 4294901760
  %v3276 = vsub.f32 %v2073, %v3275
  %v3277 = vand.u32 %v3276, 4294901760
  %3278 = vmatmul.mubr.f32.gmra.mxu0 %v3277
  %v3279 = vpop.f32.mrf.mxu0
  %v3280 = vadd.f32 %v2971, %v3279
  %v3281 = vpop.f32.mrf.mxu0
  %3282 = vmatprep.mubr.f32.mxu0 0.0
  %v3283 = vand.u32 %v2076, 4294901760
  %v3284 = vsub.f32 %v2076, %v3283
  %v3285 = vand.u32 %v3284, 4294901760
  %3286 = vmatmul.mubr.f32.gmra.mxu0 %v3285
  %v3287 = vpop.f32.mrf.mxu0
  %v3288 = vadd.f32 %v2978, %v3287
  %v3289 = vpop.f32.mrf.mxu0
  %3290 = vmatprep.mubr.f32.mxu0 0.0
  %v3291 = vand.u32 %v2079, 4294901760
  %v3292 = vsub.f32 %v2079, %v3291
  %v3293 = vand.u32 %v3292, 4294901760
  %3294 = vmatmul.mubr.f32.gmra.mxu0 %v3293
  %v3295 = vpop.f32.mrf.mxu0
  %v3296 = vadd.f32 %v2985, %v3295
  %v3297 = vpop.f32.mrf.mxu0
  %3298 = vmatprep.mubr.f32.mxu0 0.0
  %v3299 = vand.u32 %v2082, 4294901760
  %v3300 = vsub.f32 %v2082, %v3299
  %v3301 = vand.u32 %v3300, 4294901760
  %3302 = vmatmul.mubr.f32.gmra.mxu0 %v3301
  %v3303 = vpop.f32.mrf.mxu0
  %v3304 = vadd.f32 %v2992, %v3303
  %v3305 = vpop.f32.mrf.mxu0
  %3306 = vmatprep.mubr.f32.mxu0 0.0
  %v3307 = vand.u32 %v2085, 4294901760
  %v3308 = vsub.f32 %v2085, %v3307
  %v3309 = vand.u32 %v3308, 4294901760
  %3310 = vmatmul.mubr.f32.gmra.mxu0 %v3309
  %v3311 = vpop.f32.mrf.mxu0
  %v3312 = vadd.f32 %v2999, %v3311
  %v3313 = vpop.f32.mrf.mxu0
  %3314 = vmatprep.mubr.f32.mxu0 0.0
  %v3315 = vand.u32 %v2088, 4294901760
  %v3316 = vsub.f32 %v2088, %v3315
  %v3317 = vand.u32 %v3316, 4294901760
  %3318 = vmatmul.mubr.f32.gmra.mxu0 %v3317
  %v3319 = vpop.f32.mrf.mxu0
  %v3320 = vadd.f32 %v3006, %v3319
  %v3321 = vpop.f32.mrf.mxu0
  %3322 = vmatprep.mubr.f32.mxu0 0.0
  %v3323 = vand.u32 %v2091, 4294901760
  %v3324 = vsub.f32 %v2091, %v3323
  %v3325 = vand.u32 %v3324, 4294901760
  %3326 = vmatmul.mubr.f32.gmra.mxu0 %v3325
  %v3327 = vpop.f32.mrf.mxu0
  %v3328 = vadd.f32 %v3013, %v3327
  %v3329 = vpop.f32.mrf.mxu0
  %3330 = vmatprep.mubr.f32.mxu0 0.0
  %v3331 = vand.u32 %v2094, 4294901760
  %v3332 = vsub.f32 %v2094, %v3331
  %v3333 = vand.u32 %v3332, 4294901760
  %3334 = vmatmul.mubr.f32.gmra.mxu0 %v3333
  %v3335 = vpop.f32.mrf.mxu0
  %v3336 = vadd.f32 %v3020, %v3335
  %v3337 = vpop.f32.mrf.mxu0
  %3338 = vmatprep.mubr.f32.mxu0 0.0
  %v3339 = vand.u32 %v2097, 4294901760
  %v3340 = vsub.f32 %v2097, %v3339
  %v3341 = vand.u32 %v3340, 4294901760
  %3342 = vmatmul.mubr.f32.gmra.mxu0 %v3341
  %v3343 = vpop.f32.mrf.mxu0
  %v3344 = vadd.f32 %v3027, %v3343
  %v3345 = vpop.f32.mrf.mxu0
  %3346 = vmatprep.mubr.f32.mxu0 0.0
  %v3347 = vand.u32 %v2100, 4294901760
  %v3348 = vsub.f32 %v2100, %v3347
  %v3349 = vand.u32 %v3348, 4294901760
  %3350 = vmatmul.mubr.f32.gmra.mxu0 %v3349
  %v3351 = vpop.f32.mrf.mxu0
  %v3352 = vadd.f32 %v3034, %v3351
  %v3353 = vpop.f32.mrf.mxu0
  %3354 = vmatprep.mubr.f32.mxu0 0.0
  %v3355 = vand.u32 %v2103, 4294901760
  %v3356 = vsub.f32 %v2103, %v3355
  %v3357 = vand.u32 %v3356, 4294901760
  %3358 = vmatmul.mubr.f32.gmra.mxu0 %v3357
  %v3359 = vpop.f32.mrf.mxu0
  %v3360 = vadd.f32 %v3041, %v3359
  %v3361 = vpop.f32.mrf.mxu0
  %3362 = vmatprep.mubr.f32.mxu0 0.0
  %v3363 = vand.u32 %v2106, 4294901760
  %v3364 = vsub.f32 %v2106, %v3363
  %v3365 = vand.u32 %v3364, 4294901760
  %3366 = vmatmul.mubr.f32.gmra.mxu0 %v3365
  %v3367 = vpop.f32.mrf.mxu0
  %v3368 = vadd.f32 %v3048, %v3367
  %v3369 = vpop.f32.mrf.mxu0
  %3370 = vmatprep.mubr.f32.mxu0 0.0
  %v3371 = vand.u32 %v2109, 4294901760
  %v3372 = vsub.f32 %v2109, %v3371
  %v3373 = vand.u32 %v3372, 4294901760
  %3374 = vmatmul.mubr.f32.gmra.mxu0 %v3373
  %v3375 = vpop.f32.mrf.mxu0
  %v3376 = vadd.f32 %v3055, %v3375
  %v3377 = vpop.f32.mrf.mxu0
  %3378 = vmatprep.mubr.f32.mxu0 0.0
  %v3379 = vand.u32 %v2112, 4294901760
  %v3380 = vsub.f32 %v2112, %v3379
  %v3381 = vand.u32 %v3380, 4294901760
  %3382 = vmatmul.mubr.f32.gmra.mxu0 %v3381
  %v3383 = vpop.f32.mrf.mxu0
  %v3384 = vadd.f32 %v3062, %v3383
  %v3385 = vpop.f32.mrf.mxu0
  %3386 = vmatprep.mubr.f32.mxu0 0.0
  %v3387 = vand.u32 %v2115, 4294901760
  %v3388 = vsub.f32 %v2115, %v3387
  %v3389 = vand.u32 %v3388, 4294901760
  %3390 = vmatmul.mubr.f32.gmra.mxu0 %v3389
  %v3391 = vpop.f32.mrf.mxu0
  %v3392 = vadd.f32 %v3069, %v3391
  %v3393 = vpop.f32.mrf.mxu0
  %3394 = vmatprep.mubr.f32.mxu0 0.0
  %v3395 = vand.u32 %v2118, 4294901760
  %v3396 = vsub.f32 %v2118, %v3395
  %v3397 = vand.u32 %v3396, 4294901760
  %3398 = vmatmul.mubr.f32.gmra.mxu0 %v3397
  %v3399 = vpop.f32.mrf.mxu0
  %v3400 = vadd.f32 %v3076, %v3399
  %v3401 = vpop.f32.mrf.mxu0
  %3402 = vmatprep.mubr.f32.mxu0 0.0
  %v3403 = vand.u32 %v2121, 4294901760
  %v3404 = vsub.f32 %v2121, %v3403
  %v3405 = vand.u32 %v3404, 4294901760
  %3406 = vmatmul.mubr.f32.gmra.mxu0 %v3405
  %v3407 = vpop.f32.mrf.mxu0
  %v3408 = vadd.f32 %v3083, %v3407
  %v3409 = vpop.f32.mrf.mxu0
  %3410 = vdwg.mxu0
  %3411 = vmatprep.subr.mxu0 0.0
  %3412 = vmatpush1.msra.mxu0 0.0
  %3413 = vmatprep.subr.mxu0 0.0
  %3414 = vmatpush1.msra.mxu0 0.0
  %3415 = vmatprep.subr.mxu0 0.0
  %3416 = vmatpush1.msra.mxu0 0.0
  %3417 = vmatprep.subr.mxu0 0.0
  %3418 = vmatpush1.msra.mxu0 0.0
  %3419 = vmatprep.subr.mxu0 0.0
  %3420 = vmatpush1.msra.mxu0 0.0
  %3421 = vmatprep.subr.mxu0 0.0
  %3422 = vmatpush1.msra.mxu0 0.0
  %3423 = vmatprep.subr.mxu0 0.0
  %3424 = vmatpush1.msra.mxu0 0.0
  %3425 = vmatprep.subr.mxu0 0.0
  %3426 = vmatpush1.msra.mxu0 0.0
  %3427 = vmatprep.subr.mxu0 0.0
  %3428 = vmatpush1.msra.mxu0 0.0
  %3429 = vmatprep.subr.mxu0 0.0
  %3430 = vmatpush1.msra.mxu0 0.0
  %3431 = vmatprep.subr.mxu0 0.0
  %3432 = vmatpush1.msra.mxu0 0.0
  %3433 = vmatprep.subr.mxu0 0.0
  %3434 = vmatpush1.msra.mxu0 0.0
  %3435 = vmatprep.subr.mxu0 0.0
  %v3436 = vand.u32 %v2019, 4294901760
  %v3437 = vsub.f32 %v2019, %v3436
  %v3438 = vand.u32 %v3437, 4294901760
  %3439 = vmatpush1.msra.mxu0 %v3438
  %3440 = vmatprep.subr.mxu0 0.0
  %v3441 = vand.u32 %v2018, 4294901760
  %v3442 = vsub.f32 %v2018, %v3441
  %v3443 = vand.u32 %v3442, 4294901760
  %3444 = vmatpush1.msra.mxu0 %v3443
  %3445 = vmatprep.subr.mxu0 0.0
  %v3446 = vand.u32 %v2017, 4294901760
  %v3447 = vsub.f32 %v2017, %v3446
  %v3448 = vand.u32 %v3447, 4294901760
  %3449 = vmatpush1.msra.mxu0 %v3448
  %3450 = vmatprep.subr.mxu0 0.0
  %v3451 = vand.u32 %v2016, 4294901760
  %v3452 = vsub.f32 %v2016, %v3451
  %v3453 = vand.u32 %v3452, 4294901760
  %3454 = vmatpush1.msra.mxu0 %v3453
  %3455 = vmatprep.subr.mxu0 0.0
  %3456 = vmatpush2.msra.mxu0 0.0
  %3457 = vmatprep.subr.mxu0 0.0
  %3458 = vmatpush2.msra.mxu0 0.0
  %3459 = vmatprep.subr.mxu0 0.0
  %3460 = vmatpush2.msra.mxu0 0.0
  %3461 = vmatprep.subr.mxu0 0.0
  %3462 = vmatpush2.msra.mxu0 0.0
  %3463 = vmatprep.subr.mxu0 0.0
  %3464 = vmatpush2.msra.mxu0 0.0
  %3465 = vmatprep.subr.mxu0 0.0
  %3466 = vmatpush2.msra.mxu0 0.0
  %3467 = vmatprep.subr.mxu0 0.0
  %3468 = vmatpush2.msra.mxu0 0.0
  %3469 = vmatprep.subr.mxu0 0.0
  %3470 = vmatpush2.msra.mxu0 0.0
  %3471 = vmatprep.subr.mxu0 0.0
  %3472 = vmatpush2.msra.mxu0 0.0
  %3473 = vmatprep.subr.mxu0 0.0
  %3474 = vmatpush2.msra.mxu0 0.0
  %3475 = vmatprep.subr.mxu0 0.0
  %3476 = vmatpush2.msra.mxu0 0.0
  %3477 = vmatprep.subr.mxu0 0.0
  %3478 = vmatpush2.msra.mxu0 0.0
  %3479 = vmatprep.subr.mxu0 0.0
  %3480 = vmatpush2.msra.mxu0 0.0
  %3481 = vmatprep.subr.mxu0 0.0
  %3482 = vmatpush2.msra.mxu0 0.0
  %3483 = vmatprep.subr.mxu0 0.0
  %3484 = vmatpush2.msra.mxu0 0.0
  %3485 = vmatprep.subr.mxu0 0.0
  %3486 = vmatpush2.msra.mxu0 0.0
  %3487 = vmatprep.mubr.f32.mxu0 0.0
  %v3488 = vand.u32 %v2028, 4294901760
  %3489 = vmatmul.mubr.f32.gmra.mxu0 %v3488
  %v3490 = vpop.f32.mrf.mxu0
  %v3491 = vadd.f32 %v3160, %v3490
  %v3492 = vpop.f32.mrf.mxu0
  %3493 = vmatprep.mubr.f32.mxu0 0.0
  %v3494 = vand.u32 %v2031, 4294901760
  %3495 = vmatmul.mubr.f32.gmra.mxu0 %v3494
  %v3496 = vpop.f32.mrf.mxu0
  %v3497 = vadd.f32 %v3168, %v3496
  %v3498 = vpop.f32.mrf.mxu0
  %3499 = vmatprep.mubr.f32.mxu0 0.0
  %v3500 = vand.u32 %v2034, 4294901760
  %3501 = vmatmul.mubr.f32.gmra.mxu0 %v3500
  %v3502 = vpop.f32.mrf.mxu0
  %v3503 = vadd.f32 %v3176, %v3502
  %v3504 = vpop.f32.mrf.mxu0
  %3505 = vmatprep.mubr.f32.mxu0 0.0
  %v3506 = vand.u32 %v2037, 4294901760
  %3507 = vmatmul.mubr.f32.gmra.mxu0 %v3506
  %v3508 = vpop.f32.mrf.mxu0
  %v3509 = vadd.f32 %v3184, %v3508
  %v3510 = vpop.f32.mrf.mxu0
  %3511 = vmatprep.mubr.f32.mxu0 0.0
  %v3512 = vand.u32 %v2040, 4294901760
  %3513 = vmatmul.mubr.f32.gmra.mxu0 %v3512
  %v3514 = vpop.f32.mrf.mxu0
  %v3515 = vadd.f32 %v3192, %v3514
  %v3516 = vpop.f32.mrf.mxu0
  %3517 = vmatprep.mubr.f32.mxu0 0.0
  %v3518 = vand.u32 %v2043, 4294901760
  %3519 = vmatmul.mubr.f32.gmra.mxu0 %v3518
  %v3520 = vpop.f32.mrf.mxu0
  %v3521 = vadd.f32 %v3200, %v3520
  %v3522 = vpop.f32.mrf.mxu0
  %3523 = vmatprep.mubr.f32.mxu0 0.0
  %v3524 = vand.u32 %v2046, 4294901760
  %3525 = vmatmul.mubr.f32.gmra.mxu0 %v3524
  %v3526 = vpop.f32.mrf.mxu0
  %v3527 = vadd.f32 %v3208, %v3526
  %v3528 = vpop.f32.mrf.mxu0
  %3529 = vmatprep.mubr.f32.mxu0 0.0
  %v3530 = vand.u32 %v2049, 4294901760
  %3531 = vmatmul.mubr.f32.gmra.mxu0 %v3530
  %v3532 = vpop.f32.mrf.mxu0
  %v3533 = vadd.f32 %v3216, %v3532
  %v3534 = vpop.f32.mrf.mxu0
  %3535 = vmatprep.mubr.f32.mxu0 0.0
  %v3536 = vand.u32 %v2052, 4294901760
  %3537 = vmatmul.mubr.f32.gmra.mxu0 %v3536
  %v3538 = vpop.f32.mrf.mxu0
  %v3539 = vadd.f32 %v3224, %v3538
  %v3540 = vpop.f32.mrf.mxu0
  %3541 = vmatprep.mubr.f32.mxu0 0.0
  %v3542 = vand.u32 %v2055, 4294901760
  %3543 = vmatmul.mubr.f32.gmra.mxu0 %v3542
  %v3544 = vpop.f32.mrf.mxu0
  %v3545 = vadd.f32 %v3232, %v3544
  %v3546 = vpop.f32.mrf.mxu0
  %3547 = vmatprep.mubr.f32.mxu0 0.0
  %v3548 = vand.u32 %v2058, 4294901760
  %3549 = vmatmul.mubr.f32.gmra.mxu0 %v3548
  %v3550 = vpop.f32.mrf.mxu0
  %v3551 = vadd.f32 %v3240, %v3550
  %v3552 = vpop.f32.mrf.mxu0
  %3553 = vmatprep.mubr.f32.mxu0 0.0
  %v3554 = vand.u32 %v2061, 4294901760
  %3555 = vmatmul.mubr.f32.gmra.mxu0 %v3554
  %v3556 = vpop.f32.mrf.mxu0
  %v3557 = vadd.f32 %v3248, %v3556
  %v3558 = vpop.f32.mrf.mxu0
  %3559 = vmatprep.mubr.f32.mxu0 0.0
  %v3560 = vand.u32 %v2064, 4294901760
  %3561 = vmatmul.mubr.f32.gmra.mxu0 %v3560
  %v3562 = vpop.f32.mrf.mxu0
  %v3563 = vadd.f32 %v3256, %v3562
  %v3564 = vpop.f32.mrf.mxu0
  %3565 = vmatprep.mubr.f32.mxu0 0.0
  %v3566 = vand.u32 %v2067, 4294901760
  %3567 = vmatmul.mubr.f32.gmra.mxu0 %v3566
  %v3568 = vpop.f32.mrf.mxu0
  %v3569 = vadd.f32 %v3264, %v3568
  %v3570 = vpop.f32.mrf.mxu0
  %3571 = vmatprep.mubr.f32.mxu0 0.0
  %v3572 = vand.u32 %v2070, 4294901760
  %3573 = vmatmul.mubr.f32.gmra.mxu0 %v3572
  %v3574 = vpop.f32.mrf.mxu0
  %v3575 = vadd.f32 %v3272, %v3574
  %v3576 = vpop.f32.mrf.mxu0
  %3577 = vmatprep.mubr.f32.mxu0 0.0
  %v3578 = vand.u32 %v2073, 4294901760
  %3579 = vmatmul.mubr.f32.gmra.mxu0 %v3578
  %v3580 = vpop.f32.mrf.mxu0
  %v3581 = vadd.f32 %v3280, %v3580
  %v3582 = vpop.f32.mrf.mxu0
  %3583 = vmatprep.mubr.f32.mxu0 0.0
  %v3584 = vand.u32 %v2076, 4294901760
  %3585 = vmatmul.mubr.f32.gmra.mxu0 %v3584
  %v3586 = vpop.f32.mrf.mxu0
  %v3587 = vadd.f32 %v3288, %v3586
  %v3588 = vpop.f32.mrf.mxu0
  %3589 = vmatprep.mubr.f32.mxu0 0.0
  %v3590 = vand.u32 %v2079, 4294901760
  %3591 = vmatmul.mubr.f32.gmra.mxu0 %v3590
  %v3592 = vpop.f32.mrf.mxu0
  %v3593 = vadd.f32 %v3296, %v3592
  %v3594 = vpop.f32.mrf.mxu0
  %3595 = vmatprep.mubr.f32.mxu0 0.0
  %v3596 = vand.u32 %v2082, 4294901760
  %3597 = vmatmul.mubr.f32.gmra.mxu0 %v3596
  %v3598 = vpop.f32.mrf.mxu0
  %v3599 = vadd.f32 %v3304, %v3598
  %v3600 = vpop.f32.mrf.mxu0
  %3601 = vmatprep.mubr.f32.mxu0 0.0
  %v3602 = vand.u32 %v2085, 4294901760
  %3603 = vmatmul.mubr.f32.gmra.mxu0 %v3602
  %v3604 = vpop.f32.mrf.mxu0
  %v3605 = vadd.f32 %v3312, %v3604
  %v3606 = vpop.f32.mrf.mxu0
  %3607 = vmatprep.mubr.f32.mxu0 0.0
  %v3608 = vand.u32 %v2088, 4294901760
  %3609 = vmatmul.mubr.f32.gmra.mxu0 %v3608
  %v3610 = vpop.f32.mrf.mxu0
  %v3611 = vadd.f32 %v3320, %v3610
  %v3612 = vpop.f32.mrf.mxu0
  %3613 = vmatprep.mubr.f32.mxu0 0.0
  %v3614 = vand.u32 %v2091, 4294901760
  %3615 = vmatmul.mubr.f32.gmra.mxu0 %v3614
  %v3616 = vpop.f32.mrf.mxu0
  %v3617 = vadd.f32 %v3328, %v3616
  %v3618 = vpop.f32.mrf.mxu0
  %3619 = vmatprep.mubr.f32.mxu0 0.0
  %v3620 = vand.u32 %v2094, 4294901760
  %3621 = vmatmul.mubr.f32.gmra.mxu0 %v3620
  %v3622 = vpop.f32.mrf.mxu0
  %v3623 = vadd.f32 %v3336, %v3622
  %v3624 = vpop.f32.mrf.mxu0
  %3625 = vmatprep.mubr.f32.mxu0 0.0
  %v3626 = vand.u32 %v2097, 4294901760
  %3627 = vmatmul.mubr.f32.gmra.mxu0 %v3626
  %v3628 = vpop.f32.mrf.mxu0
  %v3629 = vadd.f32 %v3344, %v3628
  %v3630 = vpop.f32.mrf.mxu0
  %3631 = vmatprep.mubr.f32.mxu0 0.0
  %v3632 = vand.u32 %v2100, 4294901760
  %3633 = vmatmul.mubr.f32.gmra.mxu0 %v3632
  %v3634 = vpop.f32.mrf.mxu0
  %v3635 = vadd.f32 %v3352, %v3634
  %v3636 = vpop.f32.mrf.mxu0
  %3637 = vmatprep.mubr.f32.mxu0 0.0
  %v3638 = vand.u32 %v2103, 4294901760
  %3639 = vmatmul.mubr.f32.gmra.mxu0 %v3638
  %v3640 = vpop.f32.mrf.mxu0
  %v3641 = vadd.f32 %v3360, %v3640
  %v3642 = vpop.f32.mrf.mxu0
  %3643 = vmatprep.mubr.f32.mxu0 0.0
  %v3644 = vand.u32 %v2106, 4294901760
  %3645 = vmatmul.mubr.f32.gmra.mxu0 %v3644
  %v3646 = vpop.f32.mrf.mxu0
  %v3647 = vadd.f32 %v3368, %v3646
  %v3648 = vpop.f32.mrf.mxu0
  %3649 = vmatprep.mubr.f32.mxu0 0.0
  %v3650 = vand.u32 %v2109, 4294901760
  %3651 = vmatmul.mubr.f32.gmra.mxu0 %v3650
  %v3652 = vpop.f32.mrf.mxu0
  %v3653 = vadd.f32 %v3376, %v3652
  %v3654 = vpop.f32.mrf.mxu0
  %3655 = vmatprep.mubr.f32.mxu0 0.0
  %v3656 = vand.u32 %v2112, 4294901760
  %3657 = vmatmul.mubr.f32.gmra.mxu0 %v3656
  %v3658 = vpop.f32.mrf.mxu0
  %v3659 = vadd.f32 %v3384, %v3658
  %v3660 = vpop.f32.mrf.mxu0
  %3661 = vmatprep.mubr.f32.mxu0 0.0
  %v3662 = vand.u32 %v2115, 4294901760
  %3663 = vmatmul.mubr.f32.gmra.mxu0 %v3662
  %v3664 = vpop.f32.mrf.mxu0
  %v3665 = vadd.f32 %v3392, %v3664
  %v3666 = vpop.f32.mrf.mxu0
  %3667 = vmatprep.mubr.f32.mxu0 0.0
  %v3668 = vand.u32 %v2118, 4294901760
  %3669 = vmatmul.mubr.f32.gmra.mxu0 %v3668
  %v3670 = vpop.f32.mrf.mxu0
  %v3671 = vadd.f32 %v3400, %v3670
  %v3672 = vpop.f32.mrf.mxu0
  %3673 = vmatprep.mubr.f32.mxu0 0.0
  %v3674 = vand.u32 %v2121, 4294901760
  %3675 = vmatmul.mubr.f32.gmra.mxu0 %v3674
  %v3676 = vpop.f32.mrf.mxu0
  %v3677 = vadd.f32 %v3408, %v3676
  %v3678 = vpop.f32.mrf.mxu0
  %3679 = vdwg.mxu0
  %3680 = vmatprep.subr.mxu0 0.0
  %3681 = vmatpush1.msra.mxu0 0.0
  %3682 = vmatprep.subr.mxu0 0.0
  %3683 = vmatpush1.msra.mxu0 0.0
  %3684 = vmatprep.subr.mxu0 0.0
  %3685 = vmatpush1.msra.mxu0 0.0
  %3686 = vmatprep.subr.mxu0 0.0
  %3687 = vmatpush1.msra.mxu0 0.0
  %3688 = vmatprep.subr.mxu0 0.0
  %3689 = vmatpush1.msra.mxu0 0.0
  %3690 = vmatprep.subr.mxu0 0.0
  %3691 = vmatpush1.msra.mxu0 0.0
  %3692 = vmatprep.subr.mxu0 0.0
  %3693 = vmatpush1.msra.mxu0 0.0
  %3694 = vmatprep.subr.mxu0 0.0
  %3695 = vmatpush1.msra.mxu0 0.0
  %3696 = vmatprep.subr.mxu0 0.0
  %3697 = vmatpush1.msra.mxu0 0.0
  %3698 = vmatprep.subr.mxu0 0.0
  %3699 = vmatpush1.msra.mxu0 0.0
  %3700 = vmatprep.subr.mxu0 0.0
  %3701 = vmatpush1.msra.mxu0 0.0
  %3702 = vmatprep.subr.mxu0 0.0
  %3703 = vmatpush1.msra.mxu0 0.0
  %3704 = vmatprep.subr.mxu0 0.0
  %v3705 = vand.u32 %v2019, 4294901760
  %3706 = vmatpush1.msra.mxu0 %v3705
  %3707 = vmatprep.subr.mxu0 0.0
  %v3708 = vand.u32 %v2018, 4294901760
  %3709 = vmatpush1.msra.mxu0 %v3708
  %3710 = vmatprep.subr.mxu0 0.0
  %v3711 = vand.u32 %v2017, 4294901760
  %3712 = vmatpush1.msra.mxu0 %v3711
  %3713 = vmatprep.subr.mxu0 0.0
  %v3714 = vand.u32 %v2016, 4294901760
  %3715 = vmatpush1.msra.mxu0 %v3714
  %3716 = vmatprep.subr.mxu0 0.0
  %3717 = vmatpush2.msra.mxu0 0.0
  %3718 = vmatprep.subr.mxu0 0.0
  %3719 = vmatpush2.msra.mxu0 0.0
  %3720 = vmatprep.subr.mxu0 0.0
  %3721 = vmatpush2.msra.mxu0 0.0
  %3722 = vmatprep.subr.mxu0 0.0
  %3723 = vmatpush2.msra.mxu0 0.0
  %3724 = vmatprep.subr.mxu0 0.0
  %3725 = vmatpush2.msra.mxu0 0.0
  %3726 = vmatprep.subr.mxu0 0.0
  %3727 = vmatpush2.msra.mxu0 0.0
  %3728 = vmatprep.subr.mxu0 0.0
  %3729 = vmatpush2.msra.mxu0 0.0
  %3730 = vmatprep.subr.mxu0 0.0
  %3731 = vmatpush2.msra.mxu0 0.0
  %3732 = vmatprep.subr.mxu0 0.0
  %3733 = vmatpush2.msra.mxu0 0.0
  %3734 = vmatprep.subr.mxu0 0.0
  %3735 = vmatpush2.msra.mxu0 0.0
  %3736 = vmatprep.subr.mxu0 0.0
  %3737 = vmatpush2.msra.mxu0 0.0
  %3738 = vmatprep.subr.mxu0 0.0
  %3739 = vmatpush2.msra.mxu0 0.0
  %3740 = vmatprep.subr.mxu0 0.0
  %3741 = vmatpush2.msra.mxu0 0.0
  %3742 = vmatprep.subr.mxu0 0.0
  %3743 = vmatpush2.msra.mxu0 0.0
  %3744 = vmatprep.subr.mxu0 0.0
  %3745 = vmatpush2.msra.mxu0 0.0
  %3746 = vmatprep.subr.mxu0 0.0
  %3747 = vmatpush2.msra.mxu0 0.0
  %3748 = vmatprep.mubr.f32.mxu0 0.0
  %v3749 = vand.u32 %v2028, 4294901760
  %3750 = vmatmul.mubr.f32.gmra.mxu0 %v3749
  %v3751 = vpop.f32.mrf.mxu0
  %v3752 = vadd.f32 %v3491, %v3751
  %v3753 = vpop.f32.mrf.mxu0
  %3754 = vmatprep.mubr.f32.mxu0 0.0
  %v3755 = vand.u32 %v2031, 4294901760
  %3756 = vmatmul.mubr.f32.gmra.mxu0 %v3755
  %v3757 = vpop.f32.mrf.mxu0
  %v3758 = vadd.f32 %v3497, %v3757
  %v3759 = vpop.f32.mrf.mxu0
  %3760 = vmatprep.mubr.f32.mxu0 0.0
  %v3761 = vand.u32 %v2034, 4294901760
  %3762 = vmatmul.mubr.f32.gmra.mxu0 %v3761
  %v3763 = vpop.f32.mrf.mxu0
  %v3764 = vadd.f32 %v3503, %v3763
  %v3765 = vpop.f32.mrf.mxu0
  %3766 = vmatprep.mubr.f32.mxu0 0.0
  %v3767 = vand.u32 %v2037, 4294901760
  %3768 = vmatmul.mubr.f32.gmra.mxu0 %v3767
  %v3769 = vpop.f32.mrf.mxu0
  %v3770 = vadd.f32 %v3509, %v3769
  %v3771 = vpop.f32.mrf.mxu0
  %3772 = vmatprep.mubr.f32.mxu0 0.0
  %v3773 = vand.u32 %v2040, 4294901760
  %3774 = vmatmul.mubr.f32.gmra.mxu0 %v3773
  %v3775 = vpop.f32.mrf.mxu0
  %v3776 = vadd.f32 %v3515, %v3775
  %v3777 = vpop.f32.mrf.mxu0
  %3778 = vmatprep.mubr.f32.mxu0 0.0
  %v3779 = vand.u32 %v2043, 4294901760
  %3780 = vmatmul.mubr.f32.gmra.mxu0 %v3779
  %v3781 = vpop.f32.mrf.mxu0
  %v3782 = vadd.f32 %v3521, %v3781
  %v3783 = vpop.f32.mrf.mxu0
  %3784 = vmatprep.mubr.f32.mxu0 0.0
  %v3785 = vand.u32 %v2046, 4294901760
  %3786 = vmatmul.mubr.f32.gmra.mxu0 %v3785
  %v3787 = vpop.f32.mrf.mxu0
  %v3788 = vadd.f32 %v3527, %v3787
  %v3789 = vpop.f32.mrf.mxu0
  %3790 = vmatprep.mubr.f32.mxu0 0.0
  %v3791 = vand.u32 %v2049, 4294901760
  %3792 = vmatmul.mubr.f32.gmra.mxu0 %v3791
  %v3793 = vpop.f32.mrf.mxu0
  %v3794 = vadd.f32 %v3533, %v3793
  %v3795 = vpop.f32.mrf.mxu0
  %3796 = vmatprep.mubr.f32.mxu0 0.0
  %v3797 = vand.u32 %v2052, 4294901760
  %3798 = vmatmul.mubr.f32.gmra.mxu0 %v3797
  %v3799 = vpop.f32.mrf.mxu0
  %v3800 = vadd.f32 %v3539, %v3799
  %v3801 = vpop.f32.mrf.mxu0
  %3802 = vmatprep.mubr.f32.mxu0 0.0
  %v3803 = vand.u32 %v2055, 4294901760
  %3804 = vmatmul.mubr.f32.gmra.mxu0 %v3803
  %v3805 = vpop.f32.mrf.mxu0
  %v3806 = vadd.f32 %v3545, %v3805
  %v3807 = vpop.f32.mrf.mxu0
  %3808 = vmatprep.mubr.f32.mxu0 0.0
  %v3809 = vand.u32 %v2058, 4294901760
  %3810 = vmatmul.mubr.f32.gmra.mxu0 %v3809
  %v3811 = vpop.f32.mrf.mxu0
  %v3812 = vadd.f32 %v3551, %v3811
  %v3813 = vpop.f32.mrf.mxu0
  %3814 = vmatprep.mubr.f32.mxu0 0.0
  %v3815 = vand.u32 %v2061, 4294901760
  %3816 = vmatmul.mubr.f32.gmra.mxu0 %v3815
  %v3817 = vpop.f32.mrf.mxu0
  %v3818 = vadd.f32 %v3557, %v3817
  %v3819 = vpop.f32.mrf.mxu0
  %3820 = vmatprep.mubr.f32.mxu0 0.0
  %v3821 = vand.u32 %v2064, 4294901760
  %3822 = vmatmul.mubr.f32.gmra.mxu0 %v3821
  %v3823 = vpop.f32.mrf.mxu0
  %v3824 = vadd.f32 %v3563, %v3823
  %v3825 = vpop.f32.mrf.mxu0
  %3826 = vmatprep.mubr.f32.mxu0 0.0
  %v3827 = vand.u32 %v2067, 4294901760
  %3828 = vmatmul.mubr.f32.gmra.mxu0 %v3827
  %v3829 = vpop.f32.mrf.mxu0
  %v3830 = vadd.f32 %v3569, %v3829
  %v3831 = vpop.f32.mrf.mxu0
  %3832 = vmatprep.mubr.f32.mxu0 0.0
  %v3833 = vand.u32 %v2070, 4294901760
  %3834 = vmatmul.mubr.f32.gmra.mxu0 %v3833
  %v3835 = vpop.f32.mrf.mxu0
  %v3836 = vadd.f32 %v3575, %v3835
  %v3837 = vpop.f32.mrf.mxu0
  %3838 = vmatprep.mubr.f32.mxu0 0.0
  %v3839 = vand.u32 %v2073, 4294901760
  %3840 = vmatmul.mubr.f32.gmra.mxu0 %v3839
  %v3841 = vpop.f32.mrf.mxu0
  %v3842 = vadd.f32 %v3581, %v3841
  %v3843 = vpop.f32.mrf.mxu0
  %3844 = vmatprep.mubr.f32.mxu0 0.0
  %v3845 = vand.u32 %v2076, 4294901760
  %3846 = vmatmul.mubr.f32.gmra.mxu0 %v3845
  %v3847 = vpop.f32.mrf.mxu0
  %v3848 = vadd.f32 %v3587, %v3847
  %v3849 = vpop.f32.mrf.mxu0
  %3850 = vmatprep.mubr.f32.mxu0 0.0
  %v3851 = vand.u32 %v2079, 4294901760
  %3852 = vmatmul.mubr.f32.gmra.mxu0 %v3851
  %v3853 = vpop.f32.mrf.mxu0
  %v3854 = vadd.f32 %v3593, %v3853
  %v3855 = vpop.f32.mrf.mxu0
  %3856 = vmatprep.mubr.f32.mxu0 0.0
  %v3857 = vand.u32 %v2082, 4294901760
  %3858 = vmatmul.mubr.f32.gmra.mxu0 %v3857
  %v3859 = vpop.f32.mrf.mxu0
  %v3860 = vadd.f32 %v3599, %v3859
  %v3861 = vpop.f32.mrf.mxu0
  %3862 = vmatprep.mubr.f32.mxu0 0.0
  %v3863 = vand.u32 %v2085, 4294901760
  %3864 = vmatmul.mubr.f32.gmra.mxu0 %v3863
  %v3865 = vpop.f32.mrf.mxu0
  %v3866 = vadd.f32 %v3605, %v3865
  %v3867 = vpop.f32.mrf.mxu0
  %3868 = vmatprep.mubr.f32.mxu0 0.0
  %v3869 = vand.u32 %v2088, 4294901760
  %3870 = vmatmul.mubr.f32.gmra.mxu0 %v3869
  %v3871 = vpop.f32.mrf.mxu0
  %v3872 = vadd.f32 %v3611, %v3871
  %v3873 = vpop.f32.mrf.mxu0
  %3874 = vmatprep.mubr.f32.mxu0 0.0
  %v3875 = vand.u32 %v2091, 4294901760
  %3876 = vmatmul.mubr.f32.gmra.mxu0 %v3875
  %v3877 = vpop.f32.mrf.mxu0
  %v3878 = vadd.f32 %v3617, %v3877
  %v3879 = vpop.f32.mrf.mxu0
  %3880 = vmatprep.mubr.f32.mxu0 0.0
  %v3881 = vand.u32 %v2094, 4294901760
  %3882 = vmatmul.mubr.f32.gmra.mxu0 %v3881
  %v3883 = vpop.f32.mrf.mxu0
  %v3884 = vadd.f32 %v3623, %v3883
  %v3885 = vpop.f32.mrf.mxu0
  %3886 = vmatprep.mubr.f32.mxu0 0.0
  %v3887 = vand.u32 %v2097, 4294901760
  %3888 = vmatmul.mubr.f32.gmra.mxu0 %v3887
  %v3889 = vpop.f32.mrf.mxu0
  %v3890 = vadd.f32 %v3629, %v3889
  %v3891 = vpop.f32.mrf.mxu0
  %3892 = vmatprep.mubr.f32.mxu0 0.0
  %v3893 = vand.u32 %v2100, 4294901760
  %3894 = vmatmul.mubr.f32.gmra.mxu0 %v3893
  %v3895 = vpop.f32.mrf.mxu0
  %v3896 = vadd.f32 %v3635, %v3895
  %v3897 = vpop.f32.mrf.mxu0
  %3898 = vmatprep.mubr.f32.mxu0 0.0
  %v3899 = vand.u32 %v2103, 4294901760
  %3900 = vmatmul.mubr.f32.gmra.mxu0 %v3899
  %v3901 = vpop.f32.mrf.mxu0
  %v3902 = vadd.f32 %v3641, %v3901
  %v3903 = vpop.f32.mrf.mxu0
  %3904 = vmatprep.mubr.f32.mxu0 0.0
  %v3905 = vand.u32 %v2106, 4294901760
  %3906 = vmatmul.mubr.f32.gmra.mxu0 %v3905
  %v3907 = vpop.f32.mrf.mxu0
  %v3908 = vadd.f32 %v3647, %v3907
  %v3909 = vpop.f32.mrf.mxu0
  %3910 = vmatprep.mubr.f32.mxu0 0.0
  %v3911 = vand.u32 %v2109, 4294901760
  %3912 = vmatmul.mubr.f32.gmra.mxu0 %v3911
  %v3913 = vpop.f32.mrf.mxu0
  %v3914 = vadd.f32 %v3653, %v3913
  %v3915 = vpop.f32.mrf.mxu0
  %3916 = vmatprep.mubr.f32.mxu0 0.0
  %v3917 = vand.u32 %v2112, 4294901760
  %3918 = vmatmul.mubr.f32.gmra.mxu0 %v3917
  %v3919 = vpop.f32.mrf.mxu0
  %v3920 = vadd.f32 %v3659, %v3919
  %v3921 = vpop.f32.mrf.mxu0
  %3922 = vmatprep.mubr.f32.mxu0 0.0
  %v3923 = vand.u32 %v2115, 4294901760
  %3924 = vmatmul.mubr.f32.gmra.mxu0 %v3923
  %v3925 = vpop.f32.mrf.mxu0
  %v3926 = vadd.f32 %v3665, %v3925
  %v3927 = vpop.f32.mrf.mxu0
  %3928 = vmatprep.mubr.f32.mxu0 0.0
  %v3929 = vand.u32 %v2118, 4294901760
  %3930 = vmatmul.mubr.f32.gmra.mxu0 %v3929
  %v3931 = vpop.f32.mrf.mxu0
  %v3932 = vadd.f32 %v3671, %v3931
  %v3933 = vpop.f32.mrf.mxu0
  %3934 = vmatprep.mubr.f32.mxu0 0.0
  %v3935 = vand.u32 %v2121, 4294901760
  %3936 = vmatmul.mubr.f32.gmra.mxu0 %v3935
  %v3937 = vpop.f32.mrf.mxu0
  %v3938 = vadd.f32 %v3677, %v3937
  %v3939 = vpop.f32.mrf.mxu0
  %3940 = vdwg.mxu0
  %vm3941 = vcmask 64512
  %3942 = vst.msk [vmem:[%s7] sm:$0xff] %vm3941, %v1795
  %3943 = vst.msk [vmem:[%s7 + $0x8] sm:$0xff] %vm3941, %v1801
  %3944 = vst.msk [vmem:[%s7 + $0x10] sm:$0xff] %vm3941, %v1807
  %3945 = vst.msk [vmem:[%s7 + $0x18] sm:$0xff] %vm3941, %v1813
  %3946 = vst.msk [vmem:[%s7 + $0x20] sm:$0xff] %vm3941, %v1819
  %3947 = vst.msk [vmem:[%s7 + $0x28] sm:$0xff] %vm3941, %v1825
  %3948 = vst.msk [vmem:[%s7 + $0x30] sm:$0xff] %vm3941, %v1831
  %3949 = vst.msk [vmem:[%s7 + $0x38] sm:$0xff] %vm3941, %v1837
  %3950 = vst.msk [vmem:[%s7 + $0x40] sm:$0xff] %vm3941, %v1843
  %3951 = vst.msk [vmem:[%s7 + $0x48] sm:$0xff] %vm3941, %v1849
  %3952 = vst.msk [vmem:[%s7 + $0x50] sm:$0xff] %vm3941, %v1855
  %3953 = vst.msk [vmem:[%s7 + $0x58] sm:$0xff] %vm3941, %v1861
  %3954 = vst.msk [vmem:[%s7 + $0x60] sm:$0xff] %vm3941, %v1867
  %3955 = vst.msk [vmem:[%s7 + $0x68] sm:$0xff] %vm3941, %v1873
  %3956 = vst.msk [vmem:[%s7 + $0x70] sm:$0xff] %vm3941, %v1879
  %3957 = vst.msk [vmem:[%s7 + $0x78] sm:$0xff] %vm3941, %v1885
  %3958 = vst.msk [vmem:[%s7 + $0x80] sm:$0xff] %vm3941, %v1891
  %3959 = vst.msk [vmem:[%s7 + $0x88] sm:$0xff] %vm3941, %v1897
  %3960 = vst.msk [vmem:[%s7 + $0x90] sm:$0xff] %vm3941, %v1903
  %3961 = vst.msk [vmem:[%s7 + $0x98] sm:$0xff] %vm3941, %v1909
  %3962 = vst.msk [vmem:[%s7 + $0xa0] sm:$0xff] %vm3941, %v1915
  %3963 = vst.msk [vmem:[%s7 + $0xa8] sm:$0xff] %vm3941, %v1921
  %3964 = vst.msk [vmem:[%s7 + $0xb0] sm:$0xff] %vm3941, %v1927
  %3965 = vst.msk [vmem:[%s7 + $0xb8] sm:$0xff] %vm3941, %v1933
  %3966 = vst.msk [vmem:[%s7 + $0xc0] sm:$0xff] %vm3941, %v1939
  %3967 = vst.msk [vmem:[%s7 + $0xc8] sm:$0xff] %vm3941, %v1945
  %3968 = vst.msk [vmem:[%s7 + $0xd0] sm:$0xff] %vm3941, %v1951
  %3969 = vst.msk [vmem:[%s7 + $0xd8] sm:$0xff] %vm3941, %v1957
  %3970 = vst.msk [vmem:[%s7 + $0xe0] sm:$0xff] %vm3941, %v1963
  %3971 = vst.msk [vmem:[%s7 + $0xe8] sm:$0xff] %vm3941, %v1969
  %3972 = vst.msk [vmem:[%s7 + $0xf0] sm:$0xff] %vm3941, %v1975
  %3973 = vst.msk [vmem:[%s7 + $0xf8] sm:$0xff] %vm3941, %v1981
  %4006 = vrot.lane.b32.xlu0 %v3752, 8
  %v4007 = vpop.permute.xlu0 %4006
  %4008 = vrot.lane.b32.xlu0 %v3758, 8
  %v4009 = vpop.permute.xlu0 %4008
  %4010 = vrot.lane.b32.xlu0 %v3764, 8
  %v4011 = vpop.permute.xlu0 %4010
  %4012 = vrot.lane.b32.xlu0 %v3770, 8
  %v4013 = vpop.permute.xlu0 %4012
  %4014 = vrot.lane.b32.xlu0 %v3776, 8
  %v4015 = vpop.permute.xlu0 %4014
  %4016 = vrot.lane.b32.xlu0 %v3782, 8
  %v4017 = vpop.permute.xlu0 %4016
  %4018 = vrot.lane.b32.xlu0 %v3788, 8
  %v4019 = vpop.permute.xlu0 %4018
  %4020 = vrot.lane.b32.xlu0 %v3794, 8
  %v4021 = vpop.permute.xlu0 %4020
  %4022 = vrot.lane.b32.xlu0 %v3800, 8
  %v4023 = vpop.permute.xlu0 %4022
  %4024 = vrot.lane.b32.xlu0 %v3806, 8
  %v4025 = vpop.permute.xlu0 %4024
  %4026 = vrot.lane.b32.xlu0 %v3812, 8
  %v4027 = vpop.permute.xlu0 %4026
  %4028 = vrot.lane.b32.xlu0 %v3818, 8
  %v4029 = vpop.permute.xlu0 %4028
  %4030 = vrot.lane.b32.xlu0 %v3824, 8
  %v4031 = vpop.permute.xlu0 %4030
  %4032 = vrot.lane.b32.xlu0 %v3830, 8
  %v4033 = vpop.permute.xlu0 %4032
  %4034 = vrot.lane.b32.xlu0 %v3836, 8
  %v4035 = vpop.permute.xlu0 %4034
  %4036 = vrot.lane.b32.xlu0 %v3842, 8
  %v4037 = vpop.permute.xlu0 %4036
  %4038 = vrot.lane.b32.xlu0 %v3848, 8
  %v4039 = vpop.permute.xlu0 %4038
  %4040 = vrot.lane.b32.xlu0 %v3854, 8
  %v4041 = vpop.permute.xlu0 %4040
  %4042 = vrot.lane.b32.xlu0 %v3860, 8
  %v4043 = vpop.permute.xlu0 %4042
  %4044 = vrot.lane.b32.xlu0 %v3866, 8
  %v4045 = vpop.permute.xlu0 %4044
  %4046 = vrot.lane.b32.xlu0 %v3872, 8
  %v4047 = vpop.permute.xlu0 %4046
  %4048 = vrot.lane.b32.xlu0 %v3878, 8
  %v4049 = vpop.permute.xlu0 %4048
  %4050 = vrot.lane.b32.xlu0 %v3884, 8
  %v4051 = vpop.permute.xlu0 %4050
  %4052 = vrot.lane.b32.xlu0 %v3890, 8
  %v4053 = vpop.permute.xlu0 %4052
  %4054 = vrot.lane.b32.xlu0 %v3896, 8
  %v4055 = vpop.permute.xlu0 %4054
  %4056 = vrot.lane.b32.xlu0 %v3902, 8
  %v4057 = vpop.permute.xlu0 %4056
  %4058 = vrot.lane.b32.xlu0 %v3908, 8
  %v4059 = vpop.permute.xlu0 %4058
  %4060 = vrot.lane.b32.xlu0 %v3914, 8
  %v4061 = vpop.permute.xlu0 %4060
  %4062 = vrot.lane.b32.xlu0 %v3920, 8
  %v4063 = vpop.permute.xlu0 %4062
  %4064 = vrot.lane.b32.xlu0 %v3926, 8
  %v4065 = vpop.permute.xlu0 %4064
  %4066 = vrot.lane.b32.xlu0 %v3932, 8
  %v4067 = vpop.permute.xlu0 %4066
  %4068 = vrot.lane.b32.xlu0 %v3938, 8
  %v4069 = vpop.permute.xlu0 %4068
  %vm4102 = vcmask 392256
  %4103 = vst.msk [vmem:[%s7] sm:$0xff] %vm4102, %v4007
  %4104 = vst.msk [vmem:[%s7 + $0x8] sm:$0xff] %vm4102, %v4009
  %4105 = vst.msk [vmem:[%s7 + $0x10] sm:$0xff] %vm4102, %v4011
  %4106 = vst.msk [vmem:[%s7 + $0x18] sm:$0xff] %vm4102, %v4013
  %4107 = vst.msk [vmem:[%s7 + $0x20] sm:$0xff] %vm4102, %v4015
  %4108 = vst.msk [vmem:[%s7 + $0x28] sm:$0xff] %vm4102, %v4017
  %4109 = vst.msk [vmem:[%s7 + $0x30] sm:$0xff] %vm4102, %v4019
  %4110 = vst.msk [vmem:[%s7 + $0x38] sm:$0xff] %vm4102, %v4021
  %4111 = vst.msk [vmem:[%s7 + $0x40] sm:$0xff] %vm4102, %v4023
  %4112 = vst.msk [vmem:[%s7 + $0x48] sm:$0xff] %vm4102, %v4025
  %4113 = vst.msk [vmem:[%s7 + $0x50] sm:$0xff] %vm4102, %v4027
  %4114 = vst.msk [vmem:[%s7 + $0x58] sm:$0xff] %vm4102, %v4029
  %4115 = vst.msk [vmem:[%s7 + $0x60] sm:$0xff] %vm4102, %v4031
  %4116 = vst.msk [vmem:[%s7 + $0x68] sm:$0xff] %vm4102, %v4033
  %4117 = vst.msk [vmem:[%s7 + $0x70] sm:$0xff] %vm4102, %v4035
  %4118 = vst.msk [vmem:[%s7 + $0x78] sm:$0xff] %vm4102, %v4037
  %4119 = vst.msk [vmem:[%s7 + $0x80] sm:$0xff] %vm4102, %v4039
  %4120 = vst.msk [vmem:[%s7 + $0x88] sm:$0xff] %vm4102, %v4041
  %4121 = vst.msk [vmem:[%s7 + $0x90] sm:$0xff] %vm4102, %v4043
  %4122 = vst.msk [vmem:[%s7 + $0x98] sm:$0xff] %vm4102, %v4045
  %4123 = vst.msk [vmem:[%s7 + $0xa0] sm:$0xff] %vm4102, %v4047
  %4124 = vst.msk [vmem:[%s7 + $0xa8] sm:$0xff] %vm4102, %v4049
  %4125 = vst.msk [vmem:[%s7 + $0xb0] sm:$0xff] %vm4102, %v4051
  %4126 = vst.msk [vmem:[%s7 + $0xb8] sm:$0xff] %vm4102, %v4053
  %4127 = vst.msk [vmem:[%s7 + $0xc0] sm:$0xff] %vm4102, %v4055
  %4128 = vst.msk [vmem:[%s7 + $0xc8] sm:$0xff] %vm4102, %v4057
  %4129 = vst.msk [vmem:[%s7 + $0xd0] sm:$0xff] %vm4102, %v4059
  %4130 = vst.msk [vmem:[%s7 + $0xd8] sm:$0xff] %vm4102, %v4061
  %4131 = vst.msk [vmem:[%s7 + $0xe0] sm:$0xff] %vm4102, %v4063
  %4132 = vst.msk [vmem:[%s7 + $0xe8] sm:$0xff] %vm4102, %v4065
  %4133 = vst.msk [vmem:[%s7 + $0xf0] sm:$0xff] %vm4102, %v4067
  %4134 = vst.msk [vmem:[%s7 + $0xf8] sm:$0xff] %vm4102, %v4069
  %v4135 = vld [vmem:[%s2] sm:$0xff]
  %v4136 = vld [vmem:[%s2 + $0x8] sm:$0xff]
  %v4137 = vld [vmem:[%s2 + $0x10] sm:$0xff]
  %v4138 = vld [vmem:[%s2 + $0x18] sm:$0xff]
  %v4139 = vld [vmem:[%s2 + $0x20] sm:$0xff]
  %v4140 = vld [vmem:[%s2 + $0x28] sm:$0xff]
  %v4141 = vld [vmem:[%s2 + $0x30] sm:$0xff]
  %v4142 = vld [vmem:[%s2 + $0x38] sm:$0xff]
  %v4143 = vld [vmem:[%s2 + $0x40] sm:$0xff]
  %v4144 = vld [vmem:[%s2 + $0x48] sm:$0xff]
  %v4145 = vld [vmem:[%s2 + $0x50] sm:$0xff]
  %v4146 = vld [vmem:[%s2 + $0x58] sm:$0xff]
  %v4147 = vld [vmem:[%s2 + $0x60] sm:$0xff]
  %v4148 = vld [vmem:[%s2 + $0x68] sm:$0xff]
  %v4149 = vld [vmem:[%s2 + $0x70] sm:$0xff]
  %v4150 = vld [vmem:[%s2 + $0x78] sm:$0xff]
  %v4151 = vld [vmem:[%s2 + $0x80] sm:$0xff]
  %v4152 = vld [vmem:[%s2 + $0x88] sm:$0xff]
  %v4153 = vld [vmem:[%s2 + $0x90] sm:$0xff]
  %v4154 = vld [vmem:[%s2 + $0x98] sm:$0xff]
  %v4155 = vld [vmem:[%s2 + $0xa0] sm:$0xff]
  %v4156 = vld [vmem:[%s2 + $0xa8] sm:$0xff]
  %v4157 = vld [vmem:[%s2 + $0xb0] sm:$0xff]
  %v4158 = vld [vmem:[%s2 + $0xb8] sm:$0xff]
  %v4159 = vld [vmem:[%s2 + $0xc0] sm:$0xff]
  %v4160 = vld [vmem:[%s2 + $0xc8] sm:$0xff]
  %v4161 = vld [vmem:[%s2 + $0xd0] sm:$0xff]
  %v4162 = vld [vmem:[%s2 + $0xd8] sm:$0xff]
  %v4163 = vld [vmem:[%s2 + $0xe0] sm:$0xff]
  %v4164 = vld [vmem:[%s2 + $0xe8] sm:$0xff]
  %v4165 = vld [vmem:[%s2 + $0xf0] sm:$0xff]
  %v4166 = vld [vmem:[%s2 + $0xf8] sm:$0xff]
  %4199 = vrot.lane.b32.xlu0 %v4135, 48
  %v4200 = vpop.permute.xlu0 %4199
  %4201 = vrot.lane.b32.xlu0 %v4136, 48
  %v4202 = vpop.permute.xlu0 %4201
  %4203 = vrot.lane.b32.xlu0 %v4137, 48
  %v4204 = vpop.permute.xlu0 %4203
  %4205 = vrot.lane.b32.xlu0 %v4138, 48
  %v4206 = vpop.permute.xlu0 %4205
  %4207 = vrot.lane.b32.xlu0 %v4139, 48
  %v4208 = vpop.permute.xlu0 %4207
  %4209 = vrot.lane.b32.xlu0 %v4140, 48
  %v4210 = vpop.permute.xlu0 %4209
  %4211 = vrot.lane.b32.xlu0 %v4141, 48
  %v4212 = vpop.permute.xlu0 %4211
  %4213 = vrot.lane.b32.xlu0 %v4142, 48
  %v4214 = vpop.permute.xlu0 %4213
  %4215 = vrot.lane.b32.xlu0 %v4143, 48
  %v4216 = vpop.permute.xlu0 %4215
  %4217 = vrot.lane.b32.xlu0 %v4144, 48
  %v4218 = vpop.permute.xlu0 %4217
  %4219 = vrot.lane.b32.xlu0 %v4145, 48
  %v4220 = vpop.permute.xlu0 %4219
  %4221 = vrot.lane.b32.xlu0 %v4146, 48
  %v4222 = vpop.permute.xlu0 %4221
  %4223 = vrot.lane.b32.xlu0 %v4147, 48
  %v4224 = vpop.permute.xlu0 %4223
  %4225 = vrot.lane.b32.xlu0 %v4148, 48
  %v4226 = vpop.permute.xlu0 %4225
  %4227 = vrot.lane.b32.xlu0 %v4149, 48
  %v4228 = vpop.permute.xlu0 %4227
  %4229 = vrot.lane.b32.xlu0 %v4150, 48
  %v4230 = vpop.permute.xlu0 %4229
  %4231 = vrot.lane.b32.xlu0 %v4151, 48
  %v4232 = vpop.permute.xlu0 %4231
  %4233 = vrot.lane.b32.xlu0 %v4152, 48
  %v4234 = vpop.permute.xlu0 %4233
  %4235 = vrot.lane.b32.xlu0 %v4153, 48
  %v4236 = vpop.permute.xlu0 %4235
  %4237 = vrot.lane.b32.xlu0 %v4154, 48
  %v4238 = vpop.permute.xlu0 %4237
  %4239 = vrot.lane.b32.xlu0 %v4155, 48
  %v4240 = vpop.permute.xlu0 %4239
  %4241 = vrot.lane.b32.xlu0 %v4156, 48
  %v4242 = vpop.permute.xlu0 %4241
  %4243 = vrot.lane.b32.xlu0 %v4157, 48
  %v4244 = vpop.permute.xlu0 %4243
  %4245 = vrot.lane.b32.xlu0 %v4158, 48
  %v4246 = vpop.permute.xlu0 %4245
  %4247 = vrot.lane.b32.xlu0 %v4159, 48
  %v4248 = vpop.permute.xlu0 %4247
  %4249 = vrot.lane.b32.xlu0 %v4160, 48
  %v4250 = vpop.permute.xlu0 %4249
  %4251 = vrot.lane.b32.xlu0 %v4161, 48
  %v4252 = vpop.permute.xlu0 %4251
  %4253 = vrot.lane.b32.xlu0 %v4162, 48
  %v4254 = vpop.permute.xlu0 %4253
  %4255 = vrot.lane.b32.xlu0 %v4163, 48
  %v4256 = vpop.permute.xlu0 %4255
  %4257 = vrot.lane.b32.xlu0 %v4164, 48
  %v4258 = vpop.permute.xlu0 %4257
  %4259 = vrot.lane.b32.xlu0 %v4165, 48
  %v4260 = vpop.permute.xlu0 %4259
  %4261 = vrot.lane.b32.xlu0 %v4166, 48
  %v4262 = vpop.permute.xlu0 %4261
  %vm4295 = vcmask 417152
  %4296 = vst.msk [vmem:[%s7] sm:$0xff] %vm4295, %v4200
  %4297 = vst.msk [vmem:[%s7 + $0x8] sm:$0xff] %vm4295, %v4202
  %4298 = vst.msk [vmem:[%s7 + $0x10] sm:$0xff] %vm4295, %v4204
  %4299 = vst.msk [vmem:[%s7 + $0x18] sm:$0xff] %vm4295, %v4206
  %4300 = vst.msk [vmem:[%s7 + $0x20] sm:$0xff] %vm4295, %v4208
  %4301 = vst.msk [vmem:[%s7 + $0x28] sm:$0xff] %vm4295, %v4210
  %4302 = vst.msk [vmem:[%s7 + $0x30] sm:$0xff] %vm4295, %v4212
  %4303 = vst.msk [vmem:[%s7 + $0x38] sm:$0xff] %vm4295, %v4214
  %4304 = vst.msk [vmem:[%s7 + $0x40] sm:$0xff] %vm4295, %v4216
  %4305 = vst.msk [vmem:[%s7 + $0x48] sm:$0xff] %vm4295, %v4218
  %4306 = vst.msk [vmem:[%s7 + $0x50] sm:$0xff] %vm4295, %v4220
  %4307 = vst.msk [vmem:[%s7 + $0x58] sm:$0xff] %vm4295, %v4222
  %4308 = vst.msk [vmem:[%s7 + $0x60] sm:$0xff] %vm4295, %v4224
  %4309 = vst.msk [vmem:[%s7 + $0x68] sm:$0xff] %vm4295, %v4226
  %4310 = vst.msk [vmem:[%s7 + $0x70] sm:$0xff] %vm4295, %v4228
  %4311 = vst.msk [vmem:[%s7 + $0x78] sm:$0xff] %vm4295, %v4230
  %4312 = vst.msk [vmem:[%s7 + $0x80] sm:$0xff] %vm4295, %v4232
  %4313 = vst.msk [vmem:[%s7 + $0x88] sm:$0xff] %vm4295, %v4234
  %4314 = vst.msk [vmem:[%s7 + $0x90] sm:$0xff] %vm4295, %v4236
  %4315 = vst.msk [vmem:[%s7 + $0x98] sm:$0xff] %vm4295, %v4238
  %4316 = vst.msk [vmem:[%s7 + $0xa0] sm:$0xff] %vm4295, %v4240
  %4317 = vst.msk [vmem:[%s7 + $0xa8] sm:$0xff] %vm4295, %v4242
  %4318 = vst.msk [vmem:[%s7 + $0xb0] sm:$0xff] %vm4295, %v4244
  %4319 = vst.msk [vmem:[%s7 + $0xb8] sm:$0xff] %vm4295, %v4246
  %4320 = vst.msk [vmem:[%s7 + $0xc0] sm:$0xff] %vm4295, %v4248
  %4321 = vst.msk [vmem:[%s7 + $0xc8] sm:$0xff] %vm4295, %v4250
  %4322 = vst.msk [vmem:[%s7 + $0xd0] sm:$0xff] %vm4295, %v4252
  %4323 = vst.msk [vmem:[%s7 + $0xd8] sm:$0xff] %vm4295, %v4254
  %4324 = vst.msk [vmem:[%s7 + $0xe0] sm:$0xff] %vm4295, %v4256
  %4325 = vst.msk [vmem:[%s7 + $0xe8] sm:$0xff] %vm4295, %v4258
  %4326 = vst.msk [vmem:[%s7 + $0xf0] sm:$0xff] %vm4295, %v4260
  %4327 = vst.msk [vmem:[%s7 + $0xf8] sm:$0xff] %vm4295, %v4262
  %vm4328 = vcmask 425368
  %4329 = vst.msk [vmem:[%s7] sm:$0xff] %vm4328, 0.0
  %4330 = vst.msk [vmem:[%s7 + $0x8] sm:$0xff] %vm4328, 0.0
  %4331 = vst.msk [vmem:[%s7 + $0x10] sm:$0xff] %vm4328, 0.0
  %4332 = vst.msk [vmem:[%s7 + $0x18] sm:$0xff] %vm4328, 0.0
  %4333 = vst.msk [vmem:[%s7 + $0x20] sm:$0xff] %vm4328, 0.0
  %4334 = vst.msk [vmem:[%s7 + $0x28] sm:$0xff] %vm4328, 0.0
  %4335 = vst.msk [vmem:[%s7 + $0x30] sm:$0xff] %vm4328, 0.0
  %4336 = vst.msk [vmem:[%s7 + $0x38] sm:$0xff] %vm4328, 0.0
  %4337 = vst.msk [vmem:[%s7 + $0x40] sm:$0xff] %vm4328, 0.0
  %4338 = vst.msk [vmem:[%s7 + $0x48] sm:$0xff] %vm4328, 0.0
  %4339 = vst.msk [vmem:[%s7 + $0x50] sm:$0xff] %vm4328, 0.0
  %4340 = vst.msk [vmem:[%s7 + $0x58] sm:$0xff] %vm4328, 0.0
  %4341 = vst.msk [vmem:[%s7 + $0x60] sm:$0xff] %vm4328, 0.0
  %4342 = vst.msk [vmem:[%s7 + $0x68] sm:$0xff] %vm4328, 0.0
  %4343 = vst.msk [vmem:[%s7 + $0x70] sm:$0xff] %vm4328, 0.0
  %4344 = vst.msk [vmem:[%s7 + $0x78] sm:$0xff] %vm4328, 0.0
  %4345 = vst.msk [vmem:[%s7 + $0x80] sm:$0xff] %vm4328, 0.0
  %4346 = vst.msk [vmem:[%s7 + $0x88] sm:$0xff] %vm4328, 0.0
  %4347 = vst.msk [vmem:[%s7 + $0x90] sm:$0xff] %vm4328, 0.0
  %4348 = vst.msk [vmem:[%s7 + $0x98] sm:$0xff] %vm4328, 0.0
  %4349 = vst.msk [vmem:[%s7 + $0xa0] sm:$0xff] %vm4328, 0.0
  %4350 = vst.msk [vmem:[%s7 + $0xa8] sm:$0xff] %vm4328, 0.0
  %4351 = vst.msk [vmem:[%s7 + $0xb0] sm:$0xff] %vm4328, 0.0
  %4352 = vst.msk [vmem:[%s7 + $0xb8] sm:$0xff] %vm4328, 0.0
  %4353 = vst.msk [vmem:[%s7 + $0xc0] sm:$0xff] %vm4328, 0.0
  %4354 = vst.msk [vmem:[%s7 + $0xc8] sm:$0xff] %vm4328, 0.0
  %4355 = vst.msk [vmem:[%s7 + $0xd0] sm:$0xff] %vm4328, 0.0
  %4356 = vst.msk [vmem:[%s7 + $0xd8] sm:$0xff] %vm4328, 0.0
  %4357 = vst.msk [vmem:[%s7 + $0xe0] sm:$0xff] %vm4328, 0.0
  %4358 = vst.msk [vmem:[%s7 + $0xe8] sm:$0xff] %vm4328, 0.0
  %4359 = vst.msk [vmem:[%s7 + $0xf0] sm:$0xff] %vm4328, 0.0
  %4360 = vst.msk [vmem:[%s7 + $0xf8] sm:$0xff] %vm4328, 0.0
  // Predicated region
  $region30: #{tpu_custom_call.1} parent=0 // pred_check
    _
  $region31: #{tpu_custom_call.1} parent=0 // pred_check_branch
    %4362 = sbr.rel (0) target = $region33
  $region32: #{tpu_custom_call.1} parent=0 // pred_region
    _
  $region33: #{tpu_custom_call.1} parent=0 // pred_fallthru
    _
  // Predicated region
  $region34: #{tpu_custom_call.1} parent=0 // pred_check
    _
  $region35: #{tpu_custom_call.1} parent=0 // pred_check_branch
    %4364 = sbr.rel (0) target = $region37
  $region36: #{tpu_custom_call.1} parent=0 // pred_region
    _
  $region37: #{tpu_custom_call.1} parent=0 // pred_fallthru
    _

</llo_original>
